<compile_context>
chip_gen: v6e
topology: v6e:2x2x1
jax: 0.10.0
libtpu: 0.0.40
codegen_flags: <defaults>
</compile_context>

<pallas_src>
import jax
import jax.numpy as jnp
from jax import lax
from jax.experimental import pallas as pl
from jax.experimental.pallas import tpu as pltpu

EPS = 1e-5


def _default_vmem_limit():
    # Generation-aware VMEM budget: ~half of per-core VMEM, capped at 48 MiB
    # (=> 32 MiB on v7x's 64 MiB VMEM, 48 MiB on v5e/v6e's 128 MiB).
    cap = 64 * 1024 * 1024
    try:
        fn = getattr(pltpu, "get_tpu_info", None)
        if fn is not None:
            cap = int(getattr(fn(), "vmem_capacity_bytes", cap)) or cap
    except Exception:
        pass
    return min(48 * 1024 * 1024, cap // 2)


VMEM_LIMIT = _default_vmem_limit()


def _pick(n, candidates):
    """Largest candidate that divides n (and is <= n); else the full extent."""
    for c in candidates:
        if c <= n and n % c == 0:
            return c
    return n


def _pick_tn(cout, w_len):
    # Keep the per-row f32 accumulator (w_len x tn) at <= 128 KiB of vregs.
    for tn in (256, 128):
        if cout % tn == 0 and w_len * tn * 4 <= 128 * 1024:
            return tn
    if cout % 128 == 0:
        return 128
    return cout


# --------------------------------------------------------------------------
# Pallas kernels
# --------------------------------------------------------------------------
def _make_conv3x3_kernel(has_halo):
    """3x3 conv over a row band with a 2-row halo; fused BN partial stats.

    Refs (banded):  x (1, th, Wp, Cin) bf16, halo (1, hs, Wp, Cin) bf16,
                    w (9, Cin, tn) bf16, y (1, th, W, tn) f32, st (1, 2, tn) f32
    Refs (whole):   x (1, H+2, Wp, Cin) bf16, w, y, st (same as above)
    """

    def kernel(*refs):
        if has_halo:
            x_ref, halo_ref, w_ref, y_ref, st_ref = refs
        else:
            x_ref, w_ref, y_ref, st_ref = refs
            halo_ref = None
        th = y_ref.shape[1]
        W = y_ref.shape[2]
        tn = y_ref.shape[3]
        x_rows = x_ref.shape[1]

        s1 = jnp.zeros((1, tn), jnp.float32)
        s2 = jnp.zeros((1, tn), jnp.float32)
        for h in range(th):
            acc = jnp.zeros((W, tn), jnp.float32)
            for di in range(3):
                r = h + di
                if r < x_rows:
                    row = x_ref[0, r]                   # (Wp, Cin) bf16
                else:
                    row = halo_ref[0, r - x_rows]       # halo rows 0 / 1
                for dj in range(3):
                    acc = acc + jnp.dot(
                        row[dj:dj + W, :], w_ref[3 * di + dj],
                        preferred_element_type=jnp.float32)
            y_ref[0, h] = acc
            s1 = s1 + jnp.sum(acc, axis=0, keepdims=True)
            s2 = s2 + jnp.sum(acc * acc, axis=0, keepdims=True)
        st_ref[0, 0:1, :] = s1
        st_ref[0, 1:2, :] = s2

    return kernel


def _matmul_bias_kernel(x_ref, w_ref, b_ref, o_ref, acc_ref):
    k = pl.program_id(2)

    @pl.when(k == 0)
    def _():
        acc_ref[...] = jnp.zeros_like(acc_ref)

    acc_ref[...] += jnp.dot(x_ref[...], w_ref[...],
                            preferred_element_type=jnp.float32)

    @pl.when(k == pl.num_programs(2) - 1)
    def _():
        o_ref[...] = (acc_ref[...] + b_ref[...]).astype(o_ref.dtype)


def _bn_relu_kernel(y_ref, sc_ref, sh_ref, o_ref):
    # f32 math (safe on v5e), bf16 store.
    o_ref[...] = jnp.maximum(
        y_ref[...] * sc_ref[...] + sh_ref[...], 0.0).astype(o_ref.dtype)


def _bn_relu_pool_kernel(y_ref, sc_ref, sh_ref, s_ref, p_ref):
    # y: (2*tr, W, C) f32  ->  s: (2*tr, W, C) bf16,  p: (tr, W//2, C) bf16
    sc = sc_ref[...]                      # (1, 1, C)
    sh = sh_ref[...]
    y = y_ref[...]
    s_ref[...] = jnp.maximum(y * sc + sh, 0.0).astype(s_ref.dtype)

    tr, w2, c = p_ref.shape
    l = y_ref[:, pl.ds(0, w2, 2), :]      # columns 0, 2, 4, ...
    r = y_ref[:, pl.ds(1, w2, 2), :]      # columns 1, 3, 5, ...
    cmax = jnp.maximum(l, r).reshape(tr, 2, w2, c)
    cmin = jnp.minimum(l, r).reshape(tr, 2, w2, c)
    rmax = jnp.maximum(cmax[:, 0], cmax[:, 1])
    rmin = jnp.minimum(cmin[:, 0], cmin[:, 1])
    # maxpool(relu(sc*y+sh)) == relu(sc*max(y)+sh) if sc>=0 else relu(sc*min(y)+sh)
    z = jnp.where(sc >= 0.0, rmax * sc + sh, rmin * sc + sh)
    p_ref[...] = jnp.maximum(z, 0.0).astype(p_ref.dtype)


# --------------------------------------------------------------------------
# Pallas wrappers
# --------------------------------------------------------------------------
_TM = (1024, 512, 256, 128, 64, 32, 16, 8)
_TN = (256, 128)
_TK = (1152, 512, 256, 128)


def _conv3x3_stats(x, w9):
    """x: (N,H,W,Cin) bf16, w9: (9,Cin,Cout) bf16 (tap t = 3*di + dj).

    Returns y (N,H,W,Cout) f32 and per-band BN partials (G, 2, Cout) f32.
    """
    N, H, W, Cin = x.shape
    Cout = w9.shape[2]
    if Cin < 8:  # pad tiny input-channel counts (first layer) to one sublane group
        x = jnp.pad(x, ((0, 0), (0, 0), (0, 0), (0, 8 - Cin)))
        w9 = jnp.pad(w9, ((0, 0), (0, 8 - Cin), (0, 0)))
        Cin = 8

    tn = _pick_tn(Cout, W)
    gj = Cout // tn
    xp = jnp.pad(x, ((0, 0), (1, 1), (1, 1), (0, 0)))
    Hp, Wp = H + 2, W + 2

    banded = (H % 2 == 0) and H >= 2
    if banded:
        th = _pick(H, (8, 4, 2))
        gi = H // th
        half = th // 2
        in_specs = [
            pl.BlockSpec((1, th, Wp, Cin), lambda j, n, i: (n, i, 0, 0)),
            # 2-row halo = padded rows [(i+1)*th, (i+1)*th + 2)
            pl.BlockSpec((1, 2, Wp, Cin), lambda j, n, i: (n, (i + 1) * half, 0, 0)),
            pl.BlockSpec((9, Cin, tn), lambda j, n, i: (0, 0, j)),
        ]
        operands = (xp, xp, w9)
    else:
        # TODO(synk): large odd H fully unrolls the row loop; band with an uneven
        # last band instead if that case ever matters.
        th = H
        gi = 1
        in_specs = [
            pl.BlockSpec((1, Hp, Wp, Cin), lambda j, n, i: (n, 0, 0, 0)),
            pl.BlockSpec((9, Cin, tn), lambda j, n, i: (0, 0, j)),
        ]
        operands = (xp, w9)

    y, stats = pl.pallas_call(
        _make_conv3x3_kernel(banded),
        out_shape=(
            jax.ShapeDtypeStruct((N, H, W, Cout), jnp.float32),
            jax.ShapeDtypeStruct((N * gi, 2, Cout), jnp.float32),
        ),
        grid=(gj, N, gi),
        in_specs=in_specs,
        out_specs=[
            pl.BlockSpec((1, th, W, tn), lambda j, n, i: (n, i, 0, j)),
            pl.BlockSpec((1, 2, tn), lambda j, n, i: (n * gi + i, 0, j)),
        ],
        compiler_params=pltpu.CompilerParams(
            dimension_semantics=("parallel", "parallel", "parallel"),
            vmem_limit_bytes=VMEM_LIMIT,
        ),
    )(*operands)
    return y, stats


def _pallas_matmul_bias(x, w_mat, bias, out_dtype=jnp.float32):
    # x: (M, K) bf16 ; w_mat: (K, C) bf16 ; bias: (C,) f32
    M, K = x.shape
    _, C = w_mat.shape
    tm = _pick(M, _TM)
    tn = _pick(C, _TN)
    tk = _pick(K, _TK)
    b2 = bias.reshape(1, C).astype(jnp.float32)
    return pl.pallas_call(
        _matmul_bias_kernel,
        out_shape=jax.ShapeDtypeStruct((M, C), out_dtype),
        grid=(M // tm, C // tn, K // tk),
        in_specs=[
            pl.BlockSpec((tm, tk), lambda i, j, k: (i, k)),
            pl.BlockSpec((tk, tn), lambda i, j, k: (k, j)),
            pl.BlockSpec((1, tn), lambda i, j, k: (0, j)),
        ],
        out_specs=pl.BlockSpec((tm, tn), lambda i, j, k: (i, j)),
        scratch_shapes=[pltpu.VMEM((tm, tn), jnp.float32)],
        compiler_params=pltpu.CompilerParams(
            dimension_semantics=("parallel", "parallel", "arbitrary"),
            vmem_limit_bytes=VMEM_LIMIT,
        ),
    )(x, w_mat, b2)


def _pallas_bn_relu(y2, scale, shift, out_dtype=jnp.bfloat16):
    # y2: (M, C) f32 -> (M, C) bf16.  C=64 stages are folded to 128 lanes.
    M, C = y2.shape
    fold = 1
    if C < 128 and 128 % C == 0 and M % (128 // C) == 0:
        fold = 128 // C
    Mf, Cf = M // fold, C * fold
    yf = y2.reshape(Mf, Cf)
    sc = jnp.tile(scale.astype(jnp.float32), fold).reshape(1, Cf)
    sh = jnp.tile(shift.astype(jnp.float32), fold).reshape(1, Cf)
    tm = _pick(Mf, (2048, 1024, 512, 256, 128, 64, 32, 16, 8))
    tn = _pick(Cf, _TN)
    out = pl.pallas_call(
        _bn_relu_kernel,
        out_shape=jax.ShapeDtypeStruct((Mf, Cf), out_dtype),
        grid=(Mf // tm, Cf // tn),
        in_specs=[
            pl.BlockSpec((tm, tn), lambda i, j: (i, j)),
            pl.BlockSpec((1, tn), lambda i, j: (0, j)),
            pl.BlockSpec((1, tn), lambda i, j: (0, j)),
        ],
        out_specs=pl.BlockSpec((tm, tn), lambda i, j: (i, j)),
        compiler_params=pltpu.CompilerParams(
            dimension_semantics=("parallel", "parallel"),
            vmem_limit_bytes=VMEM_LIMIT,
        ),
    )(yf, sc, sh)
    return out.reshape(M, C)


def _pallas_bn_relu_pool(y4, scale, shift):
    # y4: (N, H, W, C) f32 -> (skip (N,H,W,C) bf16, pooled (N,H/2,W/2,C) bf16)
    n, h, w, c = y4.shape
    y3 = y4.reshape(n * h, w, c)
    tr = _pick(h // 2, (8, 4, 2, 1))         # 2*tr divides H: bands never straddle images
    sc = scale.reshape(1, 1, c).astype(jnp.float32)
    sh = shift.reshape(1, 1, c).astype(jnp.float32)
    s3, p3 = pl.pallas_call(
        _bn_relu_pool_kernel,
        out_shape=(
            jax.ShapeDtypeStruct((n * h, w, c), jnp.bfloat16),
            jax.ShapeDtypeStruct((n * h // 2, w // 2, c), jnp.bfloat16),
        ),
        grid=((n * h) // (2 * tr),),
        in_specs=[
            pl.BlockSpec((2 * tr, w, c), lambda i: (i, 0, 0)),
            pl.BlockSpec((1, 1, c), lambda i: (0, 0, 0)),
            pl.BlockSpec((1, 1, c), lambda i: (0, 0, 0)),
        ],
        out_specs=[
            pl.BlockSpec((2 * tr, w, c), lambda i: (i, 0, 0)),
            pl.BlockSpec((tr, w // 2, c), lambda i: (i, 0, 0)),
        ],
        compiler_params=pltpu.CompilerParams(
            dimension_semantics=("parallel",),
            vmem_limit_bytes=VMEM_LIMIT,
        ),
    )(y3, sc, sh)
    return s3.reshape(n, h, w, c), p3.reshape(n, h // 2, w // 2, c)


# --------------------------------------------------------------------------
# Model glue (BN folding, blocks, forward)
# --------------------------------------------------------------------------
def _bn_scale_shift(stats, gamma, beta, m):
    s = jnp.sum(stats[:, 0, :], axis=0)
    ss = jnp.sum(stats[:, 1, :], axis=0)
    mean = s / m
    var = jnp.maximum(ss / m - mean * mean, 0.0)     # biased variance (train-mode BN)
    scale = gamma * lax.rsqrt(var + EPS)
    shift = beta - mean * scale
    return scale, shift


def _conv_bn_relu(x, w9, gamma, beta):
    n, h, w, _ = x.shape
    cout = w9.shape[2]
    m = n * h * w
    y, stats = _conv3x3_stats(x, w9)
    scale, shift = _bn_scale_shift(stats, gamma, beta, m)
    a = _pallas_bn_relu(y.reshape(m, cout), scale, shift)
    return a.reshape(n, h, w, cout)


def _conv_bn_relu_pool(x, w9, gamma, beta):
    n, h, w, _ = x.shape
    m = n * h * w
    y, stats = _conv3x3_stats(x, w9)
    scale, shift = _bn_scale_shift(stats, gamma, beta, m)
    return _pallas_bn_relu_pool(y, scale, shift)


def conv_block_fwd(x, block_params):
    for (w9, gamma, beta) in block_params:
        x = _conv_bn_relu(x, w9, gamma, beta)
    return x


def encoder_fwd(x, block_params):
    (w1, g1, b1), (w2, g2, b2) = block_params
    x = _conv_bn_relu(x, w1, g1, b1)
    return _conv_bn_relu_pool(x, w2, g2, b2)       # (skip, pooled)


def decoder_fwd(x, skip, up_params, conv_params):
    # ConvTranspose2d(k=2, s=2): 4 disjoint 1x1 convs fused into one matmul
    w_up, b_up = up_params                         # (Cin, 4*Cout) bf16, (4*Cout,) f32
    n, h, w, cin = x.shape
    cout = w_up.shape[1] // 4
    xm = x.reshape(n * h * w, cin)
    y = _pallas_matmul_bias(xm, w_up, b_up, out_dtype=jnp.bfloat16)
    # TODO(synk): emit the interleaved layout directly from the matmul out_spec and
    # split the next conv's reduction over (up, skip) to avoid this HBM transpose+concat.
    y = (y.reshape(n, h, w, 2, 2, cout)
          .transpose(0, 1, 3, 2, 4, 5)
          .reshape(n, 2 * h, 2 * w, cout))
    dy = skip.shape[1] - y.shape[1]
    dx = skip.shape[2] - y.shape[2]
    if dy or dx:
        y = jnp.pad(y, ((0, 0), (dy // 2, dy - dy // 2),
                        (dx // 2, dx - dx // 2), (0, 0)))
    z = jnp.concatenate([y, skip], axis=-1)        # bf16
    return conv_block_fwd(z, conv_params)


def unet_forward(x_nchw, params):
    x = jnp.transpose(x_nchw, (0, 2, 3, 1)).astype(jnp.bfloat16)   # NCHW -> NHWC bf16
    s1, p1 = encoder_fwd(x, params["e1"])
    s2, p2 = encoder_fwd(p1, params["e2"])
    s3, p3 = encoder_fwd(p2, params["e3"])
    s4, p4 = encoder_fwd(p3, params["e4"])
    b = conv_block_fwd(p4, params["b"])
    a1 = decoder_fwd(b, s4, params["d1_up"], params["d1_conv"])
    a2 = decoder_fwd(a1, s3, params["d2_up"], params["d2_conv"])
    a3 = decoder_fwd(a2, s2, params["d3_up"], params["d3_conv"])
    a4 = decoder_fwd(a3, s1, params["d4_up"], params["d4_conv"])

    n, h, w, c = a4.shape
    w_out, b_out = params["out"]
    out_c = w_out.shape[1]
    cpad = ((out_c + 127) // 128) * 128            # lane-dense 1x1 conv output
    wp = jnp.pad(w_out, ((0, 0), (0, cpad - out_c)))
    bp = jnp.pad(b_out, ((0, cpad - out_c),))
    y = _pallas_matmul_bias(a4.reshape(n * h * w, c), wp, bp, out_dtype=jnp.float32)
    y = y[:, :out_c].reshape(n, h, w, out_c)
    return jnp.transpose(y, (0, 3, 1, 2))          # NHWC -> NCHW, f32


# --------------------------------------------------------------------------
# Deterministic parameter initialization (synthetic; shapes from __init__)
# --------------------------------------------------------------------------
def _init_conv_block(key, cin, cout):
    stages = []
    for ci, co in ((cin, cout), (cout, cout)):
        key, k1 = jax.random.split(key)
        wk = jax.random.normal(k1, (3, 3, ci, co), jnp.float32) * (2.0 / (9 * ci)) ** 0.5
        w9 = wk.reshape(9, ci, co).astype(jnp.bfloat16)     # tap index t = 3*di + dj
        stages.append((w9, jnp.ones((co,), jnp.float32), jnp.zeros((co,), jnp.float32)))
    return key, stages


def _init_up(key, cin, cout):
    key, k1, k2 = jax.random.split(key, 3)
    w = jax.random.normal(k1, (2, 2, cin, cout), jnp.float32) * (1.0 / cin) ** 0.5
    w_mat = w.transpose(2, 0, 1, 3).reshape(cin, 4 * cout).astype(jnp.bfloat16)
    bias = jax.random.normal(k2, (cout,), jnp.float32) * 0.01
    return key, (w_mat, jnp.tile(bias, 4))


def init_unet_params(key, in_c, out_c):
    params = {}
    key, params["e1"] = _init_conv_block(key, in_c, 64)
    key, params["e2"] = _init_conv_block(key, 64, 128)
    key, params["e3"] = _init_conv_block(key, 128, 256)
    key, params["e4"] = _init_conv_block(key, 256, 512)
    key, params["b"] = _init_conv_block(key, 512, 1024)
    key, params["d1_up"] = _init_up(key, 1024, 512)
    key, params["d1_conv"] = _init_conv_block(key, 1024, 512)
    key, params["d2_up"] = _init_up(key, 512, 256)
    key, params["d2_conv"] = _init_conv_block(key, 512, 256)
    key, params["d3_up"] = _init_up(key, 256, 128)
    key, params["d3_conv"] = _init_conv_block(key, 256, 128)
    key, params["d4_up"] = _init_up(key, 128, 64)
    key, params["d4_conv"] = _init_conv_block(key, 128, 64)
    key, k1, k2 = jax.random.split(key, 3)
    w_out = (jax.random.normal(k1, (64, out_c), jnp.float32) * (1.0 / 64) ** 0.5
             ).astype(jnp.bfloat16)
    b_out = jax.random.normal(k2, (out_c,), jnp.float32) * 0.01
    params["out"] = (w_out, b_out)
    return params


# --------------------------------------------------------------------------
# Self-test of the Pallas conv against XLA's conv (bf16 inputs, f32 accumulate)
# --------------------------------------------------------------------------
def _conv_reference(x_bf16, w9):
    k = w9.reshape(3, 3, w9.shape[1], w9.shape[2])
    return lax.conv_general_dilated(
        x_bf16, k, window_strides=(1, 1), padding=((1, 1), (1, 1)),
        dimension_numbers=("NHWC", "HWIO", "NHWC"),
        preferred_element_type=jnp.float32)


def _self_test_conv():
    key = jax.random.PRNGKey(1)
    # one banded case (even H) and one whole-image case (odd H)
    for (n, h, w, cin, cout) in ((1, 8, 8, 16, 32), (2, 3, 5, 8, 16)):
        key, kx, kw = jax.random.split(key, 3)
        x = jax.random.normal(kx, (n, h, w, cin), jnp.float32).astype(jnp.bfloat16)
        w9 = (jax.random.normal(kw, (9, cin, cout), jnp.float32) * 0.1
              ).astype(jnp.bfloat16)
        y, _ = jax.jit(_conv3x3_stats)(x, w9)
        ref = _conv_reference(x, w9)
        assert bool(jnp.allclose(y, ref, rtol=2e-2, atol=2e-2)), (
            "conv mismatch", float(jnp.max(jnp.abs(y - ref))))


# --------------------------------------------------------------------------
if __name__ == "__main__":
    _self_test_conv()

    in_c, out_c = 4, 3
    key = jax.random.PRNGKey(0)
    key, kx = jax.random.split(key)
    x = jax.random.normal(kx, (2, in_c, 16, 16), jnp.float32)   # NCHW like PyTorch
    params = init_unet_params(key, in_c, out_c)

    fwd = jax.jit(unet_forward)
    y = fwd(x, params)
    jax.block_until_ready(y)

    assert y.shape == (2, out_c, 16, 16), y.shape
    assert y.dtype == jnp.float32
    assert bool(jnp.all(jnp.isfinite(y)))
    print("KERNEL_OK")
</pallas_src>

<mosaic_0001>
module attributes {stable_mosaic.version = 11 : i64} {
  func.func @kernel(%arg0: i32, %arg1: i32, %arg2: i32, %arg3: memref<1x8x10x16xbf16, #tpu.memory_space<vmem>>, %arg4: memref<1x2x10x16xbf16, #tpu.memory_space<vmem>>, %arg5: memref<9x16x32xbf16, #tpu.memory_space<vmem>>, %arg6: memref<1x8x8x32xf32, #tpu.memory_space<vmem>>, %arg7: memref<1x2x32xf32, #tpu.memory_space<vmem>>) attributes {dimension_semantics = [#tpu.dimension_semantics<parallel>, #tpu.dimension_semantics<parallel>, #tpu.dimension_semantics<parallel>], iteration_bounds = array<i64: 1, 1, 1>, scalar_prefetch = 0 : i64, scratch_operands = 0 : i64, tpu.core_type = #tpu.core_type<tc>, window_params = [{transform_indices = @transform_0, window_bounds = array<i64: 1, 8, 10, 16>}, {transform_indices = @transform_1, window_bounds = array<i64: 1, 2, 10, 16>}, {transform_indices = @transform_2, window_bounds = array<i64: 9, 16, 32>}, {transform_indices = @transform_3, window_bounds = array<i64: 1, 8, 8, 32>}, {transform_indices = @transform_4, window_bounds = array<i64: 1, 2, 32>}]} {
    %cst = arith.constant 0.000000e+00 : f32
    %0 = vector.broadcast %cst : f32 to vector<1x32xf32>
    %cst_0 = arith.constant 0.000000e+00 : f32
    %1 = vector.broadcast %cst_0 : f32 to vector<1x32xf32>
    %cst_1 = arith.constant 0.000000e+00 : f32
    %2 = vector.broadcast %cst_1 : f32 to vector<8x32xf32>
    %c0 = arith.constant 0 : index
    %c0_2 = arith.constant 0 : index
    %c0_3 = arith.constant 0 : index
    %c0_4 = arith.constant 0 : index
    %3 = vector.load %arg3[%c0, %c0_2, %c0_3, %c0_4] : memref<1x8x10x16xbf16, #tpu.memory_space<vmem>>, vector<1x1x10x16xbf16>
    %4 = vector.shape_cast %3 : vector<1x1x10x16xbf16> to vector<10x16xbf16>
    %5 = vector.extract_strided_slice %4 {offsets = [0, 0], sizes = [8, 16], strides = [1, 1]} : vector<10x16xbf16> to vector<8x16xbf16>
    %c0_5 = arith.constant 0 : index
    %c0_6 = arith.constant 0 : index
    %c0_7 = arith.constant 0 : index
    %6 = vector.load %arg5[%c0_5, %c0_6, %c0_7] : memref<9x16x32xbf16, #tpu.memory_space<vmem>>, vector<1x16x32xbf16>
    %7 = vector.shape_cast %6 : vector<1x16x32xbf16> to vector<16x32xbf16>
    %cst_8 = arith.constant dense<0.000000e+00> : vector<8x32xf32>
    %8 = tpu.matmul %5, %7, %cst_8 {dimension_numbers = #tpu.dot_dimension_numbers<[1], [0], [0], [1], [0, 0, 1, 1], [], []>} : vector<8x16xbf16>, vector<16x32xbf16>, vector<8x32xf32> -> vector<8x32xf32>
    %9 = arith.addf %2, %8 : vector<8x32xf32>
    %10 = vector.extract_strided_slice %4 {offsets = [1, 0], sizes = [8, 16], strides = [1, 1]} : vector<10x16xbf16> to vector<8x16xbf16>
    %c1 = arith.constant 1 : index
    %c0_9 = arith.constant 0 : index
    %c0_10 = arith.constant 0 : index
    %11 = vector.load %arg5[%c1, %c0_9, %c0_10] : memref<9x16x32xbf16, #tpu.memory_space<vmem>>, vector<1x16x32xbf16>
    %12 = vector.shape_cast %11 : vector<1x16x32xbf16> to vector<16x32xbf16>
    %cst_11 = arith.constant dense<0.000000e+00> : vector<8x32xf32>
    %13 = tpu.matmul %10, %12, %cst_11 {dimension_numbers = #tpu.dot_dimension_numbers<[1], [0], [0], [1], [0, 0, 1, 1], [], []>} : vector<8x16xbf16>, vector<16x32xbf16>, vector<8x32xf32> -> vector<8x32xf32>
    %14 = arith.addf %9, %13 : vector<8x32xf32>
    %15 = vector.extract_strided_slice %4 {offsets = [2, 0], sizes = [8, 16], strides = [1, 1]} : vector<10x16xbf16> to vector<8x16xbf16>
    %c2 = arith.constant 2 : index
    %c0_12 = arith.constant 0 : index
    %c0_13 = arith.constant 0 : index
    %16 = vector.load %arg5[%c2, %c0_12, %c0_13] : memref<9x16x32xbf16, #tpu.memory_space<vmem>>, vector<1x16x32xbf16>
    %17 = vector.shape_cast %16 : vector<1x16x32xbf16> to vector<16x32xbf16>
    %cst_14 = arith.constant dense<0.000000e+00> : vector<8x32xf32>
    %18 = tpu.matmul %15, %17, %cst_14 {dimension_numbers = #tpu.dot_dimension_numbers<[1], [0], [0], [1], [0, 0, 1, 1], [], []>} : vector<8x16xbf16>, vector<16x32xbf16>, vector<8x32xf32> -> vector<8x32xf32>
    %19 = arith.addf %14, %18 : vector<8x32xf32>
    %c0_15 = arith.constant 0 : index
    %c1_16 = arith.constant 1 : index
    %c0_17 = arith.constant 0 : index
    %c0_18 = arith.constant 0 : index
    %20 = vector.load %arg3[%c0_15, %c1_16, %c0_17, %c0_18] : memref<1x8x10x16xbf16, #tpu.memory_space<vmem>>, vector<1x1x10x16xbf16>
    %21 = vector.shape_cast %20 : vector<1x1x10x16xbf16> to vector<10x16xbf16>
    %22 = vector.extract_strided_slice %21 {offsets = [0, 0], sizes = [8, 16], strides = [1, 1]} : vector<10x16xbf16> to vector<8x16xbf16>
    %c3 = arith.constant 3 : index
    %c0_19 = arith.constant 0 : index
    %c0_20 = arith.constant 0 : index
    %23 = vector.load %arg5[%c3, %c0_19, %c0_20] : memref<9x16x32xbf16, #tpu.memory_space<vmem>>, vector<1x16x32xbf16>
    %24 = vector.shape_cast %23 : vector<1x16x32xbf16> to vector<16x32xbf16>
    %cst_21 = arith.constant dense<0.000000e+00> : vector<8x32xf32>
    %25 = tpu.matmul %22, %24, %cst_21 {dimension_numbers = #tpu.dot_dimension_numbers<[1], [0], [0], [1], [0, 0, 1, 1], [], []>} : vector<8x16xbf16>, vector<16x32xbf16>, vector<8x32xf32> -> vector<8x32xf32>
    %26 = arith.addf %19, %25 : vector<8x32xf32>
    %27 = vector.extract_strided_slice %21 {offsets = [1, 0], sizes = [8, 16], strides = [1, 1]} : vector<10x16xbf16> to vector<8x16xbf16>
    %c4 = arith.constant 4 : index
    %c0_22 = arith.constant 0 : index
    %c0_23 = arith.constant 0 : index
    %28 = vector.load %arg5[%c4, %c0_22, %c0_23] : memref<9x16x32xbf16, #tpu.memory_space<vmem>>, vector<1x16x32xbf16>
    %29 = vector.shape_cast %28 : vector<1x16x32xbf16> to vector<16x32xbf16>
    %cst_24 = arith.constant dense<0.000000e+00> : vector<8x32xf32>
    %30 = tpu.matmul %27, %29, %cst_24 {dimension_numbers = #tpu.dot_dimension_numbers<[1], [0], [0], [1], [0, 0, 1, 1], [], []>} : vector<8x16xbf16>, vector<16x32xbf16>, vector<8x32xf32> -> vector<8x32xf32>
    %31 = arith.addf %26, %30 : vector<8x32xf32>
    %32 = vector.extract_strided_slice %21 {offsets = [2, 0], sizes = [8, 16], strides = [1, 1]} : vector<10x16xbf16> to vector<8x16xbf16>
    %c5 = arith.constant 5 : index
    %c0_25 = arith.constant 0 : index
    %c0_26 = arith.constant 0 : index
    %33 = vector.load %arg5[%c5, %c0_25, %c0_26] : memref<9x16x32xbf16, #tpu.memory_space<vmem>>, vector<1x16x32xbf16>
    %34 = vector.shape_cast %33 : vector<1x16x32xbf16> to vector<16x32xbf16>
    %cst_27 = arith.constant dense<0.000000e+00> : vector<8x32xf32>
    %35 = tpu.matmul %32, %34, %cst_27 {dimension_numbers = #tpu.dot_dimension_numbers<[1], [0], [0], [1], [0, 0, 1, 1], [], []>} : vector<8x16xbf16>, vector<16x32xbf16>, vector<8x32xf32> -> vector<8x32xf32>
    %36 = arith.addf %31, %35 : vector<8x32xf32>
    %c0_28 = arith.constant 0 : index
    %c2_29 = arith.constant 2 : index
    %c0_30 = arith.constant 0 : index
    %c0_31 = arith.constant 0 : index
    %37 = vector.load %arg3[%c0_28, %c2_29, %c0_30, %c0_31] : memref<1x8x10x16xbf16, #tpu.memory_space<vmem>>, vector<1x1x10x16xbf16>
    %38 = vector.shape_cast %37 : vector<1x1x10x16xbf16> to vector<10x16xbf16>
    %39 = vector.extract_strided_slice %38 {offsets = [0, 0], sizes = [8, 16], strides = [1, 1]} : vector<10x16xbf16> to vector<8x16xbf16>
    %c6 = arith.constant 6 : index
    %c0_32 = arith.constant 0 : index
    %c0_33 = arith.constant 0 : index
    %40 = vector.load %arg5[%c6, %c0_32, %c0_33] : memref<9x16x32xbf16, #tpu.memory_space<vmem>>, vector<1x16x32xbf16>
    %41 = vector.shape_cast %40 : vector<1x16x32xbf16> to vector<16x32xbf16>
    %cst_34 = arith.constant dense<0.000000e+00> : vector<8x32xf32>
    %42 = tpu.matmul %39, %41, %cst_34 {dimension_numbers = #tpu.dot_dimension_numbers<[1], [0], [0], [1], [0, 0, 1, 1], [], []>} : vector<8x16xbf16>, vector<16x32xbf16>, vector<8x32xf32> -> vector<8x32xf32>
    %43 = arith.addf %36, %42 : vector<8x32xf32>
    %44 = vector.extract_strided_slice %38 {offsets = [1, 0], sizes = [8, 16], strides = [1, 1]} : vector<10x16xbf16> to vector<8x16xbf16>
    %c7 = arith.constant 7 : index
    %c0_35 = arith.constant 0 : index
    %c0_36 = arith.constant 0 : index
    %45 = vector.load %arg5[%c7, %c0_35, %c0_36] : memref<9x16x32xbf16, #tpu.memory_space<vmem>>, vector<1x16x32xbf16>
    %46 = vector.shape_cast %45 : vector<1x16x32xbf16> to vector<16x32xbf16>
    %cst_37 = arith.constant dense<0.000000e+00> : vector<8x32xf32>
    %47 = tpu.matmul %44, %46, %cst_37 {dimension_numbers = #tpu.dot_dimension_numbers<[1], [0], [0], [1], [0, 0, 1, 1], [], []>} : vector<8x16xbf16>, vector<16x32xbf16>, vector<8x32xf32> -> vector<8x32xf32>
    %48 = arith.addf %43, %47 : vector<8x32xf32>
    %49 = vector.extract_strided_slice %38 {offsets = [2, 0], sizes = [8, 16], strides = [1, 1]} : vector<10x16xbf16> to vector<8x16xbf16>
    %c8 = arith.constant 8 : index
    %c0_38 = arith.constant 0 : index
    %c0_39 = arith.constant 0 : index
    %50 = vector.load %arg5[%c8, %c0_38, %c0_39] : memref<9x16x32xbf16, #tpu.memory_space<vmem>>, vector<1x16x32xbf16>
    %51 = vector.shape_cast %50 : vector<1x16x32xbf16> to vector<16x32xbf16>
    %cst_40 = arith.constant dense<0.000000e+00> : vector<8x32xf32>
    %52 = tpu.matmul %49, %51, %cst_40 {dimension_numbers = #tpu.dot_dimension_numbers<[1], [0], [0], [1], [0, 0, 1, 1], [], []>} : vector<8x16xbf16>, vector<16x32xbf16>, vector<8x32xf32> -> vector<8x32xf32>
    %53 = arith.addf %48, %52 : vector<8x32xf32>
    %c0_41 = arith.constant 0 : index
    %c0_42 = arith.constant 0 : index
    %c0_43 = arith.constant 0 : index
    %c0_44 = arith.constant 0 : index
    %54 = vector.load %arg6[%c0_41, %c0_42, %c0_43, %c0_44] : memref<1x8x8x32xf32, #tpu.memory_space<vmem>>, vector<1x1x8x32xf32>
    %55 = vector.shape_cast %54 : vector<1x1x8x32xf32> to vector<8x32xf32>
    %56 = vector.shape_cast %53 : vector<8x32xf32> to vector<1x1x8x32xf32>
    tpu.vector_store %arg6[%c0_41, %c0_42, %c0_43, %c0_44], %56 {strides = array<i32>} : memref<1x8x8x32xf32, #tpu.memory_space<vmem>>, vector<1x1x8x32xf32>,
    %cst_45 = arith.constant dense<0.000000e+00> : vector<32xf32>
    %57 = vector.multi_reduction <add>, %53, %cst_45 [0] : vector<8x32xf32> to vector<32xf32>
    %58 = vector.shape_cast %57 : vector<32xf32> to vector<1x32xf32>
    %59 = arith.addf %0, %58 : vector<1x32xf32>
    %60 = arith.mulf %53, %53 : vector<8x32xf32>
    %cst_46 = arith.constant dense<0.000000e+00> : vector<32xf32>
    %61 = vector.multi_reduction <add>, %60, %cst_46 [0] : vector<8x32xf32> to vector<32xf32>
    %62 = vector.shape_cast %61 : vector<32xf32> to vector<1x32xf32>
    %63 = arith.addf %1, %62 : vector<1x32xf32>
    %cst_47 = arith.constant 0.000000e+00 : f32
    %64 = vector.broadcast %cst_47 : f32 to vector<8x32xf32>
    %c0_48 = arith.constant 0 : index
    %c1_49 = arith.constant 1 : index
    %c0_50 = arith.constant 0 : index
    %c0_51 = arith.constant 0 : index
    %65 = vector.load %arg3[%c0_48, %c1_49, %c0_50, %c0_51] : memref<1x8x10x16xbf16, #tpu.memory_space<vmem>>, vector<1x1x10x16xbf16>
    %66 = vector.shape_cast %65 : vector<1x1x10x16xbf16> to vector<10x16xbf16>
    %67 = vector.extract_strided_slice %66 {offsets = [0, 0], sizes = [8, 16], strides = [1, 1]} : vector<10x16xbf16> to vector<8x16xbf16>
    %c0_52 = arith.constant 0 : index
    %c0_53 = arith.constant 0 : index
    %c0_54 = arith.constant 0 : index
    %68 = vector.load %arg5[%c0_52, %c0_53, %c0_54] : memref<9x16x32xbf16, #tpu.memory_space<vmem>>, vector<1x16x32xbf16>
    %69 = vector.shape_cast %68 : vector<1x16x32xbf16> to vector<16x32xbf16>
    %cst_55 = arith.constant dense<0.000000e+00> : vector<8x32xf32>
    %70 = tpu.matmul %67, %69, %cst_55 {dimension_numbers = #tpu.dot_dimension_numbers<[1], [0], [0], [1], [0, 0, 1, 1], [], []>} : vector<8x16xbf16>, vector<16x32xbf16>, vector<8x32xf32> -> vector<8x32xf32>
    %71 = arith.addf %64, %70 : vector<8x32xf32>
    %72 = vector.extract_strided_slice %66 {offsets = [1, 0], sizes = [8, 16], strides = [1, 1]} : vector<10x16xbf16> to vector<8x16xbf16>
    %c1_56 = arith.constant 1 : index
    %c0_57 = arith.constant 0 : index
    %c0_58 = arith.constant 0 : index
    %73 = vector.load %arg5[%c1_56, %c0_57, %c0_58] : memref<9x16x32xbf16, #tpu.memory_space<vmem>>, vector<1x16x32xbf16>
    %74 = vector.shape_cast %73 : vector<1x16x32xbf16> to vector<16x32xbf16>
    %cst_59 = arith.constant dense<0.000000e+00> : vector<8x32xf32>
    %75 = tpu.matmul %72, %74, %cst_59 {dimension_numbers = #tpu.dot_dimension_numbers<[1], [0], [0], [1], [0, 0, 1, 1], [], []>} : vector<8x16xbf16>, vector<16x32xbf16>, vector<8x32xf32> -> vector<8x32xf32>
    %76 = arith.addf %71, %75 : vector<8x32xf32>
    %77 = vector.extract_strided_slice %66 {offsets = [2, 0], sizes = [8, 16], strides = [1, 1]} : vector<10x16xbf16> to vector<8x16xbf16>
    %c2_60 = arith.constant 2 : index
    %c0_61 = arith.constant 0 : index
    %c0_62 = arith.constant 0 : index
    %78 = vector.load %arg5[%c2_60, %c0_61, %c0_62] : memref<9x16x32xbf16, #tpu.memory_space<vmem>>, vector<1x16x32xbf16>
    %79 = vector.shape_cast %78 : vector<1x16x32xbf16> to vector<16x32xbf16>
    %cst_63 = arith.constant dense<0.000000e+00> : vector<8x32xf32>
    %80 = tpu.matmul %77, %79, %cst_63 {dimension_numbers = #tpu.dot_dimension_numbers<[1], [0], [0], [1], [0, 0, 1, 1], [], []>} : vector<8x16xbf16>, vector<16x32xbf16>, vector<8x32xf32> -> vector<8x32xf32>
    %81 = arith.addf %76, %80 : vector<8x32xf32>
    %c0_64 = arith.constant 0 : index
    %c2_65 = arith.constant 2 : index
    %c0_66 = arith.constant 0 : index
    %c0_67 = arith.constant 0 : index
    %82 = vector.load %arg3[%c0_64, %c2_65, %c0_66, %c0_67] : memref<1x8x10x16xbf16, #tpu.memory_space<vmem>>, vector<1x1x10x16xbf16>
    %83 = vector.shape_cast %82 : vector<1x1x10x16xbf16> to vector<10x16xbf16>
    %84 = vector.extract_strided_slice %83 {offsets = [0, 0], sizes = [8, 16], strides = [1, 1]} : vector<10x16xbf16> to vector<8x16xbf16>
    %c3_68 = arith.constant 3 : index
    %c0_69 = arith.constant 0 : index
    %c0_70 = arith.constant 0 : index
    %85 = vector.load %arg5[%c3_68, %c0_69, %c0_70] : memref<9x16x32xbf16, #tpu.memory_space<vmem>>, vector<1x16x32xbf16>
    %86 = vector.shape_cast %85 : vector<1x16x32xbf16> to vector<16x32xbf16>
    %cst_71 = arith.constant dense<0.000000e+00> : vector<8x32xf32>
    %87 = tpu.matmul %84, %86, %cst_71 {dimension_numbers = #tpu.dot_dimension_numbers<[1], [0], [0], [1], [0, 0, 1, 1], [], []>} : vector<8x16xbf16>, vector<16x32xbf16>, vector<8x32xf32> -> vector<8x32xf32>
    %88 = arith.addf %81, %87 : vector<8x32xf32>
    %89 = vector.extract_strided_slice %83 {offsets = [1, 0], sizes = [8, 16], strides = [1, 1]} : vector<10x16xbf16> to vector<8x16xbf16>
    %c4_72 = arith.constant 4 : index
    %c0_73 = arith.constant 0 : index
    %c0_74 = arith.constant 0 : index
    %90 = vector.load %arg5[%c4_72, %c0_73, %c0_74] : memref<9x16x32xbf16, #tpu.memory_space<vmem>>, vector<1x16x32xbf16>
    %91 = vector.shape_cast %90 : vector<1x16x32xbf16> to vector<16x32xbf16>
    %cst_75 = arith.constant dense<0.000000e+00> : vector<8x32xf32>
    %92 = tpu.matmul %89, %91, %cst_75 {dimension_numbers = #tpu.dot_dimension_numbers<[1], [0], [0], [1], [0, 0, 1, 1], [], []>} : vector<8x16xbf16>, vector<16x32xbf16>, vector<8x32xf32> -> vector<8x32xf32>
    %93 = arith.addf %88, %92 : vector<8x32xf32>
    %94 = vector.extract_strided_slice %83 {offsets = [2, 0], sizes = [8, 16], strides = [1, 1]} : vector<10x16xbf16> to vector<8x16xbf16>
    %c5_76 = arith.constant 5 : index
    %c0_77 = arith.constant 0 : index
    %c0_78 = arith.constant 0 : index
    %95 = vector.load %arg5[%c5_76, %c0_77, %c0_78] : memref<9x16x32xbf16, #tpu.memory_space<vmem>>, vector<1x16x32xbf16>
    %96 = vector.shape_cast %95 : vector<1x16x32xbf16> to vector<16x32xbf16>
    %cst_79 = arith.constant dense<0.000000e+00> : vector<8x32xf32>
    %97 = tpu.matmul %94, %96, %cst_79 {dimension_numbers = #tpu.dot_dimension_numbers<[1], [0], [0], [1], [0, 0, 1, 1], [], []>} : vector<8x16xbf16>, vector<16x32xbf16>, vector<8x32xf32> -> vector<8x32xf32>
    %98 = arith.addf %93, %97 : vector<8x32xf32>
    %c0_80 = arith.constant 0 : index
    %c3_81 = arith.constant 3 : index
    %c0_82 = arith.constant 0 : index
    %c0_83 = arith.constant 0 : index
    %99 = vector.load %arg3[%c0_80, %c3_81, %c0_82, %c0_83] : memref<1x8x10x16xbf16, #tpu.memory_space<vmem>>, vector<1x1x10x16xbf16>
    %100 = vector.shape_cast %99 : vector<1x1x10x16xbf16> to vector<10x16xbf16>
    %101 = vector.extract_strided_slice %100 {offsets = [0, 0], sizes = [8, 16], strides = [1, 1]} : vector<10x16xbf16> to vector<8x16xbf16>
    %c6_84 = arith.constant 6 : index
    %c0_85 = arith.constant 0 : index
    %c0_86 = arith.constant 0 : index
    %102 = vector.load %arg5[%c6_84, %c0_85, %c0_86] : memref<9x16x32xbf16, #tpu.memory_space<vmem>>, vector<1x16x32xbf16>
    %103 = vector.shape_cast %102 : vector<1x16x32xbf16> to vector<16x32xbf16>
    %cst_87 = arith.constant dense<0.000000e+00> : vector<8x32xf32>
    %104 = tpu.matmul %101, %103, %cst_87 {dimension_numbers = #tpu.dot_dimension_numbers<[1], [0], [0], [1], [0, 0, 1, 1], [], []>} : vector<8x16xbf16>, vector<16x32xbf16>, vector<8x32xf32> -> vector<8x32xf32>
    %105 = arith.addf %98, %104 : vector<8x32xf32>
    %106 = vector.extract_strided_slice %100 {offsets = [1, 0], sizes = [8, 16], strides = [1, 1]} : vector<10x16xbf16> to vector<8x16xbf16>
    %c7_88 = arith.constant 7 : index
    %c0_89 = arith.constant 0 : index
    %c0_90 = arith.constant 0 : index
    %107 = vector.load %arg5[%c7_88, %c0_89, %c0_90] : memref<9x16x32xbf16, #tpu.memory_space<vmem>>, vector<1x16x32xbf16>
    %108 = vector.shape_cast %107 : vector<1x16x32xbf16> to vector<16x32xbf16>
    %cst_91 = arith.constant dense<0.000000e+00> : vector<8x32xf32>
    %109 = tpu.matmul %106, %108, %cst_91 {dimension_numbers = #tpu.dot_dimension_numbers<[1], [0], [0], [1], [0, 0, 1, 1], [], []>} : vector<8x16xbf16>, vector<16x32xbf16>, vector<8x32xf32> -> vector<8x32xf32>
    %110 = arith.addf %105, %109 : vector<8x32xf32>
    %111 = vector.extract_strided_slice %100 {offsets = [2, 0], sizes = [8, 16], strides = [1, 1]} : vector<10x16xbf16> to vector<8x16xbf16>
    %c8_92 = arith.constant 8 : index
    %c0_93 = arith.constant 0 : index
    %c0_94 = arith.constant 0 : index
    %112 = vector.load %arg5[%c8_92, %c0_93, %c0_94] : memref<9x16x32xbf16, #tpu.memory_space<vmem>>, vector<1x16x32xbf16>
    %113 = vector.shape_cast %112 : vector<1x16x32xbf16> to vector<16x32xbf16>
    %cst_95 = arith.constant dense<0.000000e+00> : vector<8x32xf32>
    %114 = tpu.matmul %111, %113, %cst_95 {dimension_numbers = #tpu.dot_dimension_numbers<[1], [0], [0], [1], [0, 0, 1, 1], [], []>} : vector<8x16xbf16>, vector<16x32xbf16>, vector<8x32xf32> -> vector<8x32xf32>
    %115 = arith.addf %110, %114 : vector<8x32xf32>
    %c0_96 = arith.constant 0 : index
    %c1_97 = arith.constant 1 : index
    %c0_98 = arith.constant 0 : index
    %c0_99 = arith.constant 0 : index
    %116 = vector.load %arg6[%c0_96, %c1_97, %c0_98, %c0_99] : memref<1x8x8x32xf32, #tpu.memory_space<vmem>>, vector<1x1x8x32xf32>
    %117 = vector.shape_cast %116 : vector<1x1x8x32xf32> to vector<8x32xf32>
    %118 = vector.shape_cast %115 : vector<8x32xf32> to vector<1x1x8x32xf32>
    tpu.vector_store %arg6[%c0_96, %c1_97, %c0_98, %c0_99], %118 {strides = array<i32>} : memref<1x8x8x32xf32, #tpu.memory_space<vmem>>, vector<1x1x8x32xf32>,
    %cst_100 = arith.constant dense<0.000000e+00> : vector<32xf32>
    %119 = vector.multi_reduction <add>, %115, %cst_100 [0] : vector<8x32xf32> to vector<32xf32>
    %120 = vector.shape_cast %119 : vector<32xf32> to vector<1x32xf32>
    %121 = arith.addf %59, %120 : vector<1x32xf32>
    %122 = arith.mulf %115, %115 : vector<8x32xf32>
    %cst_101 = arith.constant dense<0.000000e+00> : vector<32xf32>
    %123 = vector.multi_reduction <add>, %122, %cst_101 [0] : vector<8x32xf32> to vector<32xf32>
    %124 = vector.shape_cast %123 : vector<32xf32> to vector<1x32xf32>
    %125 = arith.addf %63, %124 : vector<1x32xf32>
    %cst_102 = arith.constant 0.000000e+00 : f32
    %126 = vector.broadcast %cst_102 : f32 to vector<8x32xf32>
    %c0_103 = arith.constant 0 : index
    %c2_104 = arith.constant 2 : index
    %c0_105 = arith.constant 0 : index
    %c0_106 = arith.constant 0 : index
    %127 = vector.load %arg3[%c0_103, %c2_104, %c0_105, %c0_106] : memref<1x8x10x16xbf16, #tpu.memory_space<vmem>>, vector<1x1x10x16xbf16>
    %128 = vector.shape_cast %127 : vector<1x1x10x16xbf16> to vector<10x16xbf16>
    %129 = vector.extract_strided_slice %128 {offsets = [0, 0], sizes = [8, 16], strides = [1, 1]} : vector<10x16xbf16> to vector<8x16xbf16>
    %c0_107 = arith.constant 0 : index
    %c0_108 = arith.constant 0 : index
    %c0_109 = arith.constant 0 : index
    %130 = vector.load %arg5[%c0_107, %c0_108, %c0_109] : memref<9x16x32xbf16, #tpu.memory_space<vmem>>, vector<1x16x32xbf16>
    %131 = vector.shape_cast %130 : vector<1x16x32xbf16> to vector<16x32xbf16>
    %cst_110 = arith.constant dense<0.000000e+00> : vector<8x32xf32>
    %132 = tpu.matmul %129, %131, %cst_110 {dimension_numbers = #tpu.dot_dimension_numbers<[1], [0], [0], [1], [0, 0, 1, 1], [], []>} : vector<8x16xbf16>, vector<16x32xbf16>, vector<8x32xf32> -> vector<8x32xf32>
    %133 = arith.addf %126, %132 : vector<8x32xf32>
    %134 = vector.extract_strided_slice %128 {offsets = [1, 0], sizes = [8, 16], strides = [1, 1]} : vector<10x16xbf16> to vector<8x16xbf16>
    %c1_111 = arith.constant 1 : index
    %c0_112 = arith.constant 0 : index
    %c0_113 = arith.constant 0 : index
    %135 = vector.load %arg5[%c1_111, %c0_112, %c0_113] : memref<9x16x32xbf16, #tpu.memory_space<vmem>>, vector<1x16x32xbf16>
    %136 = vector.shape_cast %135 : vector<1x16x32xbf16> to vector<16x32xbf16>
    %cst_114 = arith.constant dense<0.000000e+00> : vector<8x32xf32>
    %137 = tpu.matmul %134, %136, %cst_114 {dimension_numbers = #tpu.dot_dimension_numbers<[1], [0], [0], [1], [0, 0, 1, 1], [], []>} : vector<8x16xbf16>, vector<16x32xbf16>, vector<8x32xf32> -> vector<8x32xf32>
    %138 = arith.addf %133, %137 : vector<8x32xf32>
    %139 = vector.extract_strided_slice %128 {offsets = [2, 0], sizes = [8, 16], strides = [1, 1]} : vector<10x16xbf16> to vector<8x16xbf16>
    %c2_115 = arith.constant 2 : index
    %c0_116 = arith.constant 0 : index
    %c0_117 = arith.constant 0 : index
    %140 = vector.load %arg5[%c2_115, %c0_116, %c0_117] : memref<9x16x32xbf16, #tpu.memory_space<vmem>>, vector<1x16x32xbf16>
    %141 = vector.shape_cast %140 : vector<1x16x32xbf16> to vector<16x32xbf16>
    %cst_118 = arith.constant dense<0.000000e+00> : vector<8x32xf32>
    %142 = tpu.matmul %139, %141, %cst_118 {dimension_numbers = #tpu.dot_dimension_numbers<[1], [0], [0], [1], [0, 0, 1, 1], [], []>} : vector<8x16xbf16>, vector<16x32xbf16>, vector<8x32xf32> -> vector<8x32xf32>
    %143 = arith.addf %138, %142 : vector<8x32xf32>
    %c0_119 = arith.constant 0 : index
    %c3_120 = arith.constant 3 : index
    %c0_121 = arith.constant 0 : index
    %c0_122 = arith.constant 0 : index
    %144 = vector.load %arg3[%c0_119, %c3_120, %c0_121, %c0_122] : memref<1x8x10x16xbf16, #tpu.memory_space<vmem>>, vector<1x1x10x16xbf16>
    %145 = vector.shape_cast %144 : vector<1x1x10x16xbf16> to vector<10x16xbf16>
    %146 = vector.extract_strided_slice %145 {offsets = [0, 0], sizes = [8, 16], strides = [1, 1]} : vector<10x16xbf16> to vector<8x16xbf16>
    %c3_123 = arith.constant 3 : index
    %c0_124 = arith.constant 0 : index
    %c0_125 = arith.constant 0 : index
    %147 = vector.load %arg5[%c3_123, %c0_124, %c0_125] : memref<9x16x32xbf16, #tpu.memory_space<vmem>>, vector<1x16x32xbf16>
    %148 = vector.shape_cast %147 : vector<1x16x32xbf16> to vector<16x32xbf16>
    %cst_126 = arith.constant dense<0.000000e+00> : vector<8x32xf32>
    %149 = tpu.matmul %146, %148, %cst_126 {dimension_numbers = #tpu.dot_dimension_numbers<[1], [0], [0], [1], [0, 0, 1, 1], [], []>} : vector<8x16xbf16>, vector<16x32xbf16>, vector<8x32xf32> -> vector<8x32xf32>
    %150 = arith.addf %143, %149 : vector<8x32xf32>
    %151 = vector.extract_strided_slice %145 {offsets = [1, 0], sizes = [8, 16], strides = [1, 1]} : vector<10x16xbf16> to vector<8x16xbf16>
    %c4_127 = arith.constant 4 : index
    %c0_128 = arith.constant 0 : index
    %c0_129 = arith.constant 0 : index
    %152 = vector.load %arg5[%c4_127, %c0_128, %c0_129] : memref<9x16x32xbf16, #tpu.memory_space<vmem>>, vector<1x16x32xbf16>
    %153 = vector.shape_cast %152 : vector<1x16x32xbf16> to vector<16x32xbf16>
    %cst_130 = arith.constant dense<0.000000e+00> : vector<8x32xf32>
    %154 = tpu.matmul %151, %153, %cst_130 {dimension_numbers = #tpu.dot_dimension_numbers<[1], [0], [0], [1], [0, 0, 1, 1], [], []>} : vector<8x16xbf16>, vector<16x32xbf16>, vector<8x32xf32> -> vector<8x32xf32>
    %155 = arith.addf %150, %154 : vector<8x32xf32>
    %156 = vector.extract_strided_slice %145 {offsets = [2, 0], sizes = [8, 16], strides = [1, 1]} : vector<10x16xbf16> to vector<8x16xbf16>
    %c5_131 = arith.constant 5 : index
    %c0_132 = arith.constant 0 : index
    %c0_133 = arith.constant 0 : index
    %157 = vector.load %arg5[%c5_131, %c0_132, %c0_133] : memref<9x16x32xbf16, #tpu.memory_space<vmem>>, vector<1x16x32xbf16>
    %158 = vector.shape_cast %157 : vector<1x16x32xbf16> to vector<16x32xbf16>
    %cst_134 = arith.constant dense<0.000000e+00> : vector<8x32xf32>
    %159 = tpu.matmul %156, %158, %cst_134 {dimension_numbers = #tpu.dot_dimension_numbers<[1], [0], [0], [1], [0, 0, 1, 1], [], []>} : vector<8x16xbf16>, vector<16x32xbf16>, vector<8x32xf32> -> vector<8x32xf32>
    %160 = arith.addf %155, %159 : vector<8x32xf32>
    %c0_135 = arith.constant 0 : index
    %c4_136 = arith.constant 4 : index
    %c0_137 = arith.constant 0 : index
    %c0_138 = arith.constant 0 : index
    %161 = vector.load %arg3[%c0_135, %c4_136, %c0_137, %c0_138] : memref<1x8x10x16xbf16, #tpu.memory_space<vmem>>, vector<1x1x10x16xbf16>
    %162 = vector.shape_cast %161 : vector<1x1x10x16xbf16> to vector<10x16xbf16>
    %163 = vector.extract_strided_slice %162 {offsets = [0, 0], sizes = [8, 16], strides = [1, 1]} : vector<10x16xbf16> to vector<8x16xbf16>
    %c6_139 = arith.constant 6 : index
    %c0_140 = arith.constant 0 : index
    %c0_141 = arith.constant 0 : index
    %164 = vector.load %arg5[%c6_139, %c0_140, %c0_141] : memref<9x16x32xbf16, #tpu.memory_space<vmem>>, vector<1x16x32xbf16>
    %165 = vector.shape_cast %164 : vector<1x16x32xbf16> to vector<16x32xbf16>
    %cst_142 = arith.constant dense<0.000000e+00> : vector<8x32xf32>
    %166 = tpu.matmul %163, %165, %cst_142 {dimension_numbers = #tpu.dot_dimension_numbers<[1], [0], [0], [1], [0, 0, 1, 1], [], []>} : vector<8x16xbf16>, vector<16x32xbf16>, vector<8x32xf32> -> vector<8x32xf32>
    %167 = arith.addf %160, %166 : vector<8x32xf32>
    %168 = vector.extract_strided_slice %162 {offsets = [1, 0], sizes = [8, 16], strides = [1, 1]} : vector<10x16xbf16> to vector<8x16xbf16>
    %c7_143 = arith.constant 7 : index
    %c0_144 = arith.constant 0 : index
    %c0_145 = arith.constant 0 : index
    %169 = vector.load %arg5[%c7_143, %c0_144, %c0_145] : memref<9x16x32xbf16, #tpu.memory_space<vmem>>, vector<1x16x32xbf16>
    %170 = vector.shape_cast %169 : vector<1x16x32xbf16> to vector<16x32xbf16>
    %cst_146 = arith.constant dense<0.000000e+00> : vector<8x32xf32>
    %171 = tpu.matmul %168, %170, %cst_146 {dimension_numbers = #tpu.dot_dimension_numbers<[1], [0], [0], [1], [0, 0, 1, 1], [], []>} : vector<8x16xbf16>, vector<16x32xbf16>, vector<8x32xf32> -> vector<8x32xf32>
    %172 = arith.addf %167, %171 : vector<8x32xf32>
    %173 = vector.extract_strided_slice %162 {offsets = [2, 0], sizes = [8, 16], strides = [1, 1]} : vector<10x16xbf16> to vector<8x16xbf16>
    %c8_147 = arith.constant 8 : index
    %c0_148 = arith.constant 0 : index
    %c0_149 = arith.constant 0 : index
    %174 = vector.load %arg5[%c8_147, %c0_148, %c0_149] : memref<9x16x32xbf16, #tpu.memory_space<vmem>>, vector<1x16x32xbf16>
    %175 = vector.shape_cast %174 : vector<1x16x32xbf16> to vector<16x32xbf16>
    %cst_150 = arith.constant dense<0.000000e+00> : vector<8x32xf32>
    %176 = tpu.matmul %173, %175, %cst_150 {dimension_numbers = #tpu.dot_dimension_numbers<[1], [0], [0], [1], [0, 0, 1, 1], [], []>} : vector<8x16xbf16>, vector<16x32xbf16>, vector<8x32xf32> -> vector<8x32xf32>
    %177 = arith.addf %172, %176 : vector<8x32xf32>
    %c0_151 = arith.constant 0 : index
    %c2_152 = arith.constant 2 : index
    %c0_153 = arith.constant 0 : index
    %c0_154 = arith.constant 0 : index
    %178 = vector.load %arg6[%c0_151, %c2_152, %c0_153, %c0_154] : memref<1x8x8x32xf32, #tpu.memory_space<vmem>>, vector<1x1x8x32xf32>
    %179 = vector.shape_cast %178 : vector<1x1x8x32xf32> to vector<8x32xf32>
    %180 = vector.shape_cast %177 : vector<8x32xf32> to vector<1x1x8x32xf32>
    tpu.vector_store %arg6[%c0_151, %c2_152, %c0_153, %c0_154], %180 {strides = array<i32>} : memref<1x8x8x32xf32, #tpu.memory_space<vmem>>, vector<1x1x8x32xf32>,
    %cst_155 = arith.constant dense<0.000000e+00> : vector<32xf32>
    %181 = vector.multi_reduction <add>, %177, %cst_155 [0] : vector<8x32xf32> to vector<32xf32>
    %182 = vector.shape_cast %181 : vector<32xf32> to vector<1x32xf32>
    %183 = arith.addf %121, %182 : vector<1x32xf32>
    %184 = arith.mulf %177, %177 : vector<8x32xf32>
    %cst_156 = arith.constant dense<0.000000e+00> : vector<32xf32>
    %185 = vector.multi_reduction <add>, %184, %cst_156 [0] : vector<8x32xf32> to vector<32xf32>
    %186 = vector.shape_cast %185 : vector<32xf32> to vector<1x32xf32>
    %187 = arith.addf %125, %186 : vector<1x32xf32>
    %cst_157 = arith.constant 0.000000e+00 : f32
    %188 = vector.broadcast %cst_157 : f32 to vector<8x32xf32>
    %c0_158 = arith.constant 0 : index
    %c3_159 = arith.constant 3 : index
    %c0_160 = arith.constant 0 : index
    %c0_161 = arith.constant 0 : index
    %189 = vector.load %arg3[%c0_158, %c3_159, %c0_160, %c0_161] : memref<1x8x10x16xbf16, #tpu.memory_space<vmem>>, vector<1x1x10x16xbf16>
    %190 = vector.shape_cast %189 : vector<1x1x10x16xbf16> to vector<10x16xbf16>
    %191 = vector.extract_strided_slice %190 {offsets = [0, 0], sizes = [8, 16], strides = [1, 1]} : vector<10x16xbf16> to vector<8x16xbf16>
    %c0_162 = arith.constant 0 : index
    %c0_163 = arith.constant 0 : index
    %c0_164 = arith.constant 0 : index
    %192 = vector.load %arg5[%c0_162, %c0_163, %c0_164] : memref<9x16x32xbf16, #tpu.memory_space<vmem>>, vector<1x16x32xbf16>
    %193 = vector.shape_cast %192 : vector<1x16x32xbf16> to vector<16x32xbf16>
    %cst_165 = arith.constant dense<0.000000e+00> : vector<8x32xf32>
    %194 = tpu.matmul %191, %193, %cst_165 {dimension_numbers = #tpu.dot_dimension_numbers<[1], [0], [0], [1], [0, 0, 1, 1], [], []>} : vector<8x16xbf16>, vector<16x32xbf16>, vector<8x32xf32> -> vector<8x32xf32>
    %195 = arith.addf %188, %194 : vector<8x32xf32>
    %196 = vector.extract_strided_slice %190 {offsets = [1, 0], sizes = [8, 16], strides = [1, 1]} : vector<10x16xbf16> to vector<8x16xbf16>
    %c1_166 = arith.constant 1 : index
    %c0_167 = arith.constant 0 : index
    %c0_168 = arith.constant 0 : index
    %197 = vector.load %arg5[%c1_166, %c0_167, %c0_168] : memref<9x16x32xbf16, #tpu.memory_space<vmem>>, vector<1x16x32xbf16>
    %198 = vector.shape_cast %197 : vector<1x16x32xbf16> to vector<16x32xbf16>
    %cst_169 = arith.constant dense<0.000000e+00> : vector<8x32xf32>
    %199 = tpu.matmul %196, %198, %cst_169 {dimension_numbers = #tpu.dot_dimension_numbers<[1], [0], [0], [1], [0, 0, 1, 1], [], []>} : vector<8x16xbf16>, vector<16x32xbf16>, vector<8x32xf32> -> vector<8x32xf32>
    %200 = arith.addf %195, %199 : vector<8x32xf32>
    %201 = vector.extract_strided_slice %190 {offsets = [2, 0], sizes = [8, 16], strides = [1, 1]} : vector<10x16xbf16> to vector<8x16xbf16>
    %c2_170 = arith.constant 2 : index
    %c0_171 = arith.constant 0 : index
    %c0_172 = arith.constant 0 : index
    %202 = vector.load %arg5[%c2_170, %c0_171, %c0_172] : memref<9x16x32xbf16, #tpu.memory_space<vmem>>, vector<1x16x32xbf16>
    %203 = vector.shape_cast %202 : vector<1x16x32xbf16> to vector<16x32xbf16>
    %cst_173 = arith.constant dense<0.000000e+00> : vector<8x32xf32>
    %204 = tpu.matmul %201, %203, %cst_173 {dimension_numbers = #tpu.dot_dimension_numbers<[1], [0], [0], [1], [0, 0, 1, 1], [], []>} : vector<8x16xbf16>, vector<16x32xbf16>, vector<8x32xf32> -> vector<8x32xf32>
    %205 = arith.addf %200, %204 : vector<8x32xf32>
    %c0_174 = arith.constant 0 : index
    %c4_175 = arith.constant 4 : index
    %c0_176 = arith.constant 0 : index
    %c0_177 = arith.constant 0 : index
    %206 = vector.load %arg3[%c0_174, %c4_175, %c0_176, %c0_177] : memref<1x8x10x16xbf16, #tpu.memory_space<vmem>>, vector<1x1x10x16xbf16>
    %207 = vector.shape_cast %206 : vector<1x1x10x16xbf16> to vector<10x16xbf16>
    %208 = vector.extract_strided_slice %207 {offsets = [0, 0], sizes = [8, 16], strides = [1, 1]} : vector<10x16xbf16> to vector<8x16xbf16>
    %c3_178 = arith.constant 3 : index
    %c0_179 = arith.constant 0 : index
    %c0_180 = arith.constant 0 : index
    %209 = vector.load %arg5[%c3_178, %c0_179, %c0_180] : memref<9x16x32xbf16, #tpu.memory_space<vmem>>, vector<1x16x32xbf16>
    %210 = vector.shape_cast %209 : vector<1x16x32xbf16> to vector<16x32xbf16>
    %cst_181 = arith.constant dense<0.000000e+00> : vector<8x32xf32>
    %211 = tpu.matmul %208, %210, %cst_181 {dimension_numbers = #tpu.dot_dimension_numbers<[1], [0], [0], [1], [0, 0, 1, 1], [], []>} : vector<8x16xbf16>, vector<16x32xbf16>, vector<8x32xf32> -> vector<8x32xf32>
    %212 = arith.addf %205, %211 : vector<8x32xf32>
    %213 = vector.extract_strided_slice %207 {offsets = [1, 0], sizes = [8, 16], strides = [1, 1]} : vector<10x16xbf16> to vector<8x16xbf16>
    %c4_182 = arith.constant 4 : index
    %c0_183 = arith.constant 0 : index
    %c0_184 = arith.constant 0 : index
    %214 = vector.load %arg5[%c4_182, %c0_183, %c0_184] : memref<9x16x32xbf16, #tpu.memory_space<vmem>>, vector<1x16x32xbf16>
    %215 = vector.shape_cast %214 : vector<1x16x32xbf16> to vector<16x32xbf16>
    %cst_185 = arith.constant dense<0.000000e+00> : vector<8x32xf32>
    %216 = tpu.matmul %213, %215, %cst_185 {dimension_numbers = #tpu.dot_dimension_numbers<[1], [0], [0], [1], [0, 0, 1, 1], [], []>} : vector<8x16xbf16>, vector<16x32xbf16>, vector<8x32xf32> -> vector<8x32xf32>
    %217 = arith.addf %212, %216 : vector<8x32xf32>
    %218 = vector.extract_strided_slice %207 {offsets = [2, 0], sizes = [8, 16], strides = [1, 1]} : vector<10x16xbf16> to vector<8x16xbf16>
    %c5_186 = arith.constant 5 : index
    %c0_187 = arith.constant 0 : index
    %c0_188 = arith.constant 0 : index
    %219 = vector.load %arg5[%c5_186, %c0_187, %c0_188] : memref<9x16x32xbf16, #tpu.memory_space<vmem>>, vector<1x16x32xbf16>
    %220 = vector.shape_cast %219 : vector<1x16x32xbf16> to vector<16x32xbf16>
    %cst_189 = arith.constant dense<0.000000e+00> : vector<8x32xf32>
    %221 = tpu.matmul %218, %220, %cst_189 {dimension_numbers = #tpu.dot_dimension_numbers<[1], [0], [0], [1], [0, 0, 1, 1], [], []>} : vector<8x16xbf16>, vector<16x32xbf16>, vector<8x32xf32> -> vector<8x32xf32>
    %222 = arith.addf %217, %221 : vector<8x32xf32>
    %c0_190 = arith.constant 0 : index
    %c5_191 = arith.constant 5 : index
    %c0_192 = arith.constant 0 : index
    %c0_193 = arith.constant 0 : index
    %223 = vector.load %arg3[%c0_190, %c5_191, %c0_192, %c0_193] : memref<1x8x10x16xbf16, #tpu.memory_space<vmem>>, vector<1x1x10x16xbf16>
    %224 = vector.shape_cast %223 : vector<1x1x10x16xbf16> to vector<10x16xbf16>
    %225 = vector.extract_strided_slice %224 {offsets = [0, 0], sizes = [8, 16], strides = [1, 1]} : vector<10x16xbf16> to vector<8x16xbf16>
    %c6_194 = arith.constant 6 : index
    %c0_195 = arith.constant 0 : index
    %c0_196 = arith.constant 0 : index
    %226 = vector.load %arg5[%c6_194, %c0_195, %c0_196] : memref<9x16x32xbf16, #tpu.memory_space<vmem>>, vector<1x16x32xbf16>
    %227 = vector.shape_cast %226 : vector<1x16x32xbf16> to vector<16x32xbf16>
    %cst_197 = arith.constant dense<0.000000e+00> : vector<8x32xf32>
    %228 = tpu.matmul %225, %227, %cst_197 {dimension_numbers = #tpu.dot_dimension_numbers<[1], [0], [0], [1], [0, 0, 1, 1], [], []>} : vector<8x16xbf16>, vector<16x32xbf16>, vector<8x32xf32> -> vector<8x32xf32>
    %229 = arith.addf %222, %228 : vector<8x32xf32>
    %230 = vector.extract_strided_slice %224 {offsets = [1, 0], sizes = [8, 16], strides = [1, 1]} : vector<10x16xbf16> to vector<8x16xbf16>
    %c7_198 = arith.constant 7 : index
    %c0_199 = arith.constant 0 : index
    %c0_200 = arith.constant 0 : index
    %231 = vector.load %arg5[%c7_198, %c0_199, %c0_200] : memref<9x16x32xbf16, #tpu.memory_space<vmem>>, vector<1x16x32xbf16>
    %232 = vector.shape_cast %231 : vector<1x16x32xbf16> to vector<16x32xbf16>
    %cst_201 = arith.constant dense<0.000000e+00> : vector<8x32xf32>
    %233 = tpu.matmul %230, %232, %cst_201 {dimension_numbers = #tpu.dot_dimension_numbers<[1], [0], [0], [1], [0, 0, 1, 1], [], []>} : vector<8x16xbf16>, vector<16x32xbf16>, vector<8x32xf32> -> vector<8x32xf32>
    %234 = arith.addf %229, %233 : vector<8x32xf32>
    %235 = vector.extract_strided_slice %224 {offsets = [2, 0], sizes = [8, 16], strides = [1, 1]} : vector<10x16xbf16> to vector<8x16xbf16>
    %c8_202 = arith.constant 8 : index
    %c0_203 = arith.constant 0 : index
    %c0_204 = arith.constant 0 : index
    %236 = vector.load %arg5[%c8_202, %c0_203, %c0_204] : memref<9x16x32xbf16, #tpu.memory_space<vmem>>, vector<1x16x32xbf16>
    %237 = vector.shape_cast %236 : vector<1x16x32xbf16> to vector<16x32xbf16>
    %cst_205 = arith.constant dense<0.000000e+00> : vector<8x32xf32>
    %238 = tpu.matmul %235, %237, %cst_205 {dimension_numbers = #tpu.dot_dimension_numbers<[1], [0], [0], [1], [0, 0, 1, 1], [], []>} : vector<8x16xbf16>, vector<16x32xbf16>, vector<8x32xf32> -> vector<8x32xf32>
    %239 = arith.addf %234, %238 : vector<8x32xf32>
    %c0_206 = arith.constant 0 : index
    %c3_207 = arith.constant 3 : index
    %c0_208 = arith.constant 0 : index
    %c0_209 = arith.constant 0 : index
    %240 = vector.load %arg6[%c0_206, %c3_207, %c0_208, %c0_209] : memref<1x8x8x32xf32, #tpu.memory_space<vmem>>, vector<1x1x8x32xf32>
    %241 = vector.shape_cast %240 : vector<1x1x8x32xf32> to vector<8x32xf32>
    %242 = vector.shape_cast %239 : vector<8x32xf32> to vector<1x1x8x32xf32>
    tpu.vector_store %arg6[%c0_206, %c3_207, %c0_208, %c0_209], %242 {strides = array<i32>} : memref<1x8x8x32xf32, #tpu.memory_space<vmem>>, vector<1x1x8x32xf32>,
    %cst_210 = arith.constant dense<0.000000e+00> : vector<32xf32>
    %243 = vector.multi_reduction <add>, %239, %cst_210 [0] : vector<8x32xf32> to vector<32xf32>
    %244 = vector.shape_cast %243 : vector<32xf32> to vector<1x32xf32>
    %245 = arith.addf %183, %244 : vector<1x32xf32>
    %246 = arith.mulf %239, %239 : vector<8x32xf32>
    %cst_211 = arith.constant dense<0.000000e+00> : vector<32xf32>
    %247 = vector.multi_reduction <add>, %246, %cst_211 [0] : vector<8x32xf32> to vector<32xf32>
    %248 = vector.shape_cast %247 : vector<32xf32> to vector<1x32xf32>
    %249 = arith.addf %187, %248 : vector<1x32xf32>
    %cst_212 = arith.constant 0.000000e+00 : f32
    %250 = vector.broadcast %cst_212 : f32 to vector<8x32xf32>
    %c0_213 = arith.constant 0 : index
    %c4_214 = arith.constant 4 : index
    %c0_215 = arith.constant 0 : index
    %c0_216 = arith.constant 0 : index
    %251 = vector.load %arg3[%c0_213, %c4_214, %c0_215, %c0_216] : memref<1x8x10x16xbf16, #tpu.memory_space<vmem>>, vector<1x1x10x16xbf16>
    %252 = vector.shape_cast %251 : vector<1x1x10x16xbf16> to vector<10x16xbf16>
    %253 = vector.extract_strided_slice %252 {offsets = [0, 0], sizes = [8, 16], strides = [1, 1]} : vector<10x16xbf16> to vector<8x16xbf16>
    %c0_217 = arith.constant 0 : index
    %c0_218 = arith.constant 0 : index
    %c0_219 = arith.constant 0 : index
    %254 = vector.load %arg5[%c0_217, %c0_218, %c0_219] : memref<9x16x32xbf16, #tpu.memory_space<vmem>>, vector<1x16x32xbf16>
    %255 = vector.shape_cast %254 : vector<1x16x32xbf16> to vector<16x32xbf16>
    %cst_220 = arith.constant dense<0.000000e+00> : vector<8x32xf32>
    %256 = tpu.matmul %253, %255, %cst_220 {dimension_numbers = #tpu.dot_dimension_numbers<[1], [0], [0], [1], [0, 0, 1, 1], [], []>} : vector<8x16xbf16>, vector<16x32xbf16>, vector<8x32xf32> -> vector<8x32xf32>
    %257 = arith.addf %250, %256 : vector<8x32xf32>
    %258 = vector.extract_strided_slice %252 {offsets = [1, 0], sizes = [8, 16], strides = [1, 1]} : vector<10x16xbf16> to vector<8x16xbf16>
    %c1_221 = arith.constant 1 : index
    %c0_222 = arith.constant 0 : index
    %c0_223 = arith.constant 0 : index
    %259 = vector.load %arg5[%c1_221, %c0_222, %c0_223] : memref<9x16x32xbf16, #tpu.memory_space<vmem>>, vector<1x16x32xbf16>
    %260 = vector.shape_cast %259 : vector<1x16x32xbf16> to vector<16x32xbf16>
    %cst_224 = arith.constant dense<0.000000e+00> : vector<8x32xf32>
    %261 = tpu.matmul %258, %260, %cst_224 {dimension_numbers = #tpu.dot_dimension_numbers<[1], [0], [0], [1], [0, 0, 1, 1], [], []>} : vector<8x16xbf16>, vector<16x32xbf16>, vector<8x32xf32> -> vector<8x32xf32>
    %262 = arith.addf %257, %261 : vector<8x32xf32>
    %263 = vector.extract_strided_slice %252 {offsets = [2, 0], sizes = [8, 16], strides = [1, 1]} : vector<10x16xbf16> to vector<8x16xbf16>
    %c2_225 = arith.constant 2 : index
    %c0_226 = arith.constant 0 : index
    %c0_227 = arith.constant 0 : index
    %264 = vector.load %arg5[%c2_225, %c0_226, %c0_227] : memref<9x16x32xbf16, #tpu.memory_space<vmem>>, vector<1x16x32xbf16>
    %265 = vector.shape_cast %264 : vector<1x16x32xbf16> to vector<16x32xbf16>
    %cst_228 = arith.constant dense<0.000000e+00> : vector<8x32xf32>
    %266 = tpu.matmul %263, %265, %cst_228 {dimension_numbers = #tpu.dot_dimension_numbers<[1], [0], [0], [1], [0, 0, 1, 1], [], []>} : vector<8x16xbf16>, vector<16x32xbf16>, vector<8x32xf32> -> vector<8x32xf32>
    %267 = arith.addf %262, %266 : vector<8x32xf32>
    %c0_229 = arith.constant 0 : index
    %c5_230 = arith.constant 5 : index
    %c0_231 = arith.constant 0 : index
    %c0_232 = arith.constant 0 : index
    %268 = vector.load %arg3[%c0_229, %c5_230, %c0_231, %c0_232] : memref<1x8x10x16xbf16, #tpu.memory_space<vmem>>, vector<1x1x10x16xbf16>
    %269 = vector.shape_cast %268 : vector<1x1x10x16xbf16> to vector<10x16xbf16>
    %270 = vector.extract_strided_slice %269 {offsets = [0, 0], sizes = [8, 16], strides = [1, 1]} : vector<10x16xbf16> to vector<8x16xbf16>
    %c3_233 = arith.constant 3 : index
    %c0_234 = arith.constant 0 : index
    %c0_235 = arith.constant 0 : index
    %271 = vector.load %arg5[%c3_233, %c0_234, %c0_235] : memref<9x16x32xbf16, #tpu.memory_space<vmem>>, vector<1x16x32xbf16>
    %272 = vector.shape_cast %271 : vector<1x16x32xbf16> to vector<16x32xbf16>
    %cst_236 = arith.constant dense<0.000000e+00> : vector<8x32xf32>
    %273 = tpu.matmul %270, %272, %cst_236 {dimension_numbers = #tpu.dot_dimension_numbers<[1], [0], [0], [1], [0, 0, 1, 1], [], []>} : vector<8x16xbf16>, vector<16x32xbf16>, vector<8x32xf32> -> vector<8x32xf32>
    %274 = arith.addf %267, %273 : vector<8x32xf32>
    %275 = vector.extract_strided_slice %269 {offsets = [1, 0], sizes = [8, 16], strides = [1, 1]} : vector<10x16xbf16> to vector<8x16xbf16>
    %c4_237 = arith.constant 4 : index
    %c0_238 = arith.constant 0 : index
    %c0_239 = arith.constant 0 : index
    %276 = vector.load %arg5[%c4_237, %c0_238, %c0_239] : memref<9x16x32xbf16, #tpu.memory_space<vmem>>, vector<1x16x32xbf16>
    %277 = vector.shape_cast %276 : vector<1x16x32xbf16> to vector<16x32xbf16>
    %cst_240 = arith.constant dense<0.000000e+00> : vector<8x32xf32>
    %278 = tpu.matmul %275, %277, %cst_240 {dimension_numbers = #tpu.dot_dimension_numbers<[1], [0], [0], [1], [0, 0, 1, 1], [], []>} : vector<8x16xbf16>, vector<16x32xbf16>, vector<8x32xf32> -> vector<8x32xf32>
    %279 = arith.addf %274, %278 : vector<8x32xf32>
    %280 = vector.extract_strided_slice %269 {offsets = [2, 0], sizes = [8, 16], strides = [1, 1]} : vector<10x16xbf16> to vector<8x16xbf16>
    %c5_241 = arith.constant 5 : index
    %c0_242 = arith.constant 0 : index
    %c0_243 = arith.constant 0 : index
    %281 = vector.load %arg5[%c5_241, %c0_242, %c0_243] : memref<9x16x32xbf16, #tpu.memory_space<vmem>>, vector<1x16x32xbf16>
    %282 = vector.shape_cast %281 : vector<1x16x32xbf16> to vector<16x32xbf16>
    %cst_244 = arith.constant dense<0.000000e+00> : vector<8x32xf32>
    %283 = tpu.matmul %280, %282, %cst_244 {dimension_numbers = #tpu.dot_dimension_numbers<[1], [0], [0], [1], [0, 0, 1, 1], [], []>} : vector<8x16xbf16>, vector<16x32xbf16>, vector<8x32xf32> -> vector<8x32xf32>
    %284 = arith.addf %279, %283 : vector<8x32xf32>
    %c0_245 = arith.constant 0 : index
    %c6_246 = arith.constant 6 : index
    %c0_247 = arith.constant 0 : index
    %c0_248 = arith.constant 0 : index
    %285 = vector.load %arg3[%c0_245, %c6_246, %c0_247, %c0_248] : memref<1x8x10x16xbf16, #tpu.memory_space<vmem>>, vector<1x1x10x16xbf16>
    %286 = vector.shape_cast %285 : vector<1x1x10x16xbf16> to vector<10x16xbf16>
    %287 = vector.extract_strided_slice %286 {offsets = [0, 0], sizes = [8, 16], strides = [1, 1]} : vector<10x16xbf16> to vector<8x16xbf16>
    %c6_249 = arith.constant 6 : index
    %c0_250 = arith.constant 0 : index
    %c0_251 = arith.constant 0 : index
    %288 = vector.load %arg5[%c6_249, %c0_250, %c0_251] : memref<9x16x32xbf16, #tpu.memory_space<vmem>>, vector<1x16x32xbf16>
    %289 = vector.shape_cast %288 : vector<1x16x32xbf16> to vector<16x32xbf16>
    %cst_252 = arith.constant dense<0.000000e+00> : vector<8x32xf32>
    %290 = tpu.matmul %287, %289, %cst_252 {dimension_numbers = #tpu.dot_dimension_numbers<[1], [0], [0], [1], [0, 0, 1, 1], [], []>} : vector<8x16xbf16>, vector<16x32xbf16>, vector<8x32xf32> -> vector<8x32xf32>
    %291 = arith.addf %284, %290 : vector<8x32xf32>
    %292 = vector.extract_strided_slice %286 {offsets = [1, 0], sizes = [8, 16], strides = [1, 1]} : vector<10x16xbf16> to vector<8x16xbf16>
    %c7_253 = arith.constant 7 : index
    %c0_254 = arith.constant 0 : index
    %c0_255 = arith.constant 0 : index
    %293 = vector.load %arg5[%c7_253, %c0_254, %c0_255] : memref<9x16x32xbf16, #tpu.memory_space<vmem>>, vector<1x16x32xbf16>
    %294 = vector.shape_cast %293 : vector<1x16x32xbf16> to vector<16x32xbf16>
    %cst_256 = arith.constant dense<0.000000e+00> : vector<8x32xf32>
    %295 = tpu.matmul %292, %294, %cst_256 {dimension_numbers = #tpu.dot_dimension_numbers<[1], [0], [0], [1], [0, 0, 1, 1], [], []>} : vector<8x16xbf16>, vector<16x32xbf16>, vector<8x32xf32> -> vector<8x32xf32>
    %296 = arith.addf %291, %295 : vector<8x32xf32>
    %297 = vector.extract_strided_slice %286 {offsets = [2, 0], sizes = [8, 16], strides = [1, 1]} : vector<10x16xbf16> to vector<8x16xbf16>
    %c8_257 = arith.constant 8 : index
    %c0_258 = arith.constant 0 : index
    %c0_259 = arith.constant 0 : index
    %298 = vector.load %arg5[%c8_257, %c0_258, %c0_259] : memref<9x16x32xbf16, #tpu.memory_space<vmem>>, vector<1x16x32xbf16>
    %299 = vector.shape_cast %298 : vector<1x16x32xbf16> to vector<16x32xbf16>
    %cst_260 = arith.constant dense<0.000000e+00> : vector<8x32xf32>
    %300 = tpu.matmul %297, %299, %cst_260 {dimension_numbers = #tpu.dot_dimension_numbers<[1], [0], [0], [1], [0, 0, 1, 1], [], []>} : vector<8x16xbf16>, vector<16x32xbf16>, vector<8x32xf32> -> vector<8x32xf32>
    %301 = arith.addf %296, %300 : vector<8x32xf32>
    %c0_261 = arith.constant 0 : index
    %c4_262 = arith.constant 4 : index
    %c0_263 = arith.constant 0 : index
    %c0_264 = arith.constant 0 : index
    %302 = vector.load %arg6[%c0_261, %c4_262, %c0_263, %c0_264] : memref<1x8x8x32xf32, #tpu.memory_space<vmem>>, vector<1x1x8x32xf32>
    %303 = vector.shape_cast %302 : vector<1x1x8x32xf32> to vector<8x32xf32>
    %304 = vector.shape_cast %301 : vector<8x32xf32> to vector<1x1x8x32xf32>
    tpu.vector_store %arg6[%c0_261, %c4_262, %c0_263, %c0_264], %304 {strides = array<i32>} : memref<1x8x8x32xf32, #tpu.memory_space<vmem>>, vector<1x1x8x32xf32>,
    %cst_265 = arith.constant dense<0.000000e+00> : vector<32xf32>
    %305 = vector.multi_reduction <add>, %301, %cst_265 [0] : vector<8x32xf32> to vector<32xf32>
    %306 = vector.shape_cast %305 : vector<32xf32> to vector<1x32xf32>
    %307 = arith.addf %245, %306 : vector<1x32xf32>
    %308 = arith.mulf %301, %301 : vector<8x32xf32>
    %cst_266 = arith.constant dense<0.000000e+00> : vector<32xf32>
    %309 = vector.multi_reduction <add>, %308, %cst_266 [0] : vector<8x32xf32> to vector<32xf32>
    %310 = vector.shape_cast %309 : vector<32xf32> to vector<1x32xf32>
    %311 = arith.addf %249, %310 : vector<1x32xf32>
    %cst_267 = arith.constant 0.000000e+00 : f32
    %312 = vector.broadcast %cst_267 : f32 to vector<8x32xf32>
    %c0_268 = arith.constant 0 : index
    %c5_269 = arith.constant 5 : index
    %c0_270 = arith.constant 0 : index
    %c0_271 = arith.constant 0 : index
    %313 = vector.load %arg3[%c0_268, %c5_269, %c0_270, %c0_271] : memref<1x8x10x16xbf16, #tpu.memory_space<vmem>>, vector<1x1x10x16xbf16>
    %314 = vector.shape_cast %313 : vector<1x1x10x16xbf16> to vector<10x16xbf16>
    %315 = vector.extract_strided_slice %314 {offsets = [0, 0], sizes = [8, 16], strides = [1, 1]} : vector<10x16xbf16> to vector<8x16xbf16>
    %c0_272 = arith.constant 0 : index
    %c0_273 = arith.constant 0 : index
    %c0_274 = arith.constant 0 : index
    %316 = vector.load %arg5[%c0_272, %c0_273, %c0_274] : memref<9x16x32xbf16, #tpu.memory_space<vmem>>, vector<1x16x32xbf16>
    %317 = vector.shape_cast %316 : vector<1x16x32xbf16> to vector<16x32xbf16>
    %cst_275 = arith.constant dense<0.000000e+00> : vector<8x32xf32>
    %318 = tpu.matmul %315, %317, %cst_275 {dimension_numbers = #tpu.dot_dimension_numbers<[1], [0], [0], [1], [0, 0, 1, 1], [], []>} : vector<8x16xbf16>, vector<16x32xbf16>, vector<8x32xf32> -> vector<8x32xf32>
    %319 = arith.addf %312, %318 : vector<8x32xf32>
    %320 = vector.extract_strided_slice %314 {offsets = [1, 0], sizes = [8, 16], strides = [1, 1]} : vector<10x16xbf16> to vector<8x16xbf16>
    %c1_276 = arith.constant 1 : index
    %c0_277 = arith.constant 0 : index
    %c0_278 = arith.constant 0 : index
    %321 = vector.load %arg5[%c1_276, %c0_277, %c0_278] : memref<9x16x32xbf16, #tpu.memory_space<vmem>>, vector<1x16x32xbf16>
    %322 = vector.shape_cast %321 : vector<1x16x32xbf16> to vector<16x32xbf16>
    %cst_279 = arith.constant dense<0.000000e+00> : vector<8x32xf32>
    %323 = tpu.matmul %320, %322, %cst_279 {dimension_numbers = #tpu.dot_dimension_numbers<[1], [0], [0], [1], [0, 0, 1, 1], [], []>} : vector<8x16xbf16>, vector<16x32xbf16>, vector<8x32xf32> -> vector<8x32xf32>
    %324 = arith.addf %319, %323 : vector<8x32xf32>
    %325 = vector.extract_strided_slice %314 {offsets = [2, 0], sizes = [8, 16], strides = [1, 1]} : vector<10x16xbf16> to vector<8x16xbf16>
    %c2_280 = arith.constant 2 : index
    %c0_281 = arith.constant 0 : index
    %c0_282 = arith.constant 0 : index
    %326 = vector.load %arg5[%c2_280, %c0_281, %c0_282] : memref<9x16x32xbf16, #tpu.memory_space<vmem>>, vector<1x16x32xbf16>
    %327 = vector.shape_cast %326 : vector<1x16x32xbf16> to vector<16x32xbf16>
    %cst_283 = arith.constant dense<0.000000e+00> : vector<8x32xf32>
    %328 = tpu.matmul %325, %327, %cst_283 {dimension_numbers = #tpu.dot_dimension_numbers<[1], [0], [0], [1], [0, 0, 1, 1], [], []>} : vector<8x16xbf16>, vector<16x32xbf16>, vector<8x32xf32> -> vector<8x32xf32>
    %329 = arith.addf %324, %328 : vector<8x32xf32>
    %c0_284 = arith.constant 0 : index
    %c6_285 = arith.constant 6 : index
    %c0_286 = arith.constant 0 : index
    %c0_287 = arith.constant 0 : index
    %330 = vector.load %arg3[%c0_284, %c6_285, %c0_286, %c0_287] : memref<1x8x10x16xbf16, #tpu.memory_space<vmem>>, vector<1x1x10x16xbf16>
    %331 = vector.shape_cast %330 : vector<1x1x10x16xbf16> to vector<10x16xbf16>
    %332 = vector.extract_strided_slice %331 {offsets = [0, 0], sizes = [8, 16], strides = [1, 1]} : vector<10x16xbf16> to vector<8x16xbf16>
    %c3_288 = arith.constant 3 : index
    %c0_289 = arith.constant 0 : index
    %c0_290 = arith.constant 0 : index
    %333 = vector.load %arg5[%c3_288, %c0_289, %c0_290] : memref<9x16x32xbf16, #tpu.memory_space<vmem>>, vector<1x16x32xbf16>
    %334 = vector.shape_cast %333 : vector<1x16x32xbf16> to vector<16x32xbf16>
    %cst_291 = arith.constant dense<0.000000e+00> : vector<8x32xf32>
    %335 = tpu.matmul %332, %334, %cst_291 {dimension_numbers = #tpu.dot_dimension_numbers<[1], [0], [0], [1], [0, 0, 1, 1], [], []>} : vector<8x16xbf16>, vector<16x32xbf16>, vector<8x32xf32> -> vector<8x32xf32>
    %336 = arith.addf %329, %335 : vector<8x32xf32>
    %337 = vector.extract_strided_slice %331 {offsets = [1, 0], sizes = [8, 16], strides = [1, 1]} : vector<10x16xbf16> to vector<8x16xbf16>
    %c4_292 = arith.constant 4 : index
    %c0_293 = arith.constant 0 : index
    %c0_294 = arith.constant 0 : index
    %338 = vector.load %arg5[%c4_292, %c0_293, %c0_294] : memref<9x16x32xbf16, #tpu.memory_space<vmem>>, vector<1x16x32xbf16>
    %339 = vector.shape_cast %338 : vector<1x16x32xbf16> to vector<16x32xbf16>
    %cst_295 = arith.constant dense<0.000000e+00> : vector<8x32xf32>
    %340 = tpu.matmul %337, %339, %cst_295 {dimension_numbers = #tpu.dot_dimension_numbers<[1], [0], [0], [1], [0, 0, 1, 1], [], []>} : vector<8x16xbf16>, vector<16x32xbf16>, vector<8x32xf32> -> vector<8x32xf32>
    %341 = arith.addf %336, %340 : vector<8x32xf32>
    %342 = vector.extract_strided_slice %331 {offsets = [2, 0], sizes = [8, 16], strides = [1, 1]} : vector<10x16xbf16> to vector<8x16xbf16>
    %c5_296 = arith.constant 5 : index
    %c0_297 = arith.constant 0 : index
    %c0_298 = arith.constant 0 : index
    %343 = vector.load %arg5[%c5_296, %c0_297, %c0_298] : memref<9x16x32xbf16, #tpu.memory_space<vmem>>, vector<1x16x32xbf16>
    %344 = vector.shape_cast %343 : vector<1x16x32xbf16> to vector<16x32xbf16>
    %cst_299 = arith.constant dense<0.000000e+00> : vector<8x32xf32>
    %345 = tpu.matmul %342, %344, %cst_299 {dimension_numbers = #tpu.dot_dimension_numbers<[1], [0], [0], [1], [0, 0, 1, 1], [], []>} : vector<8x16xbf16>, vector<16x32xbf16>, vector<8x32xf32> -> vector<8x32xf32>
    %346 = arith.addf %341, %345 : vector<8x32xf32>
    %c0_300 = arith.constant 0 : index
    %c7_301 = arith.constant 7 : index
    %c0_302 = arith.constant 0 : index
    %c0_303 = arith.constant 0 : index
    %347 = vector.load %arg3[%c0_300, %c7_301, %c0_302, %c0_303] : memref<1x8x10x16xbf16, #tpu.memory_space<vmem>>, vector<1x1x10x16xbf16>
    %348 = vector.shape_cast %347 : vector<1x1x10x16xbf16> to vector<10x16xbf16>
    %349 = vector.extract_strided_slice %348 {offsets = [0, 0], sizes = [8, 16], strides = [1, 1]} : vector<10x16xbf16> to vector<8x16xbf16>
    %c6_304 = arith.constant 6 : index
    %c0_305 = arith.constant 0 : index
    %c0_306 = arith.constant 0 : index
    %350 = vector.load %arg5[%c6_304, %c0_305, %c0_306] : memref<9x16x32xbf16, #tpu.memory_space<vmem>>, vector<1x16x32xbf16>
    %351 = vector.shape_cast %350 : vector<1x16x32xbf16> to vector<16x32xbf16>
    %cst_307 = arith.constant dense<0.000000e+00> : vector<8x32xf32>
    %352 = tpu.matmul %349, %351, %cst_307 {dimension_numbers = #tpu.dot_dimension_numbers<[1], [0], [0], [1], [0, 0, 1, 1], [], []>} : vector<8x16xbf16>, vector<16x32xbf16>, vector<8x32xf32> -> vector<8x32xf32>
    %353 = arith.addf %346, %352 : vector<8x32xf32>
    %354 = vector.extract_strided_slice %348 {offsets = [1, 0], sizes = [8, 16], strides = [1, 1]} : vector<10x16xbf16> to vector<8x16xbf16>
    %c7_308 = arith.constant 7 : index
    %c0_309 = arith.constant 0 : index
    %c0_310 = arith.constant 0 : index
    %355 = vector.load %arg5[%c7_308, %c0_309, %c0_310] : memref<9x16x32xbf16, #tpu.memory_space<vmem>>, vector<1x16x32xbf16>
    %356 = vector.shape_cast %355 : vector<1x16x32xbf16> to vector<16x32xbf16>
    %cst_311 = arith.constant dense<0.000000e+00> : vector<8x32xf32>
    %357 = tpu.matmul %354, %356, %cst_311 {dimension_numbers = #tpu.dot_dimension_numbers<[1], [0], [0], [1], [0, 0, 1, 1], [], []>} : vector<8x16xbf16>, vector<16x32xbf16>, vector<8x32xf32> -> vector<8x32xf32>
    %358 = arith.addf %353, %357 : vector<8x32xf32>
    %359 = vector.extract_strided_slice %348 {offsets = [2, 0], sizes = [8, 16], strides = [1, 1]} : vector<10x16xbf16> to vector<8x16xbf16>
    %c8_312 = arith.constant 8 : index
    %c0_313 = arith.constant 0 : index
    %c0_314 = arith.constant 0 : index
    %360 = vector.load %arg5[%c8_312, %c0_313, %c0_314] : memref<9x16x32xbf16, #tpu.memory_space<vmem>>, vector<1x16x32xbf16>
    %361 = vector.shape_cast %360 : vector<1x16x32xbf16> to vector<16x32xbf16>
    %cst_315 = arith.constant dense<0.000000e+00> : vector<8x32xf32>
    %362 = tpu.matmul %359, %361, %cst_315 {dimension_numbers = #tpu.dot_dimension_numbers<[1], [0], [0], [1], [0, 0, 1, 1], [], []>} : vector<8x16xbf16>, vector<16x32xbf16>, vector<8x32xf32> -> vector<8x32xf32>
    %363 = arith.addf %358, %362 : vector<8x32xf32>
    %c0_316 = arith.constant 0 : index
    %c5_317 = arith.constant 5 : index
    %c0_318 = arith.constant 0 : index
    %c0_319 = arith.constant 0 : index
    %364 = vector.load %arg6[%c0_316, %c5_317, %c0_318, %c0_319] : memref<1x8x8x32xf32, #tpu.memory_space<vmem>>, vector<1x1x8x32xf32>
    %365 = vector.shape_cast %364 : vector<1x1x8x32xf32> to vector<8x32xf32>
    %366 = vector.shape_cast %363 : vector<8x32xf32> to vector<1x1x8x32xf32>
    tpu.vector_store %arg6[%c0_316, %c5_317, %c0_318, %c0_319], %366 {strides = array<i32>} : memref<1x8x8x32xf32, #tpu.memory_space<vmem>>, vector<1x1x8x32xf32>,
    %cst_320 = arith.constant dense<0.000000e+00> : vector<32xf32>
    %367 = vector.multi_reduction <add>, %363, %cst_320 [0] : vector<8x32xf32> to vector<32xf32>
    %368 = vector.shape_cast %367 : vector<32xf32> to vector<1x32xf32>
    %369 = arith.addf %307, %368 : vector<1x32xf32>
    %370 = arith.mulf %363, %363 : vector<8x32xf32>
    %cst_321 = arith.constant dense<0.000000e+00> : vector<32xf32>
    %371 = vector.multi_reduction <add>, %370, %cst_321 [0] : vector<8x32xf32> to vector<32xf32>
    %372 = vector.shape_cast %371 : vector<32xf32> to vector<1x32xf32>
    %373 = arith.addf %311, %372 : vector<1x32xf32>
    %cst_322 = arith.constant 0.000000e+00 : f32
    %374 = vector.broadcast %cst_322 : f32 to vector<8x32xf32>
    %c0_323 = arith.constant 0 : index
    %c6_324 = arith.constant 6 : index
    %c0_325 = arith.constant 0 : index
    %c0_326 = arith.constant 0 : index
    %375 = vector.load %arg3[%c0_323, %c6_324, %c0_325, %c0_326] : memref<1x8x10x16xbf16, #tpu.memory_space<vmem>>, vector<1x1x10x16xbf16>
    %376 = vector.shape_cast %375 : vector<1x1x10x16xbf16> to vector<10x16xbf16>
    %377 = vector.extract_strided_slice %376 {offsets = [0, 0], sizes = [8, 16], strides = [1, 1]} : vector<10x16xbf16> to vector<8x16xbf16>
    %c0_327 = arith.constant 0 : index
    %c0_328 = arith.constant 0 : index
    %c0_329 = arith.constant 0 : index
    %378 = vector.load %arg5[%c0_327, %c0_328, %c0_329] : memref<9x16x32xbf16, #tpu.memory_space<vmem>>, vector<1x16x32xbf16>
    %379 = vector.shape_cast %378 : vector<1x16x32xbf16> to vector<16x32xbf16>
    %cst_330 = arith.constant dense<0.000000e+00> : vector<8x32xf32>
    %380 = tpu.matmul %377, %379, %cst_330 {dimension_numbers = #tpu.dot_dimension_numbers<[1], [0], [0], [1], [0, 0, 1, 1], [], []>} : vector<8x16xbf16>, vector<16x32xbf16>, vector<8x32xf32> -> vector<8x32xf32>
    %381 = arith.addf %374, %380 : vector<8x32xf32>
    %382 = vector.extract_strided_slice %376 {offsets = [1, 0], sizes = [8, 16], strides = [1, 1]} : vector<10x16xbf16> to vector<8x16xbf16>
    %c1_331 = arith.constant 1 : index
    %c0_332 = arith.constant 0 : index
    %c0_333 = arith.constant 0 : index
    %383 = vector.load %arg5[%c1_331, %c0_332, %c0_333] : memref<9x16x32xbf16, #tpu.memory_space<vmem>>, vector<1x16x32xbf16>
    %384 = vector.shape_cast %383 : vector<1x16x32xbf16> to vector<16x32xbf16>
    %cst_334 = arith.constant dense<0.000000e+00> : vector<8x32xf32>
    %385 = tpu.matmul %382, %384, %cst_334 {dimension_numbers = #tpu.dot_dimension_numbers<[1], [0], [0], [1], [0, 0, 1, 1], [], []>} : vector<8x16xbf16>, vector<16x32xbf16>, vector<8x32xf32> -> vector<8x32xf32>
    %386 = arith.addf %381, %385 : vector<8x32xf32>
    %387 = vector.extract_strided_slice %376 {offsets = [2, 0], sizes = [8, 16], strides = [1, 1]} : vector<10x16xbf16> to vector<8x16xbf16>
    %c2_335 = arith.constant 2 : index
    %c0_336 = arith.constant 0 : index
    %c0_337 = arith.constant 0 : index
    %388 = vector.load %arg5[%c2_335, %c0_336, %c0_337] : memref<9x16x32xbf16, #tpu.memory_space<vmem>>, vector<1x16x32xbf16>
    %389 = vector.shape_cast %388 : vector<1x16x32xbf16> to vector<16x32xbf16>
    %cst_338 = arith.constant dense<0.000000e+00> : vector<8x32xf32>
    %390 = tpu.matmul %387, %389, %cst_338 {dimension_numbers = #tpu.dot_dimension_numbers<[1], [0], [0], [1], [0, 0, 1, 1], [], []>} : vector<8x16xbf16>, vector<16x32xbf16>, vector<8x32xf32> -> vector<8x32xf32>
    %391 = arith.addf %386, %390 : vector<8x32xf32>
    %c0_339 = arith.constant 0 : index
    %c7_340 = arith.constant 7 : index
    %c0_341 = arith.constant 0 : index
    %c0_342 = arith.constant 0 : index
    %392 = vector.load %arg3[%c0_339, %c7_340, %c0_341, %c0_342] : memref<1x8x10x16xbf16, #tpu.memory_space<vmem>>, vector<1x1x10x16xbf16>
    %393 = vector.shape_cast %392 : vector<1x1x10x16xbf16> to vector<10x16xbf16>
    %394 = vector.extract_strided_slice %393 {offsets = [0, 0], sizes = [8, 16], strides = [1, 1]} : vector<10x16xbf16> to vector<8x16xbf16>
    %c3_343 = arith.constant 3 : index
    %c0_344 = arith.constant 0 : index
    %c0_345 = arith.constant 0 : index
    %395 = vector.load %arg5[%c3_343, %c0_344, %c0_345] : memref<9x16x32xbf16, #tpu.memory_space<vmem>>, vector<1x16x32xbf16>
    %396 = vector.shape_cast %395 : vector<1x16x32xbf16> to vector<16x32xbf16>
    %cst_346 = arith.constant dense<0.000000e+00> : vector<8x32xf32>
    %397 = tpu.matmul %394, %396, %cst_346 {dimension_numbers = #tpu.dot_dimension_numbers<[1], [0], [0], [1], [0, 0, 1, 1], [], []>} : vector<8x16xbf16>, vector<16x32xbf16>, vector<8x32xf32> -> vector<8x32xf32>
    %398 = arith.addf %391, %397 : vector<8x32xf32>
    %399 = vector.extract_strided_slice %393 {offsets = [1, 0], sizes = [8, 16], strides = [1, 1]} : vector<10x16xbf16> to vector<8x16xbf16>
    %c4_347 = arith.constant 4 : index
    %c0_348 = arith.constant 0 : index
    %c0_349 = arith.constant 0 : index
    %400 = vector.load %arg5[%c4_347, %c0_348, %c0_349] : memref<9x16x32xbf16, #tpu.memory_space<vmem>>, vector<1x16x32xbf16>
    %401 = vector.shape_cast %400 : vector<1x16x32xbf16> to vector<16x32xbf16>
    %cst_350 = arith.constant dense<0.000000e+00> : vector<8x32xf32>
    %402 = tpu.matmul %399, %401, %cst_350 {dimension_numbers = #tpu.dot_dimension_numbers<[1], [0], [0], [1], [0, 0, 1, 1], [], []>} : vector<8x16xbf16>, vector<16x32xbf16>, vector<8x32xf32> -> vector<8x32xf32>
    %403 = arith.addf %398, %402 : vector<8x32xf32>
    %404 = vector.extract_strided_slice %393 {offsets = [2, 0], sizes = [8, 16], strides = [1, 1]} : vector<10x16xbf16> to vector<8x16xbf16>
    %c5_351 = arith.constant 5 : index
    %c0_352 = arith.constant 0 : index
    %c0_353 = arith.constant 0 : index
    %405 = vector.load %arg5[%c5_351, %c0_352, %c0_353] : memref<9x16x32xbf16, #tpu.memory_space<vmem>>, vector<1x16x32xbf16>
    %406 = vector.shape_cast %405 : vector<1x16x32xbf16> to vector<16x32xbf16>
    %cst_354 = arith.constant dense<0.000000e+00> : vector<8x32xf32>
    %407 = tpu.matmul %404, %406, %cst_354 {dimension_numbers = #tpu.dot_dimension_numbers<[1], [0], [0], [1], [0, 0, 1, 1], [], []>} : vector<8x16xbf16>, vector<16x32xbf16>, vector<8x32xf32> -> vector<8x32xf32>
    %408 = arith.addf %403, %407 : vector<8x32xf32>
    %c0_355 = arith.constant 0 : index
    %c0_356 = arith.constant 0 : index
    %c0_357 = arith.constant 0 : index
    %c0_358 = arith.constant 0 : index
    %409 = vector.load %arg4[%c0_355, %c0_356, %c0_357, %c0_358] : memref<1x2x10x16xbf16, #tpu.memory_space<vmem>>, vector<1x1x10x16xbf16>
    %410 = vector.shape_cast %409 : vector<1x1x10x16xbf16> to vector<10x16xbf16>
    %411 = vector.extract_strided_slice %410 {offsets = [0, 0], sizes = [8, 16], strides = [1, 1]} : vector<10x16xbf16> to vector<8x16xbf16>
    %c6_359 = arith.constant 6 : index
    %c0_360 = arith.constant 0 : index
    %c0_361 = arith.constant 0 : index
    %412 = vector.load %arg5[%c6_359, %c0_360, %c0_361] : memref<9x16x32xbf16, #tpu.memory_space<vmem>>, vector<1x16x32xbf16>
    %413 = vector.shape_cast %412 : vector<1x16x32xbf16> to vector<16x32xbf16>
    %cst_362 = arith.constant dense<0.000000e+00> : vector<8x32xf32>
    %414 = tpu.matmul %411, %413, %cst_362 {dimension_numbers = #tpu.dot_dimension_numbers<[1], [0], [0], [1], [0, 0, 1, 1], [], []>} : vector<8x16xbf16>, vector<16x32xbf16>, vector<8x32xf32> -> vector<8x32xf32>
    %415 = arith.addf %408, %414 : vector<8x32xf32>
    %416 = vector.extract_strided_slice %410 {offsets = [1, 0], sizes = [8, 16], strides = [1, 1]} : vector<10x16xbf16> to vector<8x16xbf16>
    %c7_363 = arith.constant 7 : index
    %c0_364 = arith.constant 0 : index
    %c0_365 = arith.constant 0 : index
    %417 = vector.load %arg5[%c7_363, %c0_364, %c0_365] : memref<9x16x32xbf16, #tpu.memory_space<vmem>>, vector<1x16x32xbf16>
    %418 = vector.shape_cast %417 : vector<1x16x32xbf16> to vector<16x32xbf16>
    %cst_366 = arith.constant dense<0.000000e+00> : vector<8x32xf32>
    %419 = tpu.matmul %416, %418, %cst_366 {dimension_numbers = #tpu.dot_dimension_numbers<[1], [0], [0], [1], [0, 0, 1, 1], [], []>} : vector<8x16xbf16>, vector<16x32xbf16>, vector<8x32xf32> -> vector<8x32xf32>
    %420 = arith.addf %415, %419 : vector<8x32xf32>
    %421 = vector.extract_strided_slice %410 {offsets = [2, 0], sizes = [8, 16], strides = [1, 1]} : vector<10x16xbf16> to vector<8x16xbf16>
    %c8_367 = arith.constant 8 : index
    %c0_368 = arith.constant 0 : index
    %c0_369 = arith.constant 0 : index
    %422 = vector.load %arg5[%c8_367, %c0_368, %c0_369] : memref<9x16x32xbf16, #tpu.memory_space<vmem>>, vector<1x16x32xbf16>
    %423 = vector.shape_cast %422 : vector<1x16x32xbf16> to vector<16x32xbf16>
    %cst_370 = arith.constant dense<0.000000e+00> : vector<8x32xf32>
    %424 = tpu.matmul %421, %423, %cst_370 {dimension_numbers = #tpu.dot_dimension_numbers<[1], [0], [0], [1], [0, 0, 1, 1], [], []>} : vector<8x16xbf16>, vector<16x32xbf16>, vector<8x32xf32> -> vector<8x32xf32>
    %425 = arith.addf %420, %424 : vector<8x32xf32>
    %c0_371 = arith.constant 0 : index
    %c6_372 = arith.constant 6 : index
    %c0_373 = arith.constant 0 : index
    %c0_374 = arith.constant 0 : index
    %426 = vector.load %arg6[%c0_371, %c6_372, %c0_373, %c0_374] : memref<1x8x8x32xf32, #tpu.memory_space<vmem>>, vector<1x1x8x32xf32>
    %427 = vector.shape_cast %426 : vector<1x1x8x32xf32> to vector<8x32xf32>
    %428 = vector.shape_cast %425 : vector<8x32xf32> to vector<1x1x8x32xf32>
    tpu.vector_store %arg6[%c0_371, %c6_372, %c0_373, %c0_374], %428 {strides = array<i32>} : memref<1x8x8x32xf32, #tpu.memory_space<vmem>>, vector<1x1x8x32xf32>,
    %cst_375 = arith.constant dense<0.000000e+00> : vector<32xf32>
    %429 = vector.multi_reduction <add>, %425, %cst_375 [0] : vector<8x32xf32> to vector<32xf32>
    %430 = vector.shape_cast %429 : vector<32xf32> to vector<1x32xf32>
    %431 = arith.addf %369, %430 : vector<1x32xf32>
    %432 = arith.mulf %425, %425 : vector<8x32xf32>
    %cst_376 = arith.constant dense<0.000000e+00> : vector<32xf32>
    %433 = vector.multi_reduction <add>, %432, %cst_376 [0] : vector<8x32xf32> to vector<32xf32>
    %434 = vector.shape_cast %433 : vector<32xf32> to vector<1x32xf32>
    %435 = arith.addf %373, %434 : vector<1x32xf32>
    %cst_377 = arith.constant 0.000000e+00 : f32
    %436 = vector.broadcast %cst_377 : f32 to vector<8x32xf32>
    %c0_378 = arith.constant 0 : index
    %c7_379 = arith.constant 7 : index
    %c0_380 = arith.constant 0 : index
    %c0_381 = arith.constant 0 : index
    %437 = vector.load %arg3[%c0_378, %c7_379, %c0_380, %c0_381] : memref<1x8x10x16xbf16, #tpu.memory_space<vmem>>, vector<1x1x10x16xbf16>
    %438 = vector.shape_cast %437 : vector<1x1x10x16xbf16> to vector<10x16xbf16>
    %439 = vector.extract_strided_slice %438 {offsets = [0, 0], sizes = [8, 16], strides = [1, 1]} : vector<10x16xbf16> to vector<8x16xbf16>
    %c0_382 = arith.constant 0 : index
    %c0_383 = arith.constant 0 : index
    %c0_384 = arith.constant 0 : index
    %440 = vector.load %arg5[%c0_382, %c0_383, %c0_384] : memref<9x16x32xbf16, #tpu.memory_space<vmem>>, vector<1x16x32xbf16>
    %441 = vector.shape_cast %440 : vector<1x16x32xbf16> to vector<16x32xbf16>
    %cst_385 = arith.constant dense<0.000000e+00> : vector<8x32xf32>
    %442 = tpu.matmul %439, %441, %cst_385 {dimension_numbers = #tpu.dot_dimension_numbers<[1], [0], [0], [1], [0, 0, 1, 1], [], []>} : vector<8x16xbf16>, vector<16x32xbf16>, vector<8x32xf32> -> vector<8x32xf32>
    %443 = arith.addf %436, %442 : vector<8x32xf32>
    %444 = vector.extract_strided_slice %438 {offsets = [1, 0], sizes = [8, 16], strides = [1, 1]} : vector<10x16xbf16> to vector<8x16xbf16>
    %c1_386 = arith.constant 1 : index
    %c0_387 = arith.constant 0 : index
    %c0_388 = arith.constant 0 : index
    %445 = vector.load %arg5[%c1_386, %c0_387, %c0_388] : memref<9x16x32xbf16, #tpu.memory_space<vmem>>, vector<1x16x32xbf16>
    %446 = vector.shape_cast %445 : vector<1x16x32xbf16> to vector<16x32xbf16>
    %cst_389 = arith.constant dense<0.000000e+00> : vector<8x32xf32>
    %447 = tpu.matmul %444, %446, %cst_389 {dimension_numbers = #tpu.dot_dimension_numbers<[1], [0], [0], [1], [0, 0, 1, 1], [], []>} : vector<8x16xbf16>, vector<16x32xbf16>, vector<8x32xf32> -> vector<8x32xf32>
    %448 = arith.addf %443, %447 : vector<8x32xf32>
    %449 = vector.extract_strided_slice %438 {offsets = [2, 0], sizes = [8, 16], strides = [1, 1]} : vector<10x16xbf16> to vector<8x16xbf16>
    %c2_390 = arith.constant 2 : index
    %c0_391 = arith.constant 0 : index
    %c0_392 = arith.constant 0 : index
    %450 = vector.load %arg5[%c2_390, %c0_391, %c0_392] : memref<9x16x32xbf16, #tpu.memory_space<vmem>>, vector<1x16x32xbf16>
    %451 = vector.shape_cast %450 : vector<1x16x32xbf16> to vector<16x32xbf16>
    %cst_393 = arith.constant dense<0.000000e+00> : vector<8x32xf32>
    %452 = tpu.matmul %449, %451, %cst_393 {dimension_numbers = #tpu.dot_dimension_numbers<[1], [0], [0], [1], [0, 0, 1, 1], [], []>} : vector<8x16xbf16>, vector<16x32xbf16>, vector<8x32xf32> -> vector<8x32xf32>
    %453 = arith.addf %448, %452 : vector<8x32xf32>
    %c0_394 = arith.constant 0 : index
    %c0_395 = arith.constant 0 : index
    %c0_396 = arith.constant 0 : index
    %c0_397 = arith.constant 0 : index
    %454 = vector.load %arg4[%c0_394, %c0_395, %c0_396, %c0_397] : memref<1x2x10x16xbf16, #tpu.memory_space<vmem>>, vector<1x1x10x16xbf16>
    %455 = vector.shape_cast %454 : vector<1x1x10x16xbf16> to vector<10x16xbf16>
    %456 = vector.extract_strided_slice %455 {offsets = [0, 0], sizes = [8, 16], strides = [1, 1]} : vector<10x16xbf16> to vector<8x16xbf16>
    %c3_398 = arith.constant 3 : index
    %c0_399 = arith.constant 0 : index
    %c0_400 = arith.constant 0 : index
    %457 = vector.load %arg5[%c3_398, %c0_399, %c0_400] : memref<9x16x32xbf16, #tpu.memory_space<vmem>>, vector<1x16x32xbf16>
    %458 = vector.shape_cast %457 : vector<1x16x32xbf16> to vector<16x32xbf16>
    %cst_401 = arith.constant dense<0.000000e+00> : vector<8x32xf32>
    %459 = tpu.matmul %456, %458, %cst_401 {dimension_numbers = #tpu.dot_dimension_numbers<[1], [0], [0], [1], [0, 0, 1, 1], [], []>} : vector<8x16xbf16>, vector<16x32xbf16>, vector<8x32xf32> -> vector<8x32xf32>
    %460 = arith.addf %453, %459 : vector<8x32xf32>
    %461 = vector.extract_strided_slice %455 {offsets = [1, 0], sizes = [8, 16], strides = [1, 1]} : vector<10x16xbf16> to vector<8x16xbf16>
    %c4_402 = arith.constant 4 : index
    %c0_403 = arith.constant 0 : index
    %c0_404 = arith.constant 0 : index
    %462 = vector.load %arg5[%c4_402, %c0_403, %c0_404] : memref<9x16x32xbf16, #tpu.memory_space<vmem>>, vector<1x16x32xbf16>
    %463 = vector.shape_cast %462 : vector<1x16x32xbf16> to vector<16x32xbf16>
    %cst_405 = arith.constant dense<0.000000e+00> : vector<8x32xf32>
    %464 = tpu.matmul %461, %463, %cst_405 {dimension_numbers = #tpu.dot_dimension_numbers<[1], [0], [0], [1], [0, 0, 1, 1], [], []>} : vector<8x16xbf16>, vector<16x32xbf16>, vector<8x32xf32> -> vector<8x32xf32>
    %465 = arith.addf %460, %464 : vector<8x32xf32>
    %466 = vector.extract_strided_slice %455 {offsets = [2, 0], sizes = [8, 16], strides = [1, 1]} : vector<10x16xbf16> to vector<8x16xbf16>
    %c5_406 = arith.constant 5 : index
    %c0_407 = arith.constant 0 : index
    %c0_408 = arith.constant 0 : index
    %467 = vector.load %arg5[%c5_406, %c0_407, %c0_408] : memref<9x16x32xbf16, #tpu.memory_space<vmem>>, vector<1x16x32xbf16>
    %468 = vector.shape_cast %467 : vector<1x16x32xbf16> to vector<16x32xbf16>
    %cst_409 = arith.constant dense<0.000000e+00> : vector<8x32xf32>
    %469 = tpu.matmul %466, %468, %cst_409 {dimension_numbers = #tpu.dot_dimension_numbers<[1], [0], [0], [1], [0, 0, 1, 1], [], []>} : vector<8x16xbf16>, vector<16x32xbf16>, vector<8x32xf32> -> vector<8x32xf32>
    %470 = arith.addf %465, %469 : vector<8x32xf32>
    %c0_410 = arith.constant 0 : index
    %c1_411 = arith.constant 1 : index
    %c0_412 = arith.constant 0 : index
    %c0_413 = arith.constant 0 : index
    %471 = vector.load %arg4[%c0_410, %c1_411, %c0_412, %c0_413] : memref<1x2x10x16xbf16, #tpu.memory_space<vmem>>, vector<1x1x10x16xbf16>
    %472 = vector.shape_cast %471 : vector<1x1x10x16xbf16> to vector<10x16xbf16>
    %473 = vector.extract_strided_slice %472 {offsets = [0, 0], sizes = [8, 16], strides = [1, 1]} : vector<10x16xbf16> to vector<8x16xbf16>
    %c6_414 = arith.constant 6 : index
    %c0_415 = arith.constant 0 : index
    %c0_416 = arith.constant 0 : index
    %474 = vector.load %arg5[%c6_414, %c0_415, %c0_416] : memref<9x16x32xbf16, #tpu.memory_space<vmem>>, vector<1x16x32xbf16>
    %475 = vector.shape_cast %474 : vector<1x16x32xbf16> to vector<16x32xbf16>
    %cst_417 = arith.constant dense<0.000000e+00> : vector<8x32xf32>
    %476 = tpu.matmul %473, %475, %cst_417 {dimension_numbers = #tpu.dot_dimension_numbers<[1], [0], [0], [1], [0, 0, 1, 1], [], []>} : vector<8x16xbf16>, vector<16x32xbf16>, vector<8x32xf32> -> vector<8x32xf32>
    %477 = arith.addf %470, %476 : vector<8x32xf32>
    %478 = vector.extract_strided_slice %472 {offsets = [1, 0], sizes = [8, 16], strides = [1, 1]} : vector<10x16xbf16> to vector<8x16xbf16>
    %c7_418 = arith.constant 7 : index
    %c0_419 = arith.constant 0 : index
    %c0_420 = arith.constant 0 : index
    %479 = vector.load %arg5[%c7_418, %c0_419, %c0_420] : memref<9x16x32xbf16, #tpu.memory_space<vmem>>, vector<1x16x32xbf16>
    %480 = vector.shape_cast %479 : vector<1x16x32xbf16> to vector<16x32xbf16>
    %cst_421 = arith.constant dense<0.000000e+00> : vector<8x32xf32>
    %481 = tpu.matmul %478, %480, %cst_421 {dimension_numbers = #tpu.dot_dimension_numbers<[1], [0], [0], [1], [0, 0, 1, 1], [], []>} : vector<8x16xbf16>, vector<16x32xbf16>, vector<8x32xf32> -> vector<8x32xf32>
    %482 = arith.addf %477, %481 : vector<8x32xf32>
    %483 = vector.extract_strided_slice %472 {offsets = [2, 0], sizes = [8, 16], strides = [1, 1]} : vector<10x16xbf16> to vector<8x16xbf16>
    %c8_422 = arith.constant 8 : index
    %c0_423 = arith.constant 0 : index
    %c0_424 = arith.constant 0 : index
    %484 = vector.load %arg5[%c8_422, %c0_423, %c0_424] : memref<9x16x32xbf16, #tpu.memory_space<vmem>>, vector<1x16x32xbf16>
    %485 = vector.shape_cast %484 : vector<1x16x32xbf16> to vector<16x32xbf16>
    %cst_425 = arith.constant dense<0.000000e+00> : vector<8x32xf32>
    %486 = tpu.matmul %483, %485, %cst_425 {dimension_numbers = #tpu.dot_dimension_numbers<[1], [0], [0], [1], [0, 0, 1, 1], [], []>} : vector<8x16xbf16>, vector<16x32xbf16>, vector<8x32xf32> -> vector<8x32xf32>
    %487 = arith.addf %482, %486 : vector<8x32xf32>
    %c0_426 = arith.constant 0 : index
    %c7_427 = arith.constant 7 : index
    %c0_428 = arith.constant 0 : index
    %c0_429 = arith.constant 0 : index
    %488 = vector.load %arg6[%c0_426, %c7_427, %c0_428, %c0_429] : memref<1x8x8x32xf32, #tpu.memory_space<vmem>>, vector<1x1x8x32xf32>
    %489 = vector.shape_cast %488 : vector<1x1x8x32xf32> to vector<8x32xf32>
    %490 = vector.shape_cast %487 : vector<8x32xf32> to vector<1x1x8x32xf32>
    tpu.vector_store %arg6[%c0_426, %c7_427, %c0_428, %c0_429], %490 {strides = array<i32>} : memref<1x8x8x32xf32, #tpu.memory_space<vmem>>, vector<1x1x8x32xf32>,
    %cst_430 = arith.constant dense<0.000000e+00> : vector<32xf32>
    %491 = vector.multi_reduction <add>, %487, %cst_430 [0] : vector<8x32xf32> to vector<32xf32>
    %492 = vector.shape_cast %491 : vector<32xf32> to vector<1x32xf32>
    %493 = arith.addf %431, %492 : vector<1x32xf32>
    %494 = arith.mulf %487, %487 : vector<8x32xf32>
    %cst_431 = arith.constant dense<0.000000e+00> : vector<32xf32>
    %495 = vector.multi_reduction <add>, %494, %cst_431 [0] : vector<8x32xf32> to vector<32xf32>
    %496 = vector.shape_cast %495 : vector<32xf32> to vector<1x32xf32>
    %497 = arith.addf %435, %496 : vector<1x32xf32>
    %c0_432 = arith.constant 0 : index
    %c0_433 = arith.constant 0 : index
    %c0_434 = arith.constant 0 : index
    %498 = vector.load %arg7[%c0_432, %c0_433, %c0_434] : memref<1x2x32xf32, #tpu.memory_space<vmem>>, vector<1x1x32xf32>
    %499 = vector.shape_cast %498 : vector<1x1x32xf32> to vector<1x32xf32>
    %500 = vector.shape_cast %493 : vector<1x32xf32> to vector<1x1x32xf32>
    tpu.vector_store %arg7[%c0_432, %c0_433, %c0_434], %500 {strides = array<i32>} : memref<1x2x32xf32, #tpu.memory_space<vmem>>, vector<1x1x32xf32>,
    %c0_435 = arith.constant 0 : index
    %c1_436 = arith.constant 1 : index
    %c0_437 = arith.constant 0 : index
    %501 = vector.load %arg7[%c0_435, %c1_436, %c0_437] : memref<1x2x32xf32, #tpu.memory_space<vmem>>, vector<1x1x32xf32>
    %502 = vector.shape_cast %501 : vector<1x1x32xf32> to vector<1x32xf32>
    %503 = vector.shape_cast %497 : vector<1x32xf32> to vector<1x1x32xf32>
    tpu.vector_store %arg7[%c0_435, %c1_436, %c0_437], %503 {strides = array<i32>} : memref<1x2x32xf32, #tpu.memory_space<vmem>>, vector<1x1x32xf32>,
    return
  }
  func.func @transform_0(%arg0: i32, %arg1: i32, %arg2: i32) -> (i32, i32, i32, i32) {
    %c0_i32 = arith.constant 0 : i32
    %c0_i32_0 = arith.constant 0 : i32
    %c0_i32_1 = arith.constant 0 : i32
    return %arg1, %arg2, %c0_i32, %c0_i32_0 : i32, i32, i32, i32
  }
  func.func @transform_1(%arg0: i32, %arg1: i32, %arg2: i32) -> (i32, i32, i32, i32) {
    %c1_i32 = arith.constant 1 : i32
    %0 = arith.addi %arg2, %c1_i32 : i32
    %c4_i32 = arith.constant 4 : i32
    %1 = arith.muli %0, %c4_i32 : i32
    %c0_i32 = arith.constant 0 : i32
    %c0_i32_0 = arith.constant 0 : i32
    %c0_i32_1 = arith.constant 0 : i32
    return %arg1, %1, %c0_i32, %c0_i32_0 : i32, i32, i32, i32
  }
  func.func @transform_2(%arg0: i32, %arg1: i32, %arg2: i32) -> (i32, i32, i32) {
    %c0_i32 = arith.constant 0 : i32
    %c0_i32_0 = arith.constant 0 : i32
    %c0_i32_1 = arith.constant 0 : i32
    return %c0_i32, %c0_i32_0, %arg0 : i32, i32, i32
  }
  func.func @transform_3(%arg0: i32, %arg1: i32, %arg2: i32) -> (i32, i32, i32, i32) {
    %c0_i32 = arith.constant 0 : i32
    %c0_i32_0 = arith.constant 0 : i32
    return %arg1, %arg2, %c0_i32, %arg0 : i32, i32, i32, i32
  }
  func.func @transform_4(%arg0: i32, %arg1: i32, %arg2: i32) -> (i32, i32, i32) {
    %c1_i32 = arith.constant 1 : i32
    %0 = arith.muli %arg1, %c1_i32 : i32
    %1 = arith.addi %0, %arg2 : i32
    %c0_i32 = arith.constant 0 : i32
    %c0_i32_0 = arith.constant 0 : i32
    return %1, %c0_i32, %arg0 : i32, i32, i32
  }
}

</mosaic_0001>

<llo_original>
// kernel: _conv3x3_stats.1
$region0: #{_conv3x3_stats.1}
  #allocation0 [shape = 'u32[]', space=smem, size = 0x4, offset = 0x4, fixed_abs, tag = 'smem constant byte address 0x4 - core index']
  #allocation1 [shape = 'u32[144,128]{1,0:T(1,128)}', space=vmem, size = 0x12000, scoped, tag = 'internal scratch']
  %s0 = inlined_call_operand.vmem [shape: bf16[1,10,10,16], index: 0, kind: input, shape index: {}, may-alias: {0,1}]
  %s1 = inlined_call_operand.vmem [shape: bf16[1,10,10,16], index: 1, kind: input, shape index: {}, may-alias: {0,1}]
  %s2 = inlined_call_operand.vmem [shape: bf16[9,16,32], index: 2, kind: input, shape index: {}]
  %s3 = inlined_call_operand.hbm [shape: f32[1,8,8,32], index: 3, kind: output, shape index: {0}]
  %s4 = inlined_call_operand.hbm [shape: f32[1,2,32], index: 4, kind: output, shape index: {1}]
  %5 = xla_tuple %s3, %s4
  %s6 = sld [smem:[#allocation0]]
  $region30: #{_conv3x3_stats.1} parent=0
    _
  %s8 = ssub.s32 1, %s6
  %s9 = scalar_select 0, %s8, %s6
  $region1: #{_conv3x3_stats.1} parent=0
    #allocation2 [shape = 'u8[32768]{0}', space=vmem, size = 0x8000, scoped, tag = 'output window, operand 0, single buffered']
    #allocation3 [shape = 's32[1]{0}', space=sflag, size = 0x4, scoped, tag = 'scoped memory for _conv3x3_stats.1']
    #allocation4 [shape = 'u8[1024]{0}', space=vmem, size = 0x400, scoped, tag = 'output window, operand 1, single buffered']
    #allocation5 [shape = 's32[1]{0}', space=sflag, size = 0x4, scoped, tag = 'scoped memory for _conv3x3_stats.1']
    %10 = vsyncpa [#allocation3], 0
    %11 = vsyncpa [#allocation5], 0
    // Predicated region
    $region2: #{_conv3x3_stats.1} parent=1 // pred_check
      _
    $region3: #{_conv3x3_stats.1} parent=1 // pred_check_branch
      %13 = sbr.rel (0) target = $region5
    $region4: #{_conv3x3_stats.1} parent=1 // pred_region
      _
    $region5: #{_conv3x3_stats.1} parent=1 // pred_fallthru
      _
    // Predicated region
    $region6: #{_conv3x3_stats.1} parent=1 // pred_check
      _
    $region7: #{_conv3x3_stats.1} parent=1 // pred_check_branch
      %15 = sbr.rel (0) target = $region9
    $region8: #{_conv3x3_stats.1} parent=1 // pred_region
      %s16 = sadd.s32 0, 1
      %s17 = smul.u32 %s16, 4
      %s18 = smul.u32 2, %s17
      %p19 = scmp.lt.s32.totalorder %s18, 9
      %s20 = scalar_select %p19, %s18, 9
      %s21 = smul.addr %s20, 2
      %s22 = smul.addr %s21, 4
      %s23 = scalar_lea.vmem %s1, %s22
      %s24 = sadd.s32 0, 1
      %s25 = smul.u32 %s24, 4
      %s26 = smul.u32 2, %s25
    $region9: #{_conv3x3_stats.1} parent=1 // pred_fallthru
      _
    // Predicated region
    $region10: #{_conv3x3_stats.1} parent=1 // pred_check
      _
    $region11: #{_conv3x3_stats.1} parent=1 // pred_check_branch
      %28 = sbr.rel (0) target = $region13
    $region12: #{_conv3x3_stats.1} parent=1 // pred_region
      _
    $region13: #{_conv3x3_stats.1} parent=1 // pred_fallthru
      _
    %s29 = sadd.s32 0, 1
    %s30 = smul.u32 %s29, 4
    %s31 = smul.u32 2, %s30
    %p32 = scmp.lt.s32.totalorder %s31, 9
    %s33 = scalar_select %p32, %s31, 9
    %s34 = smul.addr %s33, 2
    %s35 = smul.addr %s34, 4
    %s36 = scalar_lea.vmem %s1, %s35
    %s37 = sadd.s32 0, 1
    %s38 = smul.u32 %s37, 4
    %s39 = smul.u32 2, %s38
    %p40 = scmp.lt.s32.totalorder %s39, 9
    %s41 = scalar_select %p40, %s39, 9
    %s42 = smul.addr %s41, 2
    %s43 = smul.addr %s42, 4
    %s44 = scalar_lea.vmem %s1, %s43
    %s45 = sadd.s32 0, 1
    %s46 = smul.u32 %s45, 4
    %s47 = smul.u32 2, %s46
    %s48 = sadd.s32 0, 0
    %v50 = vld [vmem:[%s0] sm:$0xf]
    %v51 = vld [vmem:[%s0 + $0x4] sm:$0x1]
    %v52 = vld [vmem:[%s2] sm:$0xf]
    %v53 = vld [vmem:[%s2 + $0x4] sm:$0xf]
    %s54 = scalar_lea.vmem %s2, 8
    %v55 = vld [vmem:[%s54] sm:$0xf]
    %v56 = vld [vmem:[%s54 + $0x4] sm:$0xf]
    %v59 = vunpack.c.l.b16 %v50
    %v60 = vunpack.c.l.b16 %v51
    %v61 = vpack.c.b16 %v60, %v59
    %v63 = vshrl.u32 %v61, 16
    %v65 = vshll.u32 %v61, 16
    %v67 = vrot.slane %v65, 1
    %v68 = vor.u32 %v63, %v67
    %v71 = vunpack.c.l.b16 %v55
    %v72 = vunpack.c.l.b16 %v56
    %v73 = vpack.c.b16 %v72, %v71
    %vm75 = vcmask 130048
    %v77 = vsel %vm75, %v68, 0
    %79 = vmatprep.subr.bf16.mxu0 0
    %80 = vmatpush1.bf16.msra.mxu0 0
    %81 = vmatprep.subr.bf16.mxu0 0
    %82 = vmatpush1.bf16.msra.mxu0 0
    %83 = vmatprep.subr.bf16.mxu0 0
    %84 = vmatpush1.bf16.msra.mxu0 0
    %85 = vmatprep.subr.bf16.mxu0 0
    %86 = vmatpush1.bf16.msra.mxu0 0
    %87 = vmatprep.subr.bf16.mxu0 0
    %88 = vmatpush1.bf16.msra.mxu0 0
    %89 = vmatprep.subr.bf16.mxu0 0
    %90 = vmatpush1.bf16.msra.mxu0 0
    %91 = vmatprep.subr.bf16.mxu0 0
    %92 = vmatpush1.bf16.msra.mxu0 0
    %93 = vmatprep.subr.bf16.mxu0 0
    %94 = vmatpush1.bf16.msra.mxu0 %v73
    %95 = vmatprep.subr.bf16.mxu0 0
    %96 = vmatpush2.bf16.msra.mxu0 0
    %97 = vmatprep.subr.bf16.mxu0 0
    %98 = vmatpush2.bf16.msra.mxu0 0
    %99 = vmatprep.subr.bf16.mxu0 0
    %100 = vmatpush2.bf16.msra.mxu0 0
    %101 = vmatprep.subr.bf16.mxu0 0
    %102 = vmatpush2.bf16.msra.mxu0 0
    %103 = vmatprep.subr.bf16.mxu0 0
    %104 = vmatpush2.bf16.msra.mxu0 0
    %105 = vmatprep.subr.bf16.mxu0 0
    %106 = vmatpush2.bf16.msra.mxu0 0
    %107 = vmatprep.subr.bf16.mxu0 0
    %108 = vmatpush2.bf16.msra.mxu0 0
    %109 = vmatprep.subr.bf16.mxu0 0
    %110 = vmatpush2.bf16.msra.mxu0 0
    %111 = vmatprep.mubr.bf16.mxu0 0
    %112 = vmatmul.mubr.bf16.gmra.mxu0 %v77
    %v113 = vpop.f32.mrf.mxu0
    %v114 = vadd.f32 0.0, %v113
    %v115 = vpop.f32.mrf.mxu0
    %v116 = vpop.f32.mrf.mxu0
    %v117 = vpop.f32.mrf.mxu0
    %118 = vdwg.mxu0
    %v121 = vunpack.c.l.b16 %v52
    %v122 = vunpack.c.l.b16 %v53
    %v123 = vpack.c.b16 %v122, %v121
    %v126 = vsel %vm75, %v50, 0
    %128 = vmatprep.subr.bf16.mxu0 0
    %129 = vmatpush1.bf16.msra.mxu0 0
    %130 = vmatprep.subr.bf16.mxu0 0
    %131 = vmatpush1.bf16.msra.mxu0 0
    %132 = vmatprep.subr.bf16.mxu0 0
    %133 = vmatpush1.bf16.msra.mxu0 0
    %134 = vmatprep.subr.bf16.mxu0 0
    %135 = vmatpush1.bf16.msra.mxu0 0
    %136 = vmatprep.subr.bf16.mxu0 0
    %137 = vmatpush1.bf16.msra.mxu0 0
    %138 = vmatprep.subr.bf16.mxu0 0
    %139 = vmatpush1.bf16.msra.mxu0 0
    %140 = vmatprep.subr.bf16.mxu0 0
    %141 = vmatpush1.bf16.msra.mxu0 0
    %142 = vmatprep.subr.bf16.mxu0 0
    %143 = vmatpush1.bf16.msra.mxu0 %v123
    %144 = vmatprep.subr.bf16.mxu0 0
    %145 = vmatpush2.bf16.msra.mxu0 0
    %146 = vmatprep.subr.bf16.mxu0 0
    %147 = vmatpush2.bf16.msra.mxu0 0
    %148 = vmatprep.subr.bf16.mxu0 0
    %149 = vmatpush2.bf16.msra.mxu0 0
    %150 = vmatprep.subr.bf16.mxu0 0
    %151 = vmatpush2.bf16.msra.mxu0 0
    %152 = vmatprep.subr.bf16.mxu0 0
    %153 = vmatpush2.bf16.msra.mxu0 0
    %154 = vmatprep.subr.bf16.mxu0 0
    %155 = vmatpush2.bf16.msra.mxu0 0
    %156 = vmatprep.subr.bf16.mxu0 0
    %157 = vmatpush2.bf16.msra.mxu0 0
    %158 = vmatprep.subr.bf16.mxu0 0
    %159 = vmatpush2.bf16.msra.mxu0 0
    %160 = vmatprep.mubr.bf16.mxu0 0
    %161 = vmatmul.mubr.bf16.gmra.mxu0 %v126
    %v162 = vpop.f32.mrf.mxu0
    %v163 = vadd.f32 %v114, %v162
    %v164 = vpop.f32.mrf.mxu0
    %v165 = vpop.f32.mrf.mxu0
    %v166 = vpop.f32.mrf.mxu0
    %167 = vdwg.mxu0
    %s168 = scalar_lea.vmem %s2, 16
    %v169 = vld [vmem:[%s168] sm:$0xf]
    %v170 = vld [vmem:[%s168 + $0x4] sm:$0xf]
    %v171 = vrot.slane %v61, 1
    %v174 = vunpack.c.l.b16 %v169
    %v175 = vunpack.c.l.b16 %v170
    %v176 = vpack.c.b16 %v175, %v174
    %v179 = vsel %vm75, %v171, 0
    %181 = vmatprep.subr.bf16.mxu0 0
    %182 = vmatpush1.bf16.msra.mxu0 0
    %183 = vmatprep.subr.bf16.mxu0 0
    %184 = vmatpush1.bf16.msra.mxu0 0
    %185 = vmatprep.subr.bf16.mxu0 0
    %186 = vmatpush1.bf16.msra.mxu0 0
    %187 = vmatprep.subr.bf16.mxu0 0
    %188 = vmatpush1.bf16.msra.mxu0 0
    %189 = vmatprep.subr.bf16.mxu0 0
    %190 = vmatpush1.bf16.msra.mxu0 0
    %191 = vmatprep.subr.bf16.mxu0 0
    %192 = vmatpush1.bf16.msra.mxu0 0
    %193 = vmatprep.subr.bf16.mxu0 0
    %194 = vmatpush1.bf16.msra.mxu0 0
    %195 = vmatprep.subr.bf16.mxu0 0
    %196 = vmatpush1.bf16.msra.mxu0 %v176
    %197 = vmatprep.subr.bf16.mxu0 0
    %198 = vmatpush2.bf16.msra.mxu0 0
    %199 = vmatprep.subr.bf16.mxu0 0
    %200 = vmatpush2.bf16.msra.mxu0 0
    %201 = vmatprep.subr.bf16.mxu0 0
    %202 = vmatpush2.bf16.msra.mxu0 0
    %203 = vmatprep.subr.bf16.mxu0 0
    %204 = vmatpush2.bf16.msra.mxu0 0
    %205 = vmatprep.subr.bf16.mxu0 0
    %206 = vmatpush2.bf16.msra.mxu0 0
    %207 = vmatprep.subr.bf16.mxu0 0
    %208 = vmatpush2.bf16.msra.mxu0 0
    %209 = vmatprep.subr.bf16.mxu0 0
    %210 = vmatpush2.bf16.msra.mxu0 0
    %211 = vmatprep.subr.bf16.mxu0 0
    %212 = vmatpush2.bf16.msra.mxu0 0
    %213 = vmatprep.mubr.bf16.mxu0 0
    %214 = vmatmul.mubr.bf16.gmra.mxu0 %v179
    %v215 = vpop.f32.mrf.mxu0
    %v216 = vadd.f32 0.0, %v215
    %v217 = vpop.f32.mrf.mxu0
    %v218 = vpop.f32.mrf.mxu0
    %v219 = vpop.f32.mrf.mxu0
    %220 = vdwg.mxu0
    %v221 = vadd.f32 %v163, %v216
    %s222 = scalar_lea.vmem %s0, 8
    %v223 = vld [vmem:[%s222] sm:$0xf]
    %v224 = vld [vmem:[%s222 + $0x4] sm:$0x1]
    %s225 = scalar_lea.vmem %s2, 24
    %v226 = vld [vmem:[%s225] sm:$0xf]
    %v227 = vld [vmem:[%s225 + $0x4] sm:$0xf]
    %v230 = vunpack.c.l.b16 %v226
    %v231 = vunpack.c.l.b16 %v227
    %v232 = vpack.c.b16 %v231, %v230
    %v235 = vsel %vm75, %v223, 0
    %237 = vmatprep.subr.bf16.mxu0 0
    %238 = vmatpush1.bf16.msra.mxu0 0
    %239 = vmatprep.subr.bf16.mxu0 0
    %240 = vmatpush1.bf16.msra.mxu0 0
    %241 = vmatprep.subr.bf16.mxu0 0
    %242 = vmatpush1.bf16.msra.mxu0 0
    %243 = vmatprep.subr.bf16.mxu0 0
    %244 = vmatpush1.bf16.msra.mxu0 0
    %245 = vmatprep.subr.bf16.mxu0 0
    %246 = vmatpush1.bf16.msra.mxu0 0
    %247 = vmatprep.subr.bf16.mxu0 0
    %248 = vmatpush1.bf16.msra.mxu0 0
    %249 = vmatprep.subr.bf16.mxu0 0
    %250 = vmatpush1.bf16.msra.mxu0 0
    %251 = vmatprep.subr.bf16.mxu0 0
    %252 = vmatpush1.bf16.msra.mxu0 %v232
    %253 = vmatprep.subr.bf16.mxu0 0
    %254 = vmatpush2.bf16.msra.mxu0 0
    %255 = vmatprep.subr.bf16.mxu0 0
    %256 = vmatpush2.bf16.msra.mxu0 0
    %257 = vmatprep.subr.bf16.mxu0 0
    %258 = vmatpush2.bf16.msra.mxu0 0
    %259 = vmatprep.subr.bf16.mxu0 0
    %260 = vmatpush2.bf16.msra.mxu0 0
    %261 = vmatprep.subr.bf16.mxu0 0
    %262 = vmatpush2.bf16.msra.mxu0 0
    %263 = vmatprep.subr.bf16.mxu0 0
    %264 = vmatpush2.bf16.msra.mxu0 0
    %265 = vmatprep.subr.bf16.mxu0 0
    %266 = vmatpush2.bf16.msra.mxu0 0
    %267 = vmatprep.subr.bf16.mxu0 0
    %268 = vmatpush2.bf16.msra.mxu0 0
    %269 = vmatprep.mubr.bf16.mxu0 0
    %270 = vmatmul.mubr.bf16.gmra.mxu0 %v235
    %v271 = vpop.f32.mrf.mxu0
    %v272 = vadd.f32 0.0, %v271
    %v273 = vpop.f32.mrf.mxu0
    %v274 = vpop.f32.mrf.mxu0
    %v275 = vpop.f32.mrf.mxu0
    %276 = vdwg.mxu0
    %v277 = vadd.f32 %v221, %v272
    %s278 = scalar_lea.vmem %s2, 32
    %v279 = vld [vmem:[%s278] sm:$0xf]
    %v280 = vld [vmem:[%s278 + $0x4] sm:$0xf]
    %v283 = vunpack.c.l.b16 %v223
    %v284 = vunpack.c.l.b16 %v224
    %v285 = vpack.c.b16 %v284, %v283
    %v287 = vshrl.u32 %v285, 16
    %v289 = vshll.u32 %v285, 16
    %v291 = vrot.slane %v289, 1
    %v292 = vor.u32 %v287, %v291
    %v295 = vunpack.c.l.b16 %v279
    %v296 = vunpack.c.l.b16 %v280
    %v297 = vpack.c.b16 %v296, %v295
    %v300 = vsel %vm75, %v292, 0
    %302 = vmatprep.subr.bf16.mxu0 0
    %303 = vmatpush1.bf16.msra.mxu0 0
    %304 = vmatprep.subr.bf16.mxu0 0
    %305 = vmatpush1.bf16.msra.mxu0 0
    %306 = vmatprep.subr.bf16.mxu0 0
    %307 = vmatpush1.bf16.msra.mxu0 0
    %308 = vmatprep.subr.bf16.mxu0 0
    %309 = vmatpush1.bf16.msra.mxu0 0
    %310 = vmatprep.subr.bf16.mxu0 0
    %311 = vmatpush1.bf16.msra.mxu0 0
    %312 = vmatprep.subr.bf16.mxu0 0
    %313 = vmatpush1.bf16.msra.mxu0 0
    %314 = vmatprep.subr.bf16.mxu0 0
    %315 = vmatpush1.bf16.msra.mxu0 0
    %316 = vmatprep.subr.bf16.mxu0 0
    %317 = vmatpush1.bf16.msra.mxu0 %v297
    %318 = vmatprep.subr.bf16.mxu0 0
    %319 = vmatpush2.bf16.msra.mxu0 0
    %320 = vmatprep.subr.bf16.mxu0 0
    %321 = vmatpush2.bf16.msra.mxu0 0
    %322 = vmatprep.subr.bf16.mxu0 0
    %323 = vmatpush2.bf16.msra.mxu0 0
    %324 = vmatprep.subr.bf16.mxu0 0
    %325 = vmatpush2.bf16.msra.mxu0 0
    %326 = vmatprep.subr.bf16.mxu0 0
    %327 = vmatpush2.bf16.msra.mxu0 0
    %328 = vmatprep.subr.bf16.mxu0 0
    %329 = vmatpush2.bf16.msra.mxu0 0
    %330 = vmatprep.subr.bf16.mxu0 0
    %331 = vmatpush2.bf16.msra.mxu0 0
    %332 = vmatprep.subr.bf16.mxu0 0
    %333 = vmatpush2.bf16.msra.mxu0 0
    %334 = vmatprep.mubr.bf16.mxu0 0
    %335 = vmatmul.mubr.bf16.gmra.mxu0 %v300
    %v336 = vpop.f32.mrf.mxu0
    %v337 = vadd.f32 0.0, %v336
    %v338 = vpop.f32.mrf.mxu0
    %v339 = vpop.f32.mrf.mxu0
    %v340 = vpop.f32.mrf.mxu0
    %341 = vdwg.mxu0
    %v342 = vadd.f32 %v277, %v337
    %s343 = scalar_lea.vmem %s2, 40
    %v344 = vld [vmem:[%s343] sm:$0xf]
    %v345 = vld [vmem:[%s343 + $0x4] sm:$0xf]
    %v346 = vrot.slane %v285, 1
    %v349 = vunpack.c.l.b16 %v344
    %v350 = vunpack.c.l.b16 %v345
    %v351 = vpack.c.b16 %v350, %v349
    %v354 = vsel %vm75, %v346, 0
    %356 = vmatprep.subr.bf16.mxu0 0
    %357 = vmatpush1.bf16.msra.mxu0 0
    %358 = vmatprep.subr.bf16.mxu0 0
    %359 = vmatpush1.bf16.msra.mxu0 0
    %360 = vmatprep.subr.bf16.mxu0 0
    %361 = vmatpush1.bf16.msra.mxu0 0
    %362 = vmatprep.subr.bf16.mxu0 0
    %363 = vmatpush1.bf16.msra.mxu0 0
    %364 = vmatprep.subr.bf16.mxu0 0
    %365 = vmatpush1.bf16.msra.mxu0 0
    %366 = vmatprep.subr.bf16.mxu0 0
    %367 = vmatpush1.bf16.msra.mxu0 0
    %368 = vmatprep.subr.bf16.mxu0 0
    %369 = vmatpush1.bf16.msra.mxu0 0
    %370 = vmatprep.subr.bf16.mxu0 0
    %371 = vmatpush1.bf16.msra.mxu0 %v351
    %372 = vmatprep.subr.bf16.mxu0 0
    %373 = vmatpush2.bf16.msra.mxu0 0
    %374 = vmatprep.subr.bf16.mxu0 0
    %375 = vmatpush2.bf16.msra.mxu0 0
    %376 = vmatprep.subr.bf16.mxu0 0
    %377 = vmatpush2.bf16.msra.mxu0 0
    %378 = vmatprep.subr.bf16.mxu0 0
    %379 = vmatpush2.bf16.msra.mxu0 0
    %380 = vmatprep.subr.bf16.mxu0 0
    %381 = vmatpush2.bf16.msra.mxu0 0
    %382 = vmatprep.subr.bf16.mxu0 0
    %383 = vmatpush2.bf16.msra.mxu0 0
    %384 = vmatprep.subr.bf16.mxu0 0
    %385 = vmatpush2.bf16.msra.mxu0 0
    %386 = vmatprep.subr.bf16.mxu0 0
    %387 = vmatpush2.bf16.msra.mxu0 0
    %388 = vmatprep.mubr.bf16.mxu0 0
    %389 = vmatmul.mubr.bf16.gmra.mxu0 %v354
    %v390 = vpop.f32.mrf.mxu0
    %v391 = vadd.f32 0.0, %v390
    %v392 = vpop.f32.mrf.mxu0
    %v393 = vpop.f32.mrf.mxu0
    %v394 = vpop.f32.mrf.mxu0
    %395 = vdwg.mxu0
    %v396 = vadd.f32 %v342, %v391
    %s397 = scalar_lea.vmem %s0, 16
    %v398 = vld [vmem:[%s397] sm:$0xf]
    %v399 = vld [vmem:[%s397 + $0x4] sm:$0x1]
    %s400 = scalar_lea.vmem %s2, 48
    %v401 = vld [vmem:[%s400] sm:$0xf]
    %v402 = vld [vmem:[%s400 + $0x4] sm:$0xf]
    %v405 = vunpack.c.l.b16 %v401
    %v406 = vunpack.c.l.b16 %v402
    %v407 = vpack.c.b16 %v406, %v405
    %v410 = vsel %vm75, %v398, 0
    %412 = vmatprep.subr.bf16.mxu0 0
    %413 = vmatpush1.bf16.msra.mxu0 0
    %414 = vmatprep.subr.bf16.mxu0 0
    %415 = vmatpush1.bf16.msra.mxu0 0
    %416 = vmatprep.subr.bf16.mxu0 0
    %417 = vmatpush1.bf16.msra.mxu0 0
    %418 = vmatprep.subr.bf16.mxu0 0
    %419 = vmatpush1.bf16.msra.mxu0 0
    %420 = vmatprep.subr.bf16.mxu0 0
    %421 = vmatpush1.bf16.msra.mxu0 0
    %422 = vmatprep.subr.bf16.mxu0 0
    %423 = vmatpush1.bf16.msra.mxu0 0
    %424 = vmatprep.subr.bf16.mxu0 0
    %425 = vmatpush1.bf16.msra.mxu0 0
    %426 = vmatprep.subr.bf16.mxu0 0
    %427 = vmatpush1.bf16.msra.mxu0 %v407
    %428 = vmatprep.subr.bf16.mxu0 0
    %429 = vmatpush2.bf16.msra.mxu0 0
    %430 = vmatprep.subr.bf16.mxu0 0
    %431 = vmatpush2.bf16.msra.mxu0 0
    %432 = vmatprep.subr.bf16.mxu0 0
    %433 = vmatpush2.bf16.msra.mxu0 0
    %434 = vmatprep.subr.bf16.mxu0 0
    %435 = vmatpush2.bf16.msra.mxu0 0
    %436 = vmatprep.subr.bf16.mxu0 0
    %437 = vmatpush2.bf16.msra.mxu0 0
    %438 = vmatprep.subr.bf16.mxu0 0
    %439 = vmatpush2.bf16.msra.mxu0 0
    %440 = vmatprep.subr.bf16.mxu0 0
    %441 = vmatpush2.bf16.msra.mxu0 0
    %442 = vmatprep.subr.bf16.mxu0 0
    %443 = vmatpush2.bf16.msra.mxu0 0
    %444 = vmatprep.mubr.bf16.mxu0 0
    %445 = vmatmul.mubr.bf16.gmra.mxu0 %v410
    %v446 = vpop.f32.mrf.mxu0
    %v447 = vadd.f32 0.0, %v446
    %v448 = vpop.f32.mrf.mxu0
    %v449 = vpop.f32.mrf.mxu0
    %v450 = vpop.f32.mrf.mxu0
    %451 = vdwg.mxu0
    %v452 = vadd.f32 %v396, %v447
    %s453 = scalar_lea.vmem %s2, 56
    %v454 = vld [vmem:[%s453] sm:$0xf]
    %v455 = vld [vmem:[%s453 + $0x4] sm:$0xf]
    %v458 = vunpack.c.l.b16 %v398
    %v459 = vunpack.c.l.b16 %v399
    %v460 = vpack.c.b16 %v459, %v458
    %v462 = vshrl.u32 %v460, 16
    %v464 = vshll.u32 %v460, 16
    %v466 = vrot.slane %v464, 1
    %v467 = vor.u32 %v462, %v466
    %v470 = vunpack.c.l.b16 %v454
    %v471 = vunpack.c.l.b16 %v455
    %v472 = vpack.c.b16 %v471, %v470
    %v475 = vsel %vm75, %v467, 0
    %477 = vmatprep.subr.bf16.mxu0 0
    %478 = vmatpush1.bf16.msra.mxu0 0
    %479 = vmatprep.subr.bf16.mxu0 0
    %480 = vmatpush1.bf16.msra.mxu0 0
    %481 = vmatprep.subr.bf16.mxu0 0
    %482 = vmatpush1.bf16.msra.mxu0 0
    %483 = vmatprep.subr.bf16.mxu0 0
    %484 = vmatpush1.bf16.msra.mxu0 0
    %485 = vmatprep.subr.bf16.mxu0 0
    %486 = vmatpush1.bf16.msra.mxu0 0
    %487 = vmatprep.subr.bf16.mxu0 0
    %488 = vmatpush1.bf16.msra.mxu0 0
    %489 = vmatprep.subr.bf16.mxu0 0
    %490 = vmatpush1.bf16.msra.mxu0 0
    %491 = vmatprep.subr.bf16.mxu0 0
    %492 = vmatpush1.bf16.msra.mxu0 %v472
    %493 = vmatprep.subr.bf16.mxu0 0
    %494 = vmatpush2.bf16.msra.mxu0 0
    %495 = vmatprep.subr.bf16.mxu0 0
    %496 = vmatpush2.bf16.msra.mxu0 0
    %497 = vmatprep.subr.bf16.mxu0 0
    %498 = vmatpush2.bf16.msra.mxu0 0
    %499 = vmatprep.subr.bf16.mxu0 0
    %500 = vmatpush2.bf16.msra.mxu0 0
    %501 = vmatprep.subr.bf16.mxu0 0
    %502 = vmatpush2.bf16.msra.mxu0 0
    %503 = vmatprep.subr.bf16.mxu0 0
    %504 = vmatpush2.bf16.msra.mxu0 0
    %505 = vmatprep.subr.bf16.mxu0 0
    %506 = vmatpush2.bf16.msra.mxu0 0
    %507 = vmatprep.subr.bf16.mxu0 0
    %508 = vmatpush2.bf16.msra.mxu0 0
    %509 = vmatprep.mubr.bf16.mxu0 0
    %510 = vmatmul.mubr.bf16.gmra.mxu0 %v475
    %v511 = vpop.f32.mrf.mxu0
    %v512 = vadd.f32 0.0, %v511
    %v513 = vpop.f32.mrf.mxu0
    %v514 = vpop.f32.mrf.mxu0
    %v515 = vpop.f32.mrf.mxu0
    %516 = vdwg.mxu0
    %v517 = vadd.f32 %v452, %v512
    %s518 = scalar_lea.vmem %s2, 64
    %v519 = vld [vmem:[%s518] sm:$0xf]
    %v520 = vld [vmem:[%s518 + $0x4] sm:$0xf]
    %v521 = vrot.slane %v460, 1
    %v524 = vunpack.c.l.b16 %v519
    %v525 = vunpack.c.l.b16 %v520
    %v526 = vpack.c.b16 %v525, %v524
    %v529 = vsel %vm75, %v521, 0
    %531 = vmatprep.subr.bf16.mxu0 0
    %532 = vmatpush1.bf16.msra.mxu0 0
    %533 = vmatprep.subr.bf16.mxu0 0
    %534 = vmatpush1.bf16.msra.mxu0 0
    %535 = vmatprep.subr.bf16.mxu0 0
    %536 = vmatpush1.bf16.msra.mxu0 0
    %537 = vmatprep.subr.bf16.mxu0 0
    %538 = vmatpush1.bf16.msra.mxu0 0
    %539 = vmatprep.subr.bf16.mxu0 0
    %540 = vmatpush1.bf16.msra.mxu0 0
    %541 = vmatprep.subr.bf16.mxu0 0
    %542 = vmatpush1.bf16.msra.mxu0 0
    %543 = vmatprep.subr.bf16.mxu0 0
    %544 = vmatpush1.bf16.msra.mxu0 0
    %545 = vmatprep.subr.bf16.mxu0 0
    %546 = vmatpush1.bf16.msra.mxu0 %v526
    %547 = vmatprep.subr.bf16.mxu0 0
    %548 = vmatpush2.bf16.msra.mxu0 0
    %549 = vmatprep.subr.bf16.mxu0 0
    %550 = vmatpush2.bf16.msra.mxu0 0
    %551 = vmatprep.subr.bf16.mxu0 0
    %552 = vmatpush2.bf16.msra.mxu0 0
    %553 = vmatprep.subr.bf16.mxu0 0
    %554 = vmatpush2.bf16.msra.mxu0 0
    %555 = vmatprep.subr.bf16.mxu0 0
    %556 = vmatpush2.bf16.msra.mxu0 0
    %557 = vmatprep.subr.bf16.mxu0 0
    %558 = vmatpush2.bf16.msra.mxu0 0
    %559 = vmatprep.subr.bf16.mxu0 0
    %560 = vmatpush2.bf16.msra.mxu0 0
    %561 = vmatprep.subr.bf16.mxu0 0
    %562 = vmatpush2.bf16.msra.mxu0 0
    %563 = vmatprep.mubr.bf16.mxu0 0
    %564 = vmatmul.mubr.bf16.gmra.mxu0 %v529
    %v565 = vpop.f32.mrf.mxu0
    %v566 = vadd.f32 0.0, %v565
    %v567 = vpop.f32.mrf.mxu0
    %v568 = vpop.f32.mrf.mxu0
    %v569 = vpop.f32.mrf.mxu0
    %570 = vdwg.mxu0
    %v571 = vadd.f32 %v517, %v566
    %vm572 = vcmask 261120
    %573 = vst.msk [vmem:[#allocation2] sm:$0xff] %vm572, %v571
    %v574 = vsel %vm572, %v571, 0.0
    %v575 = vrot.slane %v574, 4
    %v576 = vadd.f32 %v574, %v575
    %v577 = vrot.slane %v576, 2
    %v578 = vadd.f32 %v576, %v577
    %v579 = vrot.slane %v578, 1
    %v580 = vadd.f32 %v578, %v579
    %v581 = vadd.f32 %v580, 0.0
    %v582 = vmul.f32 %v571, %v571
    %v583 = vsel %vm572, %v582, 0.0
    %v584 = vrot.slane %v583, 4
    %v585 = vadd.f32 %v583, %v584
    %v586 = vrot.slane %v585, 2
    %v587 = vadd.f32 %v585, %v586
    %v588 = vrot.slane %v587, 1
    %v589 = vadd.f32 %v587, %v588
    %v590 = vadd.f32 %v589, 0.0
    %v591 = vld [vmem:[%s222] sm:$0xf]
    %v592 = vld [vmem:[%s222 + $0x4] sm:$0x1]
    %v593 = vld [vmem:[%s2] sm:$0xf]
    %v594 = vld [vmem:[%s2 + $0x4] sm:$0xf]
    %v595 = vld [vmem:[%s54] sm:$0xf]
    %v596 = vld [vmem:[%s54 + $0x4] sm:$0xf]
    %v599 = vunpack.c.l.b16 %v591
    %v600 = vunpack.c.l.b16 %v592
    %v601 = vpack.c.b16 %v600, %v599
    %v603 = vshrl.u32 %v601, 16
    %v605 = vshll.u32 %v601, 16
    %v607 = vrot.slane %v605, 1
    %v608 = vor.u32 %v603, %v607
    %v611 = vunpack.c.l.b16 %v595
    %v612 = vunpack.c.l.b16 %v596
    %v613 = vpack.c.b16 %v612, %v611
    %v616 = vsel %vm75, %v608, 0
    %618 = vmatprep.subr.bf16.mxu0 0
    %619 = vmatpush1.bf16.msra.mxu0 0
    %620 = vmatprep.subr.bf16.mxu0 0
    %621 = vmatpush1.bf16.msra.mxu0 0
    %622 = vmatprep.subr.bf16.mxu0 0
    %623 = vmatpush1.bf16.msra.mxu0 0
    %624 = vmatprep.subr.bf16.mxu0 0
    %625 = vmatpush1.bf16.msra.mxu0 0
    %626 = vmatprep.subr.bf16.mxu0 0
    %627 = vmatpush1.bf16.msra.mxu0 0
    %628 = vmatprep.subr.bf16.mxu0 0
    %629 = vmatpush1.bf16.msra.mxu0 0
    %630 = vmatprep.subr.bf16.mxu0 0
    %631 = vmatpush1.bf16.msra.mxu0 0
    %632 = vmatprep.subr.bf16.mxu0 0
    %633 = vmatpush1.bf16.msra.mxu0 %v613
    %634 = vmatprep.subr.bf16.mxu0 0
    %635 = vmatpush2.bf16.msra.mxu0 0
    %636 = vmatprep.subr.bf16.mxu0 0
    %637 = vmatpush2.bf16.msra.mxu0 0
    %638 = vmatprep.subr.bf16.mxu0 0
    %639 = vmatpush2.bf16.msra.mxu0 0
    %640 = vmatprep.subr.bf16.mxu0 0
    %641 = vmatpush2.bf16.msra.mxu0 0
    %642 = vmatprep.subr.bf16.mxu0 0
    %643 = vmatpush2.bf16.msra.mxu0 0
    %644 = vmatprep.subr.bf16.mxu0 0
    %645 = vmatpush2.bf16.msra.mxu0 0
    %646 = vmatprep.subr.bf16.mxu0 0
    %647 = vmatpush2.bf16.msra.mxu0 0
    %648 = vmatprep.subr.bf16.mxu0 0
    %649 = vmatpush2.bf16.msra.mxu0 0
    %650 = vmatprep.mubr.bf16.mxu0 0
    %651 = vmatmul.mubr.bf16.gmra.mxu0 %v616
    %v652 = vpop.f32.mrf.mxu0
    %v653 = vadd.f32 0.0, %v652
    %v654 = vpop.f32.mrf.mxu0
    %v655 = vpop.f32.mrf.mxu0
    %v656 = vpop.f32.mrf.mxu0
    %657 = vdwg.mxu0
    %v660 = vunpack.c.l.b16 %v593
    %v661 = vunpack.c.l.b16 %v594
    %v662 = vpack.c.b16 %v661, %v660
    %v665 = vsel %vm75, %v591, 0
    %667 = vmatprep.subr.bf16.mxu0 0
    %668 = vmatpush1.bf16.msra.mxu0 0
    %669 = vmatprep.subr.bf16.mxu0 0
    %670 = vmatpush1.bf16.msra.mxu0 0
    %671 = vmatprep.subr.bf16.mxu0 0
    %672 = vmatpush1.bf16.msra.mxu0 0
    %673 = vmatprep.subr.bf16.mxu0 0
    %674 = vmatpush1.bf16.msra.mxu0 0
    %675 = vmatprep.subr.bf16.mxu0 0
    %676 = vmatpush1.bf16.msra.mxu0 0
    %677 = vmatprep.subr.bf16.mxu0 0
    %678 = vmatpush1.bf16.msra.mxu0 0
    %679 = vmatprep.subr.bf16.mxu0 0
    %680 = vmatpush1.bf16.msra.mxu0 0
    %681 = vmatprep.subr.bf16.mxu0 0
    %682 = vmatpush1.bf16.msra.mxu0 %v662
    %683 = vmatprep.subr.bf16.mxu0 0
    %684 = vmatpush2.bf16.msra.mxu0 0
    %685 = vmatprep.subr.bf16.mxu0 0
    %686 = vmatpush2.bf16.msra.mxu0 0
    %687 = vmatprep.subr.bf16.mxu0 0
    %688 = vmatpush2.bf16.msra.mxu0 0
    %689 = vmatprep.subr.bf16.mxu0 0
    %690 = vmatpush2.bf16.msra.mxu0 0
    %691 = vmatprep.subr.bf16.mxu0 0
    %692 = vmatpush2.bf16.msra.mxu0 0
    %693 = vmatprep.subr.bf16.mxu0 0
    %694 = vmatpush2.bf16.msra.mxu0 0
    %695 = vmatprep.subr.bf16.mxu0 0
    %696 = vmatpush2.bf16.msra.mxu0 0
    %697 = vmatprep.subr.bf16.mxu0 0
    %698 = vmatpush2.bf16.msra.mxu0 0
    %699 = vmatprep.mubr.bf16.mxu0 0
    %700 = vmatmul.mubr.bf16.gmra.mxu0 %v665
    %v701 = vpop.f32.mrf.mxu0
    %v702 = vadd.f32 %v653, %v701
    %v703 = vpop.f32.mrf.mxu0
    %v704 = vpop.f32.mrf.mxu0
    %v705 = vpop.f32.mrf.mxu0
    %706 = vdwg.mxu0
    %v707 = vld [vmem:[%s168] sm:$0xf]
    %v708 = vld [vmem:[%s168 + $0x4] sm:$0xf]
    %v709 = vrot.slane %v601, 1
    %v712 = vunpack.c.l.b16 %v707
    %v713 = vunpack.c.l.b16 %v708
    %v714 = vpack.c.b16 %v713, %v712
    %v717 = vsel %vm75, %v709, 0
    %719 = vmatprep.subr.bf16.mxu0 0
    %720 = vmatpush1.bf16.msra.mxu0 0
    %721 = vmatprep.subr.bf16.mxu0 0
    %722 = vmatpush1.bf16.msra.mxu0 0
    %723 = vmatprep.subr.bf16.mxu0 0
    %724 = vmatpush1.bf16.msra.mxu0 0
    %725 = vmatprep.subr.bf16.mxu0 0
    %726 = vmatpush1.bf16.msra.mxu0 0
    %727 = vmatprep.subr.bf16.mxu0 0
    %728 = vmatpush1.bf16.msra.mxu0 0
    %729 = vmatprep.subr.bf16.mxu0 0
    %730 = vmatpush1.bf16.msra.mxu0 0
    %731 = vmatprep.subr.bf16.mxu0 0
    %732 = vmatpush1.bf16.msra.mxu0 0
    %733 = vmatprep.subr.bf16.mxu0 0
    %734 = vmatpush1.bf16.msra.mxu0 %v714
    %735 = vmatprep.subr.bf16.mxu0 0
    %736 = vmatpush2.bf16.msra.mxu0 0
    %737 = vmatprep.subr.bf16.mxu0 0
    %738 = vmatpush2.bf16.msra.mxu0 0
    %739 = vmatprep.subr.bf16.mxu0 0
    %740 = vmatpush2.bf16.msra.mxu0 0
    %741 = vmatprep.subr.bf16.mxu0 0
    %742 = vmatpush2.bf16.msra.mxu0 0
    %743 = vmatprep.subr.bf16.mxu0 0
    %744 = vmatpush2.bf16.msra.mxu0 0
    %745 = vmatprep.subr.bf16.mxu0 0
    %746 = vmatpush2.bf16.msra.mxu0 0
    %747 = vmatprep.subr.bf16.mxu0 0
    %748 = vmatpush2.bf16.msra.mxu0 0
    %749 = vmatprep.subr.bf16.mxu0 0
    %750 = vmatpush2.bf16.msra.mxu0 0
    %751 = vmatprep.mubr.bf16.mxu0 0
    %752 = vmatmul.mubr.bf16.gmra.mxu0 %v717
    %v753 = vpop.f32.mrf.mxu0
    %v754 = vadd.f32 0.0, %v753
    %v755 = vpop.f32.mrf.mxu0
    %v756 = vpop.f32.mrf.mxu0
    %v757 = vpop.f32.mrf.mxu0
    %758 = vdwg.mxu0
    %v759 = vadd.f32 %v702, %v754
    %v760 = vld [vmem:[%s397] sm:$0xf]
    %v761 = vld [vmem:[%s397 + $0x4] sm:$0x1]
    %v762 = vld [vmem:[%s225] sm:$0xf]
    %v763 = vld [vmem:[%s225 + $0x4] sm:$0xf]
    %v766 = vunpack.c.l.b16 %v762
    %v767 = vunpack.c.l.b16 %v763
    %v768 = vpack.c.b16 %v767, %v766
    %v771 = vsel %vm75, %v760, 0
    %773 = vmatprep.subr.bf16.mxu0 0
    %774 = vmatpush1.bf16.msra.mxu0 0
    %775 = vmatprep.subr.bf16.mxu0 0
    %776 = vmatpush1.bf16.msra.mxu0 0
    %777 = vmatprep.subr.bf16.mxu0 0
    %778 = vmatpush1.bf16.msra.mxu0 0
    %779 = vmatprep.subr.bf16.mxu0 0
    %780 = vmatpush1.bf16.msra.mxu0 0
    %781 = vmatprep.subr.bf16.mxu0 0
    %782 = vmatpush1.bf16.msra.mxu0 0
    %783 = vmatprep.subr.bf16.mxu0 0
    %784 = vmatpush1.bf16.msra.mxu0 0
    %785 = vmatprep.subr.bf16.mxu0 0
    %786 = vmatpush1.bf16.msra.mxu0 0
    %787 = vmatprep.subr.bf16.mxu0 0
    %788 = vmatpush1.bf16.msra.mxu0 %v768
    %789 = vmatprep.subr.bf16.mxu0 0
    %790 = vmatpush2.bf16.msra.mxu0 0
    %791 = vmatprep.subr.bf16.mxu0 0
    %792 = vmatpush2.bf16.msra.mxu0 0
    %793 = vmatprep.subr.bf16.mxu0 0
    %794 = vmatpush2.bf16.msra.mxu0 0
    %795 = vmatprep.subr.bf16.mxu0 0
    %796 = vmatpush2.bf16.msra.mxu0 0
    %797 = vmatprep.subr.bf16.mxu0 0
    %798 = vmatpush2.bf16.msra.mxu0 0
    %799 = vmatprep.subr.bf16.mxu0 0
    %800 = vmatpush2.bf16.msra.mxu0 0
    %801 = vmatprep.subr.bf16.mxu0 0
    %802 = vmatpush2.bf16.msra.mxu0 0
    %803 = vmatprep.subr.bf16.mxu0 0
    %804 = vmatpush2.bf16.msra.mxu0 0
    %805 = vmatprep.mubr.bf16.mxu0 0
    %806 = vmatmul.mubr.bf16.gmra.mxu0 %v771
    %v807 = vpop.f32.mrf.mxu0
    %v808 = vadd.f32 0.0, %v807
    %v809 = vpop.f32.mrf.mxu0
    %v810 = vpop.f32.mrf.mxu0
    %v811 = vpop.f32.mrf.mxu0
    %812 = vdwg.mxu0
    %v813 = vadd.f32 %v759, %v808
    %v814 = vld [vmem:[%s278] sm:$0xf]
    %v815 = vld [vmem:[%s278 + $0x4] sm:$0xf]
    %v818 = vunpack.c.l.b16 %v760
    %v819 = vunpack.c.l.b16 %v761
    %v820 = vpack.c.b16 %v819, %v818
    %v822 = vshrl.u32 %v820, 16
    %v824 = vshll.u32 %v820, 16
    %v826 = vrot.slane %v824, 1
    %v827 = vor.u32 %v822, %v826
    %v830 = vunpack.c.l.b16 %v814
    %v831 = vunpack.c.l.b16 %v815
    %v832 = vpack.c.b16 %v831, %v830
    %v835 = vsel %vm75, %v827, 0
    %837 = vmatprep.subr.bf16.mxu0 0
    %838 = vmatpush1.bf16.msra.mxu0 0
    %839 = vmatprep.subr.bf16.mxu0 0
    %840 = vmatpush1.bf16.msra.mxu0 0
    %841 = vmatprep.subr.bf16.mxu0 0
    %842 = vmatpush1.bf16.msra.mxu0 0
    %843 = vmatprep.subr.bf16.mxu0 0
    %844 = vmatpush1.bf16.msra.mxu0 0
    %845 = vmatprep.subr.bf16.mxu0 0
    %846 = vmatpush1.bf16.msra.mxu0 0
    %847 = vmatprep.subr.bf16.mxu0 0
    %848 = vmatpush1.bf16.msra.mxu0 0
    %849 = vmatprep.subr.bf16.mxu0 0
    %850 = vmatpush1.bf16.msra.mxu0 0
    %851 = vmatprep.subr.bf16.mxu0 0
    %852 = vmatpush1.bf16.msra.mxu0 %v832
    %853 = vmatprep.subr.bf16.mxu0 0
    %854 = vmatpush2.bf16.msra.mxu0 0
    %855 = vmatprep.subr.bf16.mxu0 0
    %856 = vmatpush2.bf16.msra.mxu0 0
    %857 = vmatprep.subr.bf16.mxu0 0
    %858 = vmatpush2.bf16.msra.mxu0 0
    %859 = vmatprep.subr.bf16.mxu0 0
    %860 = vmatpush2.bf16.msra.mxu0 0
    %861 = vmatprep.subr.bf16.mxu0 0
    %862 = vmatpush2.bf16.msra.mxu0 0
    %863 = vmatprep.subr.bf16.mxu0 0
    %864 = vmatpush2.bf16.msra.mxu0 0
    %865 = vmatprep.subr.bf16.mxu0 0
    %866 = vmatpush2.bf16.msra.mxu0 0
    %867 = vmatprep.subr.bf16.mxu0 0
    %868 = vmatpush2.bf16.msra.mxu0 0
    %869 = vmatprep.mubr.bf16.mxu0 0
    %870 = vmatmul.mubr.bf16.gmra.mxu0 %v835
    %v871 = vpop.f32.mrf.mxu0
    %v872 = vadd.f32 0.0, %v871
    %v873 = vpop.f32.mrf.mxu0
    %v874 = vpop.f32.mrf.mxu0
    %v875 = vpop.f32.mrf.mxu0
    %876 = vdwg.mxu0
    %v877 = vadd.f32 %v813, %v872
    %v878 = vld [vmem:[%s343] sm:$0xf]
    %v879 = vld [vmem:[%s343 + $0x4] sm:$0xf]
    %v880 = vrot.slane %v820, 1
    %v883 = vunpack.c.l.b16 %v878
    %v884 = vunpack.c.l.b16 %v879
    %v885 = vpack.c.b16 %v884, %v883
    %v888 = vsel %vm75, %v880, 0
    %890 = vmatprep.subr.bf16.mxu0 0
    %891 = vmatpush1.bf16.msra.mxu0 0
    %892 = vmatprep.subr.bf16.mxu0 0
    %893 = vmatpush1.bf16.msra.mxu0 0
    %894 = vmatprep.subr.bf16.mxu0 0
    %895 = vmatpush1.bf16.msra.mxu0 0
    %896 = vmatprep.subr.bf16.mxu0 0
    %897 = vmatpush1.bf16.msra.mxu0 0
    %898 = vmatprep.subr.bf16.mxu0 0
    %899 = vmatpush1.bf16.msra.mxu0 0
    %900 = vmatprep.subr.bf16.mxu0 0
    %901 = vmatpush1.bf16.msra.mxu0 0
    %902 = vmatprep.subr.bf16.mxu0 0
    %903 = vmatpush1.bf16.msra.mxu0 0
    %904 = vmatprep.subr.bf16.mxu0 0
    %905 = vmatpush1.bf16.msra.mxu0 %v885
    %906 = vmatprep.subr.bf16.mxu0 0
    %907 = vmatpush2.bf16.msra.mxu0 0
    %908 = vmatprep.subr.bf16.mxu0 0
    %909 = vmatpush2.bf16.msra.mxu0 0
    %910 = vmatprep.subr.bf16.mxu0 0
    %911 = vmatpush2.bf16.msra.mxu0 0
    %912 = vmatprep.subr.bf16.mxu0 0
    %913 = vmatpush2.bf16.msra.mxu0 0
    %914 = vmatprep.subr.bf16.mxu0 0
    %915 = vmatpush2.bf16.msra.mxu0 0
    %916 = vmatprep.subr.bf16.mxu0 0
    %917 = vmatpush2.bf16.msra.mxu0 0
    %918 = vmatprep.subr.bf16.mxu0 0
    %919 = vmatpush2.bf16.msra.mxu0 0
    %920 = vmatprep.subr.bf16.mxu0 0
    %921 = vmatpush2.bf16.msra.mxu0 0
    %922 = vmatprep.mubr.bf16.mxu0 0
    %923 = vmatmul.mubr.bf16.gmra.mxu0 %v888
    %v924 = vpop.f32.mrf.mxu0
    %v925 = vadd.f32 0.0, %v924
    %v926 = vpop.f32.mrf.mxu0
    %v927 = vpop.f32.mrf.mxu0
    %v928 = vpop.f32.mrf.mxu0
    %929 = vdwg.mxu0
    %v930 = vadd.f32 %v877, %v925
    %s931 = scalar_lea.vmem %s0, 24
    %v932 = vld [vmem:[%s931] sm:$0xf]
    %v933 = vld [vmem:[%s931 + $0x4] sm:$0x1]
    %v934 = vld [vmem:[%s400] sm:$0xf]
    %v935 = vld [vmem:[%s400 + $0x4] sm:$0xf]
    %v938 = vunpack.c.l.b16 %v934
    %v939 = vunpack.c.l.b16 %v935
    %v940 = vpack.c.b16 %v939, %v938
    %v943 = vsel %vm75, %v932, 0
    %945 = vmatprep.subr.bf16.mxu0 0
    %946 = vmatpush1.bf16.msra.mxu0 0
    %947 = vmatprep.subr.bf16.mxu0 0
    %948 = vmatpush1.bf16.msra.mxu0 0
    %949 = vmatprep.subr.bf16.mxu0 0
    %950 = vmatpush1.bf16.msra.mxu0 0
    %951 = vmatprep.subr.bf16.mxu0 0
    %952 = vmatpush1.bf16.msra.mxu0 0
    %953 = vmatprep.subr.bf16.mxu0 0
    %954 = vmatpush1.bf16.msra.mxu0 0
    %955 = vmatprep.subr.bf16.mxu0 0
    %956 = vmatpush1.bf16.msra.mxu0 0
    %957 = vmatprep.subr.bf16.mxu0 0
    %958 = vmatpush1.bf16.msra.mxu0 0
    %959 = vmatprep.subr.bf16.mxu0 0
    %960 = vmatpush1.bf16.msra.mxu0 %v940
    %961 = vmatprep.subr.bf16.mxu0 0
    %962 = vmatpush2.bf16.msra.mxu0 0
    %963 = vmatprep.subr.bf16.mxu0 0
    %964 = vmatpush2.bf16.msra.mxu0 0
    %965 = vmatprep.subr.bf16.mxu0 0
    %966 = vmatpush2.bf16.msra.mxu0 0
    %967 = vmatprep.subr.bf16.mxu0 0
    %968 = vmatpush2.bf16.msra.mxu0 0
    %969 = vmatprep.subr.bf16.mxu0 0
    %970 = vmatpush2.bf16.msra.mxu0 0
    %971 = vmatprep.subr.bf16.mxu0 0
    %972 = vmatpush2.bf16.msra.mxu0 0
    %973 = vmatprep.subr.bf16.mxu0 0
    %974 = vmatpush2.bf16.msra.mxu0 0
    %975 = vmatprep.subr.bf16.mxu0 0
    %976 = vmatpush2.bf16.msra.mxu0 0
    %977 = vmatprep.mubr.bf16.mxu0 0
    %978 = vmatmul.mubr.bf16.gmra.mxu0 %v943
    %v979 = vpop.f32.mrf.mxu0
    %v980 = vadd.f32 0.0, %v979
    %v981 = vpop.f32.mrf.mxu0
    %v982 = vpop.f32.mrf.mxu0
    %v983 = vpop.f32.mrf.mxu0
    %984 = vdwg.mxu0
    %v985 = vadd.f32 %v930, %v980
    %v986 = vld [vmem:[%s453] sm:$0xf]
    %v987 = vld [vmem:[%s453 + $0x4] sm:$0xf]
    %v990 = vunpack.c.l.b16 %v932
    %v991 = vunpack.c.l.b16 %v933
    %v992 = vpack.c.b16 %v991, %v990
    %v994 = vshrl.u32 %v992, 16
    %v996 = vshll.u32 %v992, 16
    %v998 = vrot.slane %v996, 1
    %v999 = vor.u32 %v994, %v998
    %v1002 = vunpack.c.l.b16 %v986
    %v1003 = vunpack.c.l.b16 %v987
    %v1004 = vpack.c.b16 %v1003, %v1002
    %v1007 = vsel %vm75, %v999, 0
    %1009 = vmatprep.subr.bf16.mxu0 0
    %1010 = vmatpush1.bf16.msra.mxu0 0
    %1011 = vmatprep.subr.bf16.mxu0 0
    %1012 = vmatpush1.bf16.msra.mxu0 0
    %1013 = vmatprep.subr.bf16.mxu0 0
    %1014 = vmatpush1.bf16.msra.mxu0 0
    %1015 = vmatprep.subr.bf16.mxu0 0
    %1016 = vmatpush1.bf16.msra.mxu0 0
    %1017 = vmatprep.subr.bf16.mxu0 0
    %1018 = vmatpush1.bf16.msra.mxu0 0
    %1019 = vmatprep.subr.bf16.mxu0 0
    %1020 = vmatpush1.bf16.msra.mxu0 0
    %1021 = vmatprep.subr.bf16.mxu0 0
    %1022 = vmatpush1.bf16.msra.mxu0 0
    %1023 = vmatprep.subr.bf16.mxu0 0
    %1024 = vmatpush1.bf16.msra.mxu0 %v1004
    %1025 = vmatprep.subr.bf16.mxu0 0
    %1026 = vmatpush2.bf16.msra.mxu0 0
    %1027 = vmatprep.subr.bf16.mxu0 0
    %1028 = vmatpush2.bf16.msra.mxu0 0
    %1029 = vmatprep.subr.bf16.mxu0 0
    %1030 = vmatpush2.bf16.msra.mxu0 0
    %1031 = vmatprep.subr.bf16.mxu0 0
    %1032 = vmatpush2.bf16.msra.mxu0 0
    %1033 = vmatprep.subr.bf16.mxu0 0
    %1034 = vmatpush2.bf16.msra.mxu0 0
    %1035 = vmatprep.subr.bf16.mxu0 0
    %1036 = vmatpush2.bf16.msra.mxu0 0
    %1037 = vmatprep.subr.bf16.mxu0 0
    %1038 = vmatpush2.bf16.msra.mxu0 0
    %1039 = vmatprep.subr.bf16.mxu0 0
    %1040 = vmatpush2.bf16.msra.mxu0 0
    %1041 = vmatprep.mubr.bf16.mxu0 0
    %1042 = vmatmul.mubr.bf16.gmra.mxu0 %v1007
    %v1043 = vpop.f32.mrf.mxu0
    %v1044 = vadd.f32 0.0, %v1043
    %v1045 = vpop.f32.mrf.mxu0
    %v1046 = vpop.f32.mrf.mxu0
    %v1047 = vpop.f32.mrf.mxu0
    %1048 = vdwg.mxu0
    %v1049 = vadd.f32 %v985, %v1044
    %v1050 = vld [vmem:[%s518] sm:$0xf]
    %v1051 = vld [vmem:[%s518 + $0x4] sm:$0xf]
    %v1052 = vrot.slane %v992, 1
    %v1055 = vunpack.c.l.b16 %v1050
    %v1056 = vunpack.c.l.b16 %v1051
    %v1057 = vpack.c.b16 %v1056, %v1055
    %v1060 = vsel %vm75, %v1052, 0
    %1062 = vmatprep.subr.bf16.mxu0 0
    %1063 = vmatpush1.bf16.msra.mxu0 0
    %1064 = vmatprep.subr.bf16.mxu0 0
    %1065 = vmatpush1.bf16.msra.mxu0 0
    %1066 = vmatprep.subr.bf16.mxu0 0
    %1067 = vmatpush1.bf16.msra.mxu0 0
    %1068 = vmatprep.subr.bf16.mxu0 0
    %1069 = vmatpush1.bf16.msra.mxu0 0
    %1070 = vmatprep.subr.bf16.mxu0 0
    %1071 = vmatpush1.bf16.msra.mxu0 0
    %1072 = vmatprep.subr.bf16.mxu0 0
    %1073 = vmatpush1.bf16.msra.mxu0 0
    %1074 = vmatprep.subr.bf16.mxu0 0
    %1075 = vmatpush1.bf16.msra.mxu0 0
    %1076 = vmatprep.subr.bf16.mxu0 0
    %1077 = vmatpush1.bf16.msra.mxu0 %v1057
    %1078 = vmatprep.subr.bf16.mxu0 0
    %1079 = vmatpush2.bf16.msra.mxu0 0
    %1080 = vmatprep.subr.bf16.mxu0 0
    %1081 = vmatpush2.bf16.msra.mxu0 0
    %1082 = vmatprep.subr.bf16.mxu0 0
    %1083 = vmatpush2.bf16.msra.mxu0 0
    %1084 = vmatprep.subr.bf16.mxu0 0
    %1085 = vmatpush2.bf16.msra.mxu0 0
    %1086 = vmatprep.subr.bf16.mxu0 0
    %1087 = vmatpush2.bf16.msra.mxu0 0
    %1088 = vmatprep.subr.bf16.mxu0 0
    %1089 = vmatpush2.bf16.msra.mxu0 0
    %1090 = vmatprep.subr.bf16.mxu0 0
    %1091 = vmatpush2.bf16.msra.mxu0 0
    %1092 = vmatprep.subr.bf16.mxu0 0
    %1093 = vmatpush2.bf16.msra.mxu0 0
    %1094 = vmatprep.mubr.bf16.mxu0 0
    %1095 = vmatmul.mubr.bf16.gmra.mxu0 %v1060
    %v1096 = vpop.f32.mrf.mxu0
    %v1097 = vadd.f32 0.0, %v1096
    %v1098 = vpop.f32.mrf.mxu0
    %v1099 = vpop.f32.mrf.mxu0
    %v1100 = vpop.f32.mrf.mxu0
    %1101 = vdwg.mxu0
    %v1102 = vadd.f32 %v1049, %v1097
    %s1103 = scalar_lea.vmem [#allocation2], 8
    %1104 = vst.msk [vmem:[%s1103] sm:$0xff] %vm572, %v1102
    %v1105 = vsel %vm572, %v1102, 0.0
    %v1106 = vrot.slane %v1105, 4
    %v1107 = vadd.f32 %v1105, %v1106
    %v1108 = vrot.slane %v1107, 2
    %v1109 = vadd.f32 %v1107, %v1108
    %v1110 = vrot.slane %v1109, 1
    %v1111 = vadd.f32 %v1109, %v1110
    %v1112 = vadd.f32 %v581, %v1111
    %v1113 = vmul.f32 %v1102, %v1102
    %v1114 = vsel %vm572, %v1113, 0.0
    %v1115 = vrot.slane %v1114, 4
    %v1116 = vadd.f32 %v1114, %v1115
    %v1117 = vrot.slane %v1116, 2
    %v1118 = vadd.f32 %v1116, %v1117
    %v1119 = vrot.slane %v1118, 1
    %v1120 = vadd.f32 %v1118, %v1119
    %v1121 = vadd.f32 %v590, %v1120
    %v1122 = vld [vmem:[%s397] sm:$0xf]
    %v1123 = vld [vmem:[%s397 + $0x4] sm:$0x1]
    %v1124 = vld [vmem:[%s2] sm:$0xf]
    %v1125 = vld [vmem:[%s2 + $0x4] sm:$0xf]
    %v1126 = vld [vmem:[%s54] sm:$0xf]
    %v1127 = vld [vmem:[%s54 + $0x4] sm:$0xf]
    %v1130 = vunpack.c.l.b16 %v1122
    %v1131 = vunpack.c.l.b16 %v1123
    %v1132 = vpack.c.b16 %v1131, %v1130
    %v1134 = vshrl.u32 %v1132, 16
    %v1136 = vshll.u32 %v1132, 16
    %v1138 = vrot.slane %v1136, 1
    %v1139 = vor.u32 %v1134, %v1138
    %v1142 = vunpack.c.l.b16 %v1126
    %v1143 = vunpack.c.l.b16 %v1127
    %v1144 = vpack.c.b16 %v1143, %v1142
    %v1147 = vsel %vm75, %v1139, 0
    %1149 = vmatprep.subr.bf16.mxu0 0
    %1150 = vmatpush1.bf16.msra.mxu0 0
    %1151 = vmatprep.subr.bf16.mxu0 0
    %1152 = vmatpush1.bf16.msra.mxu0 0
    %1153 = vmatprep.subr.bf16.mxu0 0
    %1154 = vmatpush1.bf16.msra.mxu0 0
    %1155 = vmatprep.subr.bf16.mxu0 0
    %1156 = vmatpush1.bf16.msra.mxu0 0
    %1157 = vmatprep.subr.bf16.mxu0 0
    %1158 = vmatpush1.bf16.msra.mxu0 0
    %1159 = vmatprep.subr.bf16.mxu0 0
    %1160 = vmatpush1.bf16.msra.mxu0 0
    %1161 = vmatprep.subr.bf16.mxu0 0
    %1162 = vmatpush1.bf16.msra.mxu0 0
    %1163 = vmatprep.subr.bf16.mxu0 0
    %1164 = vmatpush1.bf16.msra.mxu0 %v1144
    %1165 = vmatprep.subr.bf16.mxu0 0
    %1166 = vmatpush2.bf16.msra.mxu0 0
    %1167 = vmatprep.subr.bf16.mxu0 0
    %1168 = vmatpush2.bf16.msra.mxu0 0
    %1169 = vmatprep.subr.bf16.mxu0 0
    %1170 = vmatpush2.bf16.msra.mxu0 0
    %1171 = vmatprep.subr.bf16.mxu0 0
    %1172 = vmatpush2.bf16.msra.mxu0 0
    %1173 = vmatprep.subr.bf16.mxu0 0
    %1174 = vmatpush2.bf16.msra.mxu0 0
    %1175 = vmatprep.subr.bf16.mxu0 0
    %1176 = vmatpush2.bf16.msra.mxu0 0
    %1177 = vmatprep.subr.bf16.mxu0 0
    %1178 = vmatpush2.bf16.msra.mxu0 0
    %1179 = vmatprep.subr.bf16.mxu0 0
    %1180 = vmatpush2.bf16.msra.mxu0 0
    %1181 = vmatprep.mubr.bf16.mxu0 0
    %1182 = vmatmul.mubr.bf16.gmra.mxu0 %v1147
    %v1183 = vpop.f32.mrf.mxu0
    %v1184 = vadd.f32 0.0, %v1183
    %v1185 = vpop.f32.mrf.mxu0
    %v1186 = vpop.f32.mrf.mxu0
    %v1187 = vpop.f32.mrf.mxu0
    %1188 = vdwg.mxu0
    %v1191 = vunpack.c.l.b16 %v1124
    %v1192 = vunpack.c.l.b16 %v1125
    %v1193 = vpack.c.b16 %v1192, %v1191
    %v1196 = vsel %vm75, %v1122, 0
    %1198 = vmatprep.subr.bf16.mxu0 0
    %1199 = vmatpush1.bf16.msra.mxu0 0
    %1200 = vmatprep.subr.bf16.mxu0 0
    %1201 = vmatpush1.bf16.msra.mxu0 0
    %1202 = vmatprep.subr.bf16.mxu0 0
    %1203 = vmatpush1.bf16.msra.mxu0 0
    %1204 = vmatprep.subr.bf16.mxu0 0
    %1205 = vmatpush1.bf16.msra.mxu0 0
    %1206 = vmatprep.subr.bf16.mxu0 0
    %1207 = vmatpush1.bf16.msra.mxu0 0
    %1208 = vmatprep.subr.bf16.mxu0 0
    %1209 = vmatpush1.bf16.msra.mxu0 0
    %1210 = vmatprep.subr.bf16.mxu0 0
    %1211 = vmatpush1.bf16.msra.mxu0 0
    %1212 = vmatprep.subr.bf16.mxu0 0
    %1213 = vmatpush1.bf16.msra.mxu0 %v1193
    %1214 = vmatprep.subr.bf16.mxu0 0
    %1215 = vmatpush2.bf16.msra.mxu0 0
    %1216 = vmatprep.subr.bf16.mxu0 0
    %1217 = vmatpush2.bf16.msra.mxu0 0
    %1218 = vmatprep.subr.bf16.mxu0 0
    %1219 = vmatpush2.bf16.msra.mxu0 0
    %1220 = vmatprep.subr.bf16.mxu0 0
    %1221 = vmatpush2.bf16.msra.mxu0 0
    %1222 = vmatprep.subr.bf16.mxu0 0
    %1223 = vmatpush2.bf16.msra.mxu0 0
    %1224 = vmatprep.subr.bf16.mxu0 0
    %1225 = vmatpush2.bf16.msra.mxu0 0
    %1226 = vmatprep.subr.bf16.mxu0 0
    %1227 = vmatpush2.bf16.msra.mxu0 0
    %1228 = vmatprep.subr.bf16.mxu0 0
    %1229 = vmatpush2.bf16.msra.mxu0 0
    %1230 = vmatprep.mubr.bf16.mxu0 0
    %1231 = vmatmul.mubr.bf16.gmra.mxu0 %v1196
    %v1232 = vpop.f32.mrf.mxu0
    %v1233 = vadd.f32 %v1184, %v1232
    %v1234 = vpop.f32.mrf.mxu0
    %v1235 = vpop.f32.mrf.mxu0
    %v1236 = vpop.f32.mrf.mxu0
    %1237 = vdwg.mxu0
    %v1238 = vld [vmem:[%s168] sm:$0xf]
    %v1239 = vld [vmem:[%s168 + $0x4] sm:$0xf]
    %v1240 = vrot.slane %v1132, 1
    %v1243 = vunpack.c.l.b16 %v1238
    %v1244 = vunpack.c.l.b16 %v1239
    %v1245 = vpack.c.b16 %v1244, %v1243
    %v1248 = vsel %vm75, %v1240, 0
    %1250 = vmatprep.subr.bf16.mxu0 0
    %1251 = vmatpush1.bf16.msra.mxu0 0
    %1252 = vmatprep.subr.bf16.mxu0 0
    %1253 = vmatpush1.bf16.msra.mxu0 0
    %1254 = vmatprep.subr.bf16.mxu0 0
    %1255 = vmatpush1.bf16.msra.mxu0 0
    %1256 = vmatprep.subr.bf16.mxu0 0
    %1257 = vmatpush1.bf16.msra.mxu0 0
    %1258 = vmatprep.subr.bf16.mxu0 0
    %1259 = vmatpush1.bf16.msra.mxu0 0
    %1260 = vmatprep.subr.bf16.mxu0 0
    %1261 = vmatpush1.bf16.msra.mxu0 0
    %1262 = vmatprep.subr.bf16.mxu0 0
    %1263 = vmatpush1.bf16.msra.mxu0 0
    %1264 = vmatprep.subr.bf16.mxu0 0
    %1265 = vmatpush1.bf16.msra.mxu0 %v1245
    %1266 = vmatprep.subr.bf16.mxu0 0
    %1267 = vmatpush2.bf16.msra.mxu0 0
    %1268 = vmatprep.subr.bf16.mxu0 0
    %1269 = vmatpush2.bf16.msra.mxu0 0
    %1270 = vmatprep.subr.bf16.mxu0 0
    %1271 = vmatpush2.bf16.msra.mxu0 0
    %1272 = vmatprep.subr.bf16.mxu0 0
    %1273 = vmatpush2.bf16.msra.mxu0 0
    %1274 = vmatprep.subr.bf16.mxu0 0
    %1275 = vmatpush2.bf16.msra.mxu0 0
    %1276 = vmatprep.subr.bf16.mxu0 0
    %1277 = vmatpush2.bf16.msra.mxu0 0
    %1278 = vmatprep.subr.bf16.mxu0 0
    %1279 = vmatpush2.bf16.msra.mxu0 0
    %1280 = vmatprep.subr.bf16.mxu0 0
    %1281 = vmatpush2.bf16.msra.mxu0 0
    %1282 = vmatprep.mubr.bf16.mxu0 0
    %1283 = vmatmul.mubr.bf16.gmra.mxu0 %v1248
    %v1284 = vpop.f32.mrf.mxu0
    %v1285 = vadd.f32 0.0, %v1284
    %v1286 = vpop.f32.mrf.mxu0
    %v1287 = vpop.f32.mrf.mxu0
    %v1288 = vpop.f32.mrf.mxu0
    %1289 = vdwg.mxu0
    %v1290 = vadd.f32 %v1233, %v1285
    %v1291 = vld [vmem:[%s931] sm:$0xf]
    %v1292 = vld [vmem:[%s931 + $0x4] sm:$0x1]
    %v1293 = vld [vmem:[%s225] sm:$0xf]
    %v1294 = vld [vmem:[%s225 + $0x4] sm:$0xf]
    %v1297 = vunpack.c.l.b16 %v1293
    %v1298 = vunpack.c.l.b16 %v1294
    %v1299 = vpack.c.b16 %v1298, %v1297
    %v1302 = vsel %vm75, %v1291, 0
    %1304 = vmatprep.subr.bf16.mxu0 0
    %1305 = vmatpush1.bf16.msra.mxu0 0
    %1306 = vmatprep.subr.bf16.mxu0 0
    %1307 = vmatpush1.bf16.msra.mxu0 0
    %1308 = vmatprep.subr.bf16.mxu0 0
    %1309 = vmatpush1.bf16.msra.mxu0 0
    %1310 = vmatprep.subr.bf16.mxu0 0
    %1311 = vmatpush1.bf16.msra.mxu0 0
    %1312 = vmatprep.subr.bf16.mxu0 0
    %1313 = vmatpush1.bf16.msra.mxu0 0
    %1314 = vmatprep.subr.bf16.mxu0 0
    %1315 = vmatpush1.bf16.msra.mxu0 0
    %1316 = vmatprep.subr.bf16.mxu0 0
    %1317 = vmatpush1.bf16.msra.mxu0 0
    %1318 = vmatprep.subr.bf16.mxu0 0
    %1319 = vmatpush1.bf16.msra.mxu0 %v1299
    %1320 = vmatprep.subr.bf16.mxu0 0
    %1321 = vmatpush2.bf16.msra.mxu0 0
    %1322 = vmatprep.subr.bf16.mxu0 0
    %1323 = vmatpush2.bf16.msra.mxu0 0
    %1324 = vmatprep.subr.bf16.mxu0 0
    %1325 = vmatpush2.bf16.msra.mxu0 0
    %1326 = vmatprep.subr.bf16.mxu0 0
    %1327 = vmatpush2.bf16.msra.mxu0 0
    %1328 = vmatprep.subr.bf16.mxu0 0
    %1329 = vmatpush2.bf16.msra.mxu0 0
    %1330 = vmatprep.subr.bf16.mxu0 0
    %1331 = vmatpush2.bf16.msra.mxu0 0
    %1332 = vmatprep.subr.bf16.mxu0 0
    %1333 = vmatpush2.bf16.msra.mxu0 0
    %1334 = vmatprep.subr.bf16.mxu0 0
    %1335 = vmatpush2.bf16.msra.mxu0 0
    %1336 = vmatprep.mubr.bf16.mxu0 0
    %1337 = vmatmul.mubr.bf16.gmra.mxu0 %v1302
    %v1338 = vpop.f32.mrf.mxu0
    %v1339 = vadd.f32 0.0, %v1338
    %v1340 = vpop.f32.mrf.mxu0
    %v1341 = vpop.f32.mrf.mxu0
    %v1342 = vpop.f32.mrf.mxu0
    %1343 = vdwg.mxu0
    %v1344 = vadd.f32 %v1290, %v1339
    %v1345 = vld [vmem:[%s278] sm:$0xf]
    %v1346 = vld [vmem:[%s278 + $0x4] sm:$0xf]
    %v1349 = vunpack.c.l.b16 %v1291
    %v1350 = vunpack.c.l.b16 %v1292
    %v1351 = vpack.c.b16 %v1350, %v1349
    %v1353 = vshrl.u32 %v1351, 16
    %v1355 = vshll.u32 %v1351, 16
    %v1357 = vrot.slane %v1355, 1
    %v1358 = vor.u32 %v1353, %v1357
    %v1361 = vunpack.c.l.b16 %v1345
    %v1362 = vunpack.c.l.b16 %v1346
    %v1363 = vpack.c.b16 %v1362, %v1361
    %v1366 = vsel %vm75, %v1358, 0
    %1368 = vmatprep.subr.bf16.mxu0 0
    %1369 = vmatpush1.bf16.msra.mxu0 0
    %1370 = vmatprep.subr.bf16.mxu0 0
    %1371 = vmatpush1.bf16.msra.mxu0 0
    %1372 = vmatprep.subr.bf16.mxu0 0
    %1373 = vmatpush1.bf16.msra.mxu0 0
    %1374 = vmatprep.subr.bf16.mxu0 0
    %1375 = vmatpush1.bf16.msra.mxu0 0
    %1376 = vmatprep.subr.bf16.mxu0 0
    %1377 = vmatpush1.bf16.msra.mxu0 0
    %1378 = vmatprep.subr.bf16.mxu0 0
    %1379 = vmatpush1.bf16.msra.mxu0 0
    %1380 = vmatprep.subr.bf16.mxu0 0
    %1381 = vmatpush1.bf16.msra.mxu0 0
    %1382 = vmatprep.subr.bf16.mxu0 0
    %1383 = vmatpush1.bf16.msra.mxu0 %v1363
    %1384 = vmatprep.subr.bf16.mxu0 0
    %1385 = vmatpush2.bf16.msra.mxu0 0
    %1386 = vmatprep.subr.bf16.mxu0 0
    %1387 = vmatpush2.bf16.msra.mxu0 0
    %1388 = vmatprep.subr.bf16.mxu0 0
    %1389 = vmatpush2.bf16.msra.mxu0 0
    %1390 = vmatprep.subr.bf16.mxu0 0
    %1391 = vmatpush2.bf16.msra.mxu0 0
    %1392 = vmatprep.subr.bf16.mxu0 0
    %1393 = vmatpush2.bf16.msra.mxu0 0
    %1394 = vmatprep.subr.bf16.mxu0 0
    %1395 = vmatpush2.bf16.msra.mxu0 0
    %1396 = vmatprep.subr.bf16.mxu0 0
    %1397 = vmatpush2.bf16.msra.mxu0 0
    %1398 = vmatprep.subr.bf16.mxu0 0
    %1399 = vmatpush2.bf16.msra.mxu0 0
    %1400 = vmatprep.mubr.bf16.mxu0 0
    %1401 = vmatmul.mubr.bf16.gmra.mxu0 %v1366
    %v1402 = vpop.f32.mrf.mxu0
    %v1403 = vadd.f32 0.0, %v1402
    %v1404 = vpop.f32.mrf.mxu0
    %v1405 = vpop.f32.mrf.mxu0
    %v1406 = vpop.f32.mrf.mxu0
    %1407 = vdwg.mxu0
    %v1408 = vadd.f32 %v1344, %v1403
    %v1409 = vld [vmem:[%s343] sm:$0xf]
    %v1410 = vld [vmem:[%s343 + $0x4] sm:$0xf]
    %v1411 = vrot.slane %v1351, 1
    %v1414 = vunpack.c.l.b16 %v1409
    %v1415 = vunpack.c.l.b16 %v1410
    %v1416 = vpack.c.b16 %v1415, %v1414
    %v1419 = vsel %vm75, %v1411, 0
    %1421 = vmatprep.subr.bf16.mxu0 0
    %1422 = vmatpush1.bf16.msra.mxu0 0
    %1423 = vmatprep.subr.bf16.mxu0 0
    %1424 = vmatpush1.bf16.msra.mxu0 0
    %1425 = vmatprep.subr.bf16.mxu0 0
    %1426 = vmatpush1.bf16.msra.mxu0 0
    %1427 = vmatprep.subr.bf16.mxu0 0
    %1428 = vmatpush1.bf16.msra.mxu0 0
    %1429 = vmatprep.subr.bf16.mxu0 0
    %1430 = vmatpush1.bf16.msra.mxu0 0
    %1431 = vmatprep.subr.bf16.mxu0 0
    %1432 = vmatpush1.bf16.msra.mxu0 0
    %1433 = vmatprep.subr.bf16.mxu0 0
    %1434 = vmatpush1.bf16.msra.mxu0 0
    %1435 = vmatprep.subr.bf16.mxu0 0
    %1436 = vmatpush1.bf16.msra.mxu0 %v1416
    %1437 = vmatprep.subr.bf16.mxu0 0
    %1438 = vmatpush2.bf16.msra.mxu0 0
    %1439 = vmatprep.subr.bf16.mxu0 0
    %1440 = vmatpush2.bf16.msra.mxu0 0
    %1441 = vmatprep.subr.bf16.mxu0 0
    %1442 = vmatpush2.bf16.msra.mxu0 0
    %1443 = vmatprep.subr.bf16.mxu0 0
    %1444 = vmatpush2.bf16.msra.mxu0 0
    %1445 = vmatprep.subr.bf16.mxu0 0
    %1446 = vmatpush2.bf16.msra.mxu0 0
    %1447 = vmatprep.subr.bf16.mxu0 0
    %1448 = vmatpush2.bf16.msra.mxu0 0
    %1449 = vmatprep.subr.bf16.mxu0 0
    %1450 = vmatpush2.bf16.msra.mxu0 0
    %1451 = vmatprep.subr.bf16.mxu0 0
    %1452 = vmatpush2.bf16.msra.mxu0 0
    %1453 = vmatprep.mubr.bf16.mxu0 0
    %1454 = vmatmul.mubr.bf16.gmra.mxu0 %v1419
    %v1455 = vpop.f32.mrf.mxu0
    %v1456 = vadd.f32 0.0, %v1455
    %v1457 = vpop.f32.mrf.mxu0
    %v1458 = vpop.f32.mrf.mxu0
    %v1459 = vpop.f32.mrf.mxu0
    %1460 = vdwg.mxu0
    %v1461 = vadd.f32 %v1408, %v1456
    %s1462 = scalar_lea.vmem %s0, 32
    %v1463 = vld [vmem:[%s1462] sm:$0xf]
    %v1464 = vld [vmem:[%s1462 + $0x4] sm:$0x1]
    %v1465 = vld [vmem:[%s400] sm:$0xf]
    %v1466 = vld [vmem:[%s400 + $0x4] sm:$0xf]
    %v1469 = vunpack.c.l.b16 %v1465
    %v1470 = vunpack.c.l.b16 %v1466
    %v1471 = vpack.c.b16 %v1470, %v1469
    %v1474 = vsel %vm75, %v1463, 0
    %1476 = vmatprep.subr.bf16.mxu0 0
    %1477 = vmatpush1.bf16.msra.mxu0 0
    %1478 = vmatprep.subr.bf16.mxu0 0
    %1479 = vmatpush1.bf16.msra.mxu0 0
    %1480 = vmatprep.subr.bf16.mxu0 0
    %1481 = vmatpush1.bf16.msra.mxu0 0
    %1482 = vmatprep.subr.bf16.mxu0 0
    %1483 = vmatpush1.bf16.msra.mxu0 0
    %1484 = vmatprep.subr.bf16.mxu0 0
    %1485 = vmatpush1.bf16.msra.mxu0 0
    %1486 = vmatprep.subr.bf16.mxu0 0
    %1487 = vmatpush1.bf16.msra.mxu0 0
    %1488 = vmatprep.subr.bf16.mxu0 0
    %1489 = vmatpush1.bf16.msra.mxu0 0
    %1490 = vmatprep.subr.bf16.mxu0 0
    %1491 = vmatpush1.bf16.msra.mxu0 %v1471
    %1492 = vmatprep.subr.bf16.mxu0 0
    %1493 = vmatpush2.bf16.msra.mxu0 0
    %1494 = vmatprep.subr.bf16.mxu0 0
    %1495 = vmatpush2.bf16.msra.mxu0 0
    %1496 = vmatprep.subr.bf16.mxu0 0
    %1497 = vmatpush2.bf16.msra.mxu0 0
    %1498 = vmatprep.subr.bf16.mxu0 0
    %1499 = vmatpush2.bf16.msra.mxu0 0
    %1500 = vmatprep.subr.bf16.mxu0 0
    %1501 = vmatpush2.bf16.msra.mxu0 0
    %1502 = vmatprep.subr.bf16.mxu0 0
    %1503 = vmatpush2.bf16.msra.mxu0 0
    %1504 = vmatprep.subr.bf16.mxu0 0
    %1505 = vmatpush2.bf16.msra.mxu0 0
    %1506 = vmatprep.subr.bf16.mxu0 0
    %1507 = vmatpush2.bf16.msra.mxu0 0
    %1508 = vmatprep.mubr.bf16.mxu0 0
    %1509 = vmatmul.mubr.bf16.gmra.mxu0 %v1474
    %v1510 = vpop.f32.mrf.mxu0
    %v1511 = vadd.f32 0.0, %v1510
    %v1512 = vpop.f32.mrf.mxu0
    %v1513 = vpop.f32.mrf.mxu0
    %v1514 = vpop.f32.mrf.mxu0
    %1515 = vdwg.mxu0
    %v1516 = vadd.f32 %v1461, %v1511
    %v1517 = vld [vmem:[%s453] sm:$0xf]
    %v1518 = vld [vmem:[%s453 + $0x4] sm:$0xf]
    %v1521 = vunpack.c.l.b16 %v1463
    %v1522 = vunpack.c.l.b16 %v1464
    %v1523 = vpack.c.b16 %v1522, %v1521
    %v1525 = vshrl.u32 %v1523, 16
    %v1527 = vshll.u32 %v1523, 16
    %v1529 = vrot.slane %v1527, 1
    %v1530 = vor.u32 %v1525, %v1529
    %v1533 = vunpack.c.l.b16 %v1517
    %v1534 = vunpack.c.l.b16 %v1518
    %v1535 = vpack.c.b16 %v1534, %v1533
    %v1538 = vsel %vm75, %v1530, 0
    %1540 = vmatprep.subr.bf16.mxu0 0
    %1541 = vmatpush1.bf16.msra.mxu0 0
    %1542 = vmatprep.subr.bf16.mxu0 0
    %1543 = vmatpush1.bf16.msra.mxu0 0
    %1544 = vmatprep.subr.bf16.mxu0 0
    %1545 = vmatpush1.bf16.msra.mxu0 0
    %1546 = vmatprep.subr.bf16.mxu0 0
    %1547 = vmatpush1.bf16.msra.mxu0 0
    %1548 = vmatprep.subr.bf16.mxu0 0
    %1549 = vmatpush1.bf16.msra.mxu0 0
    %1550 = vmatprep.subr.bf16.mxu0 0
    %1551 = vmatpush1.bf16.msra.mxu0 0
    %1552 = vmatprep.subr.bf16.mxu0 0
    %1553 = vmatpush1.bf16.msra.mxu0 0
    %1554 = vmatprep.subr.bf16.mxu0 0
    %1555 = vmatpush1.bf16.msra.mxu0 %v1535
    %1556 = vmatprep.subr.bf16.mxu0 0
    %1557 = vmatpush2.bf16.msra.mxu0 0
    %1558 = vmatprep.subr.bf16.mxu0 0
    %1559 = vmatpush2.bf16.msra.mxu0 0
    %1560 = vmatprep.subr.bf16.mxu0 0
    %1561 = vmatpush2.bf16.msra.mxu0 0
    %1562 = vmatprep.subr.bf16.mxu0 0
    %1563 = vmatpush2.bf16.msra.mxu0 0
    %1564 = vmatprep.subr.bf16.mxu0 0
    %1565 = vmatpush2.bf16.msra.mxu0 0
    %1566 = vmatprep.subr.bf16.mxu0 0
    %1567 = vmatpush2.bf16.msra.mxu0 0
    %1568 = vmatprep.subr.bf16.mxu0 0
    %1569 = vmatpush2.bf16.msra.mxu0 0
    %1570 = vmatprep.subr.bf16.mxu0 0
    %1571 = vmatpush2.bf16.msra.mxu0 0
    %1572 = vmatprep.mubr.bf16.mxu0 0
    %1573 = vmatmul.mubr.bf16.gmra.mxu0 %v1538
    %v1574 = vpop.f32.mrf.mxu0
    %v1575 = vadd.f32 0.0, %v1574
    %v1576 = vpop.f32.mrf.mxu0
    %v1577 = vpop.f32.mrf.mxu0
    %v1578 = vpop.f32.mrf.mxu0
    %1579 = vdwg.mxu0
    %v1580 = vadd.f32 %v1516, %v1575
    %v1581 = vld [vmem:[%s518] sm:$0xf]
    %v1582 = vld [vmem:[%s518 + $0x4] sm:$0xf]
    %v1583 = vrot.slane %v1523, 1
    %v1586 = vunpack.c.l.b16 %v1581
    %v1587 = vunpack.c.l.b16 %v1582
    %v1588 = vpack.c.b16 %v1587, %v1586
    %v1591 = vsel %vm75, %v1583, 0
    %1593 = vmatprep.subr.bf16.mxu0 0
    %1594 = vmatpush1.bf16.msra.mxu0 0
    %1595 = vmatprep.subr.bf16.mxu0 0
    %1596 = vmatpush1.bf16.msra.mxu0 0
    %1597 = vmatprep.subr.bf16.mxu0 0
    %1598 = vmatpush1.bf16.msra.mxu0 0
    %1599 = vmatprep.subr.bf16.mxu0 0
    %1600 = vmatpush1.bf16.msra.mxu0 0
    %1601 = vmatprep.subr.bf16.mxu0 0
    %1602 = vmatpush1.bf16.msra.mxu0 0
    %1603 = vmatprep.subr.bf16.mxu0 0
    %1604 = vmatpush1.bf16.msra.mxu0 0
    %1605 = vmatprep.subr.bf16.mxu0 0
    %1606 = vmatpush1.bf16.msra.mxu0 0
    %1607 = vmatprep.subr.bf16.mxu0 0
    %1608 = vmatpush1.bf16.msra.mxu0 %v1588
    %1609 = vmatprep.subr.bf16.mxu0 0
    %1610 = vmatpush2.bf16.msra.mxu0 0
    %1611 = vmatprep.subr.bf16.mxu0 0
    %1612 = vmatpush2.bf16.msra.mxu0 0
    %1613 = vmatprep.subr.bf16.mxu0 0
    %1614 = vmatpush2.bf16.msra.mxu0 0
    %1615 = vmatprep.subr.bf16.mxu0 0
    %1616 = vmatpush2.bf16.msra.mxu0 0
    %1617 = vmatprep.subr.bf16.mxu0 0
    %1618 = vmatpush2.bf16.msra.mxu0 0
    %1619 = vmatprep.subr.bf16.mxu0 0
    %1620 = vmatpush2.bf16.msra.mxu0 0
    %1621 = vmatprep.subr.bf16.mxu0 0
    %1622 = vmatpush2.bf16.msra.mxu0 0
    %1623 = vmatprep.subr.bf16.mxu0 0
    %1624 = vmatpush2.bf16.msra.mxu0 0
    %1625 = vmatprep.mubr.bf16.mxu0 0
    %1626 = vmatmul.mubr.bf16.gmra.mxu0 %v1591
    %v1627 = vpop.f32.mrf.mxu0
    %v1628 = vadd.f32 0.0, %v1627
    %v1629 = vpop.f32.mrf.mxu0
    %v1630 = vpop.f32.mrf.mxu0
    %v1631 = vpop.f32.mrf.mxu0
    %1632 = vdwg.mxu0
    %v1633 = vadd.f32 %v1580, %v1628
    %s1634 = scalar_lea.vmem [#allocation2], 16
    %1635 = vst.msk [vmem:[%s1634] sm:$0xff] %vm572, %v1633
    %v1636 = vsel %vm572, %v1633, 0.0
    %v1637 = vrot.slane %v1636, 4
    %v1638 = vadd.f32 %v1636, %v1637
    %v1639 = vrot.slane %v1638, 2
    %v1640 = vadd.f32 %v1638, %v1639
    %v1641 = vrot.slane %v1640, 1
    %v1642 = vadd.f32 %v1640, %v1641
    %v1643 = vadd.f32 %v1112, %v1642
    %v1644 = vmul.f32 %v1633, %v1633
    %v1645 = vsel %vm572, %v1644, 0.0
    %v1646 = vrot.slane %v1645, 4
    %v1647 = vadd.f32 %v1645, %v1646
    %v1648 = vrot.slane %v1647, 2
    %v1649 = vadd.f32 %v1647, %v1648
    %v1650 = vrot.slane %v1649, 1
    %v1651 = vadd.f32 %v1649, %v1650
    %v1652 = vadd.f32 %v1121, %v1651
    %v1653 = vld [vmem:[%s931] sm:$0xf]
    %v1654 = vld [vmem:[%s931 + $0x4] sm:$0x1]
    %v1655 = vld [vmem:[%s2] sm:$0xf]
    %v1656 = vld [vmem:[%s2 + $0x4] sm:$0xf]
    %v1657 = vld [vmem:[%s54] sm:$0xf]
    %v1658 = vld [vmem:[%s54 + $0x4] sm:$0xf]
    %v1661 = vunpack.c.l.b16 %v1653
    %v1662 = vunpack.c.l.b16 %v1654
    %v1663 = vpack.c.b16 %v1662, %v1661
    %v1665 = vshrl.u32 %v1663, 16
    %v1667 = vshll.u32 %v1663, 16
    %v1669 = vrot.slane %v1667, 1
    %v1670 = vor.u32 %v1665, %v1669
    %v1673 = vunpack.c.l.b16 %v1657
    %v1674 = vunpack.c.l.b16 %v1658
    %v1675 = vpack.c.b16 %v1674, %v1673
    %v1678 = vsel %vm75, %v1670, 0
    %1680 = vmatprep.subr.bf16.mxu0 0
    %1681 = vmatpush1.bf16.msra.mxu0 0
    %1682 = vmatprep.subr.bf16.mxu0 0
    %1683 = vmatpush1.bf16.msra.mxu0 0
    %1684 = vmatprep.subr.bf16.mxu0 0
    %1685 = vmatpush1.bf16.msra.mxu0 0
    %1686 = vmatprep.subr.bf16.mxu0 0
    %1687 = vmatpush1.bf16.msra.mxu0 0
    %1688 = vmatprep.subr.bf16.mxu0 0
    %1689 = vmatpush1.bf16.msra.mxu0 0
    %1690 = vmatprep.subr.bf16.mxu0 0
    %1691 = vmatpush1.bf16.msra.mxu0 0
    %1692 = vmatprep.subr.bf16.mxu0 0
    %1693 = vmatpush1.bf16.msra.mxu0 0
    %1694 = vmatprep.subr.bf16.mxu0 0
    %1695 = vmatpush1.bf16.msra.mxu0 %v1675
    %1696 = vmatprep.subr.bf16.mxu0 0
    %1697 = vmatpush2.bf16.msra.mxu0 0
    %1698 = vmatprep.subr.bf16.mxu0 0
    %1699 = vmatpush2.bf16.msra.mxu0 0
    %1700 = vmatprep.subr.bf16.mxu0 0
    %1701 = vmatpush2.bf16.msra.mxu0 0
    %1702 = vmatprep.subr.bf16.mxu0 0
    %1703 = vmatpush2.bf16.msra.mxu0 0
    %1704 = vmatprep.subr.bf16.mxu0 0
    %1705 = vmatpush2.bf16.msra.mxu0 0
    %1706 = vmatprep.subr.bf16.mxu0 0
    %1707 = vmatpush2.bf16.msra.mxu0 0
    %1708 = vmatprep.subr.bf16.mxu0 0
    %1709 = vmatpush2.bf16.msra.mxu0 0
    %1710 = vmatprep.subr.bf16.mxu0 0
    %1711 = vmatpush2.bf16.msra.mxu0 0
    %1712 = vmatprep.mubr.bf16.mxu0 0
    %1713 = vmatmul.mubr.bf16.gmra.mxu0 %v1678
    %v1714 = vpop.f32.mrf.mxu0
    %v1715 = vadd.f32 0.0, %v1714
    %v1716 = vpop.f32.mrf.mxu0
    %v1717 = vpop.f32.mrf.mxu0
    %v1718 = vpop.f32.mrf.mxu0
    %1719 = vdwg.mxu0
    %v1722 = vunpack.c.l.b16 %v1655
    %v1723 = vunpack.c.l.b16 %v1656
    %v1724 = vpack.c.b16 %v1723, %v1722
    %v1727 = vsel %vm75, %v1653, 0
    %1729 = vmatprep.subr.bf16.mxu0 0
    %1730 = vmatpush1.bf16.msra.mxu0 0
    %1731 = vmatprep.subr.bf16.mxu0 0
    %1732 = vmatpush1.bf16.msra.mxu0 0
    %1733 = vmatprep.subr.bf16.mxu0 0
    %1734 = vmatpush1.bf16.msra.mxu0 0
    %1735 = vmatprep.subr.bf16.mxu0 0
    %1736 = vmatpush1.bf16.msra.mxu0 0
    %1737 = vmatprep.subr.bf16.mxu0 0
    %1738 = vmatpush1.bf16.msra.mxu0 0
    %1739 = vmatprep.subr.bf16.mxu0 0
    %1740 = vmatpush1.bf16.msra.mxu0 0
    %1741 = vmatprep.subr.bf16.mxu0 0
    %1742 = vmatpush1.bf16.msra.mxu0 0
    %1743 = vmatprep.subr.bf16.mxu0 0
    %1744 = vmatpush1.bf16.msra.mxu0 %v1724
    %1745 = vmatprep.subr.bf16.mxu0 0
    %1746 = vmatpush2.bf16.msra.mxu0 0
    %1747 = vmatprep.subr.bf16.mxu0 0
    %1748 = vmatpush2.bf16.msra.mxu0 0
    %1749 = vmatprep.subr.bf16.mxu0 0
    %1750 = vmatpush2.bf16.msra.mxu0 0
    %1751 = vmatprep.subr.bf16.mxu0 0
    %1752 = vmatpush2.bf16.msra.mxu0 0
    %1753 = vmatprep.subr.bf16.mxu0 0
    %1754 = vmatpush2.bf16.msra.mxu0 0
    %1755 = vmatprep.subr.bf16.mxu0 0
    %1756 = vmatpush2.bf16.msra.mxu0 0
    %1757 = vmatprep.subr.bf16.mxu0 0
    %1758 = vmatpush2.bf16.msra.mxu0 0
    %1759 = vmatprep.subr.bf16.mxu0 0
    %1760 = vmatpush2.bf16.msra.mxu0 0
    %1761 = vmatprep.mubr.bf16.mxu0 0
    %1762 = vmatmul.mubr.bf16.gmra.mxu0 %v1727
    %v1763 = vpop.f32.mrf.mxu0
    %v1764 = vadd.f32 %v1715, %v1763
    %v1765 = vpop.f32.mrf.mxu0
    %v1766 = vpop.f32.mrf.mxu0
    %v1767 = vpop.f32.mrf.mxu0
    %1768 = vdwg.mxu0
    %v1769 = vld [vmem:[%s168] sm:$0xf]
    %v1770 = vld [vmem:[%s168 + $0x4] sm:$0xf]
    %v1771 = vrot.slane %v1663, 1
    %v1774 = vunpack.c.l.b16 %v1769
    %v1775 = vunpack.c.l.b16 %v1770
    %v1776 = vpack.c.b16 %v1775, %v1774
    %v1779 = vsel %vm75, %v1771, 0
    %1781 = vmatprep.subr.bf16.mxu0 0
    %1782 = vmatpush1.bf16.msra.mxu0 0
    %1783 = vmatprep.subr.bf16.mxu0 0
    %1784 = vmatpush1.bf16.msra.mxu0 0
    %1785 = vmatprep.subr.bf16.mxu0 0
    %1786 = vmatpush1.bf16.msra.mxu0 0
    %1787 = vmatprep.subr.bf16.mxu0 0
    %1788 = vmatpush1.bf16.msra.mxu0 0
    %1789 = vmatprep.subr.bf16.mxu0 0
    %1790 = vmatpush1.bf16.msra.mxu0 0
    %1791 = vmatprep.subr.bf16.mxu0 0
    %1792 = vmatpush1.bf16.msra.mxu0 0
    %1793 = vmatprep.subr.bf16.mxu0 0
    %1794 = vmatpush1.bf16.msra.mxu0 0
    %1795 = vmatprep.subr.bf16.mxu0 0
    %1796 = vmatpush1.bf16.msra.mxu0 %v1776
    %1797 = vmatprep.subr.bf16.mxu0 0
    %1798 = vmatpush2.bf16.msra.mxu0 0
    %1799 = vmatprep.subr.bf16.mxu0 0
    %1800 = vmatpush2.bf16.msra.mxu0 0
    %1801 = vmatprep.subr.bf16.mxu0 0
    %1802 = vmatpush2.bf16.msra.mxu0 0
    %1803 = vmatprep.subr.bf16.mxu0 0
    %1804 = vmatpush2.bf16.msra.mxu0 0
    %1805 = vmatprep.subr.bf16.mxu0 0
    %1806 = vmatpush2.bf16.msra.mxu0 0
    %1807 = vmatprep.subr.bf16.mxu0 0
    %1808 = vmatpush2.bf16.msra.mxu0 0
    %1809 = vmatprep.subr.bf16.mxu0 0
    %1810 = vmatpush2.bf16.msra.mxu0 0
    %1811 = vmatprep.subr.bf16.mxu0 0
    %1812 = vmatpush2.bf16.msra.mxu0 0
    %1813 = vmatprep.mubr.bf16.mxu0 0
    %1814 = vmatmul.mubr.bf16.gmra.mxu0 %v1779
    %v1815 = vpop.f32.mrf.mxu0
    %v1816 = vadd.f32 0.0, %v1815
    %v1817 = vpop.f32.mrf.mxu0
    %v1818 = vpop.f32.mrf.mxu0
    %v1819 = vpop.f32.mrf.mxu0
    %1820 = vdwg.mxu0
    %v1821 = vadd.f32 %v1764, %v1816
    %v1822 = vld [vmem:[%s1462] sm:$0xf]
    %v1823 = vld [vmem:[%s1462 + $0x4] sm:$0x1]
    %v1824 = vld [vmem:[%s225] sm:$0xf]
    %v1825 = vld [vmem:[%s225 + $0x4] sm:$0xf]
    %v1828 = vunpack.c.l.b16 %v1824
    %v1829 = vunpack.c.l.b16 %v1825
    %v1830 = vpack.c.b16 %v1829, %v1828
    %v1833 = vsel %vm75, %v1822, 0
    %1835 = vmatprep.subr.bf16.mxu0 0
    %1836 = vmatpush1.bf16.msra.mxu0 0
    %1837 = vmatprep.subr.bf16.mxu0 0
    %1838 = vmatpush1.bf16.msra.mxu0 0
    %1839 = vmatprep.subr.bf16.mxu0 0
    %1840 = vmatpush1.bf16.msra.mxu0 0
    %1841 = vmatprep.subr.bf16.mxu0 0
    %1842 = vmatpush1.bf16.msra.mxu0 0
    %1843 = vmatprep.subr.bf16.mxu0 0
    %1844 = vmatpush1.bf16.msra.mxu0 0
    %1845 = vmatprep.subr.bf16.mxu0 0
    %1846 = vmatpush1.bf16.msra.mxu0 0
    %1847 = vmatprep.subr.bf16.mxu0 0
    %1848 = vmatpush1.bf16.msra.mxu0 0
    %1849 = vmatprep.subr.bf16.mxu0 0
    %1850 = vmatpush1.bf16.msra.mxu0 %v1830
    %1851 = vmatprep.subr.bf16.mxu0 0
    %1852 = vmatpush2.bf16.msra.mxu0 0
    %1853 = vmatprep.subr.bf16.mxu0 0
    %1854 = vmatpush2.bf16.msra.mxu0 0
    %1855 = vmatprep.subr.bf16.mxu0 0
    %1856 = vmatpush2.bf16.msra.mxu0 0
    %1857 = vmatprep.subr.bf16.mxu0 0
    %1858 = vmatpush2.bf16.msra.mxu0 0
    %1859 = vmatprep.subr.bf16.mxu0 0
    %1860 = vmatpush2.bf16.msra.mxu0 0
    %1861 = vmatprep.subr.bf16.mxu0 0
    %1862 = vmatpush2.bf16.msra.mxu0 0
    %1863 = vmatprep.subr.bf16.mxu0 0
    %1864 = vmatpush2.bf16.msra.mxu0 0
    %1865 = vmatprep.subr.bf16.mxu0 0
    %1866 = vmatpush2.bf16.msra.mxu0 0
    %1867 = vmatprep.mubr.bf16.mxu0 0
    %1868 = vmatmul.mubr.bf16.gmra.mxu0 %v1833
    %v1869 = vpop.f32.mrf.mxu0
    %v1870 = vadd.f32 0.0, %v1869
    %v1871 = vpop.f32.mrf.mxu0
    %v1872 = vpop.f32.mrf.mxu0
    %v1873 = vpop.f32.mrf.mxu0
    %1874 = vdwg.mxu0
    %v1875 = vadd.f32 %v1821, %v1870
    %v1876 = vld [vmem:[%s278] sm:$0xf]
    %v1877 = vld [vmem:[%s278 + $0x4] sm:$0xf]
    %v1880 = vunpack.c.l.b16 %v1822
    %v1881 = vunpack.c.l.b16 %v1823
    %v1882 = vpack.c.b16 %v1881, %v1880
    %v1884 = vshrl.u32 %v1882, 16
    %v1886 = vshll.u32 %v1882, 16
    %v1888 = vrot.slane %v1886, 1
    %v1889 = vor.u32 %v1884, %v1888
    %v1892 = vunpack.c.l.b16 %v1876
    %v1893 = vunpack.c.l.b16 %v1877
    %v1894 = vpack.c.b16 %v1893, %v1892
    %v1897 = vsel %vm75, %v1889, 0
    %1899 = vmatprep.subr.bf16.mxu0 0
    %1900 = vmatpush1.bf16.msra.mxu0 0
    %1901 = vmatprep.subr.bf16.mxu0 0
    %1902 = vmatpush1.bf16.msra.mxu0 0
    %1903 = vmatprep.subr.bf16.mxu0 0
    %1904 = vmatpush1.bf16.msra.mxu0 0
    %1905 = vmatprep.subr.bf16.mxu0 0
    %1906 = vmatpush1.bf16.msra.mxu0 0
    %1907 = vmatprep.subr.bf16.mxu0 0
    %1908 = vmatpush1.bf16.msra.mxu0 0
    %1909 = vmatprep.subr.bf16.mxu0 0
    %1910 = vmatpush1.bf16.msra.mxu0 0
    %1911 = vmatprep.subr.bf16.mxu0 0
    %1912 = vmatpush1.bf16.msra.mxu0 0
    %1913 = vmatprep.subr.bf16.mxu0 0
    %1914 = vmatpush1.bf16.msra.mxu0 %v1894
    %1915 = vmatprep.subr.bf16.mxu0 0
    %1916 = vmatpush2.bf16.msra.mxu0 0
    %1917 = vmatprep.subr.bf16.mxu0 0
    %1918 = vmatpush2.bf16.msra.mxu0 0
    %1919 = vmatprep.subr.bf16.mxu0 0
    %1920 = vmatpush2.bf16.msra.mxu0 0
    %1921 = vmatprep.subr.bf16.mxu0 0
    %1922 = vmatpush2.bf16.msra.mxu0 0
    %1923 = vmatprep.subr.bf16.mxu0 0
    %1924 = vmatpush2.bf16.msra.mxu0 0
    %1925 = vmatprep.subr.bf16.mxu0 0
    %1926 = vmatpush2.bf16.msra.mxu0 0
    %1927 = vmatprep.subr.bf16.mxu0 0
    %1928 = vmatpush2.bf16.msra.mxu0 0
    %1929 = vmatprep.subr.bf16.mxu0 0
    %1930 = vmatpush2.bf16.msra.mxu0 0
    %1931 = vmatprep.mubr.bf16.mxu0 0
    %1932 = vmatmul.mubr.bf16.gmra.mxu0 %v1897
    %v1933 = vpop.f32.mrf.mxu0
    %v1934 = vadd.f32 0.0, %v1933
    %v1935 = vpop.f32.mrf.mxu0
    %v1936 = vpop.f32.mrf.mxu0
    %v1937 = vpop.f32.mrf.mxu0
    %1938 = vdwg.mxu0
    %v1939 = vadd.f32 %v1875, %v1934
    %v1940 = vld [vmem:[%s343] sm:$0xf]
    %v1941 = vld [vmem:[%s343 + $0x4] sm:$0xf]
    %v1942 = vrot.slane %v1882, 1
    %v1945 = vunpack.c.l.b16 %v1940
    %v1946 = vunpack.c.l.b16 %v1941
    %v1947 = vpack.c.b16 %v1946, %v1945
    %v1950 = vsel %vm75, %v1942, 0
    %1952 = vmatprep.subr.bf16.mxu0 0
    %1953 = vmatpush1.bf16.msra.mxu0 0
    %1954 = vmatprep.subr.bf16.mxu0 0
    %1955 = vmatpush1.bf16.msra.mxu0 0
    %1956 = vmatprep.subr.bf16.mxu0 0
    %1957 = vmatpush1.bf16.msra.mxu0 0
    %1958 = vmatprep.subr.bf16.mxu0 0
    %1959 = vmatpush1.bf16.msra.mxu0 0
    %1960 = vmatprep.subr.bf16.mxu0 0
    %1961 = vmatpush1.bf16.msra.mxu0 0
    %1962 = vmatprep.subr.bf16.mxu0 0
    %1963 = vmatpush1.bf16.msra.mxu0 0
    %1964 = vmatprep.subr.bf16.mxu0 0
    %1965 = vmatpush1.bf16.msra.mxu0 0
    %1966 = vmatprep.subr.bf16.mxu0 0
    %1967 = vmatpush1.bf16.msra.mxu0 %v1947
    %1968 = vmatprep.subr.bf16.mxu0 0
    %1969 = vmatpush2.bf16.msra.mxu0 0
    %1970 = vmatprep.subr.bf16.mxu0 0
    %1971 = vmatpush2.bf16.msra.mxu0 0
    %1972 = vmatprep.subr.bf16.mxu0 0
    %1973 = vmatpush2.bf16.msra.mxu0 0
    %1974 = vmatprep.subr.bf16.mxu0 0
    %1975 = vmatpush2.bf16.msra.mxu0 0
    %1976 = vmatprep.subr.bf16.mxu0 0
    %1977 = vmatpush2.bf16.msra.mxu0 0
    %1978 = vmatprep.subr.bf16.mxu0 0
    %1979 = vmatpush2.bf16.msra.mxu0 0
    %1980 = vmatprep.subr.bf16.mxu0 0
    %1981 = vmatpush2.bf16.msra.mxu0 0
    %1982 = vmatprep.subr.bf16.mxu0 0
    %1983 = vmatpush2.bf16.msra.mxu0 0
    %1984 = vmatprep.mubr.bf16.mxu0 0
    %1985 = vmatmul.mubr.bf16.gmra.mxu0 %v1950
    %v1986 = vpop.f32.mrf.mxu0
    %v1987 = vadd.f32 0.0, %v1986
    %v1988 = vpop.f32.mrf.mxu0
    %v1989 = vpop.f32.mrf.mxu0
    %v1990 = vpop.f32.mrf.mxu0
    %1991 = vdwg.mxu0
    %v1992 = vadd.f32 %v1939, %v1987
    %s1993 = scalar_lea.vmem %s0, 40
    %v1994 = vld [vmem:[%s1993] sm:$0xf]
    %v1995 = vld [vmem:[%s1993 + $0x4] sm:$0x1]
    %v1996 = vld [vmem:[%s400] sm:$0xf]
    %v1997 = vld [vmem:[%s400 + $0x4] sm:$0xf]
    %v2000 = vunpack.c.l.b16 %v1996
    %v2001 = vunpack.c.l.b16 %v1997
    %v2002 = vpack.c.b16 %v2001, %v2000
    %v2005 = vsel %vm75, %v1994, 0
    %2007 = vmatprep.subr.bf16.mxu0 0
    %2008 = vmatpush1.bf16.msra.mxu0 0
    %2009 = vmatprep.subr.bf16.mxu0 0
    %2010 = vmatpush1.bf16.msra.mxu0 0
    %2011 = vmatprep.subr.bf16.mxu0 0
    %2012 = vmatpush1.bf16.msra.mxu0 0
    %2013 = vmatprep.subr.bf16.mxu0 0
    %2014 = vmatpush1.bf16.msra.mxu0 0
    %2015 = vmatprep.subr.bf16.mxu0 0
    %2016 = vmatpush1.bf16.msra.mxu0 0
    %2017 = vmatprep.subr.bf16.mxu0 0
    %2018 = vmatpush1.bf16.msra.mxu0 0
    %2019 = vmatprep.subr.bf16.mxu0 0
    %2020 = vmatpush1.bf16.msra.mxu0 0
    %2021 = vmatprep.subr.bf16.mxu0 0
    %2022 = vmatpush1.bf16.msra.mxu0 %v2002
    %2023 = vmatprep.subr.bf16.mxu0 0
    %2024 = vmatpush2.bf16.msra.mxu0 0
    %2025 = vmatprep.subr.bf16.mxu0 0
    %2026 = vmatpush2.bf16.msra.mxu0 0
    %2027 = vmatprep.subr.bf16.mxu0 0
    %2028 = vmatpush2.bf16.msra.mxu0 0
    %2029 = vmatprep.subr.bf16.mxu0 0
    %2030 = vmatpush2.bf16.msra.mxu0 0
    %2031 = vmatprep.subr.bf16.mxu0 0
    %2032 = vmatpush2.bf16.msra.mxu0 0
    %2033 = vmatprep.subr.bf16.mxu0 0
    %2034 = vmatpush2.bf16.msra.mxu0 0
    %2035 = vmatprep.subr.bf16.mxu0 0
    %2036 = vmatpush2.bf16.msra.mxu0 0
    %2037 = vmatprep.subr.bf16.mxu0 0
    %2038 = vmatpush2.bf16.msra.mxu0 0
    %2039 = vmatprep.mubr.bf16.mxu0 0
    %2040 = vmatmul.mubr.bf16.gmra.mxu0 %v2005
    %v2041 = vpop.f32.mrf.mxu0
    %v2042 = vadd.f32 0.0, %v2041
    %v2043 = vpop.f32.mrf.mxu0
    %v2044 = vpop.f32.mrf.mxu0
    %v2045 = vpop.f32.mrf.mxu0
    %2046 = vdwg.mxu0
    %v2047 = vadd.f32 %v1992, %v2042
    %v2048 = vld [vmem:[%s453] sm:$0xf]
    %v2049 = vld [vmem:[%s453 + $0x4] sm:$0xf]
    %v2052 = vunpack.c.l.b16 %v1994
    %v2053 = vunpack.c.l.b16 %v1995
    %v2054 = vpack.c.b16 %v2053, %v2052
    %v2056 = vshrl.u32 %v2054, 16
    %v2058 = vshll.u32 %v2054, 16
    %v2060 = vrot.slane %v2058, 1
    %v2061 = vor.u32 %v2056, %v2060
    %v2064 = vunpack.c.l.b16 %v2048
    %v2065 = vunpack.c.l.b16 %v2049
    %v2066 = vpack.c.b16 %v2065, %v2064
    %v2069 = vsel %vm75, %v2061, 0
    %2071 = vmatprep.subr.bf16.mxu0 0
    %2072 = vmatpush1.bf16.msra.mxu0 0
    %2073 = vmatprep.subr.bf16.mxu0 0
    %2074 = vmatpush1.bf16.msra.mxu0 0
    %2075 = vmatprep.subr.bf16.mxu0 0
    %2076 = vmatpush1.bf16.msra.mxu0 0
    %2077 = vmatprep.subr.bf16.mxu0 0
    %2078 = vmatpush1.bf16.msra.mxu0 0
    %2079 = vmatprep.subr.bf16.mxu0 0
    %2080 = vmatpush1.bf16.msra.mxu0 0
    %2081 = vmatprep.subr.bf16.mxu0 0
    %2082 = vmatpush1.bf16.msra.mxu0 0
    %2083 = vmatprep.subr.bf16.mxu0 0
    %2084 = vmatpush1.bf16.msra.mxu0 0
    %2085 = vmatprep.subr.bf16.mxu0 0
    %2086 = vmatpush1.bf16.msra.mxu0 %v2066
    %2087 = vmatprep.subr.bf16.mxu0 0
    %2088 = vmatpush2.bf16.msra.mxu0 0
    %2089 = vmatprep.subr.bf16.mxu0 0
    %2090 = vmatpush2.bf16.msra.mxu0 0
    %2091 = vmatprep.subr.bf16.mxu0 0
    %2092 = vmatpush2.bf16.msra.mxu0 0
    %2093 = vmatprep.subr.bf16.mxu0 0
    %2094 = vmatpush2.bf16.msra.mxu0 0
    %2095 = vmatprep.subr.bf16.mxu0 0
    %2096 = vmatpush2.bf16.msra.mxu0 0
    %2097 = vmatprep.subr.bf16.mxu0 0
    %2098 = vmatpush2.bf16.msra.mxu0 0
    %2099 = vmatprep.subr.bf16.mxu0 0
    %2100 = vmatpush2.bf16.msra.mxu0 0
    %2101 = vmatprep.subr.bf16.mxu0 0
    %2102 = vmatpush2.bf16.msra.mxu0 0
    %2103 = vmatprep.mubr.bf16.mxu0 0
    %2104 = vmatmul.mubr.bf16.gmra.mxu0 %v2069
    %v2105 = vpop.f32.mrf.mxu0
    %v2106 = vadd.f32 0.0, %v2105
    %v2107 = vpop.f32.mrf.mxu0
    %v2108 = vpop.f32.mrf.mxu0
    %v2109 = vpop.f32.mrf.mxu0
    %2110 = vdwg.mxu0
    %v2111 = vadd.f32 %v2047, %v2106
    %v2112 = vld [vmem:[%s518] sm:$0xf]
    %v2113 = vld [vmem:[%s518 + $0x4] sm:$0xf]
    %v2114 = vrot.slane %v2054, 1
    %v2117 = vunpack.c.l.b16 %v2112
    %v2118 = vunpack.c.l.b16 %v2113
    %v2119 = vpack.c.b16 %v2118, %v2117
    %v2122 = vsel %vm75, %v2114, 0
    %2124 = vmatprep.subr.bf16.mxu0 0
    %2125 = vmatpush1.bf16.msra.mxu0 0
    %2126 = vmatprep.subr.bf16.mxu0 0
    %2127 = vmatpush1.bf16.msra.mxu0 0
    %2128 = vmatprep.subr.bf16.mxu0 0
    %2129 = vmatpush1.bf16.msra.mxu0 0
    %2130 = vmatprep.subr.bf16.mxu0 0
    %2131 = vmatpush1.bf16.msra.mxu0 0
    %2132 = vmatprep.subr.bf16.mxu0 0
    %2133 = vmatpush1.bf16.msra.mxu0 0
    %2134 = vmatprep.subr.bf16.mxu0 0
    %2135 = vmatpush1.bf16.msra.mxu0 0
    %2136 = vmatprep.subr.bf16.mxu0 0
    %2137 = vmatpush1.bf16.msra.mxu0 0
    %2138 = vmatprep.subr.bf16.mxu0 0
    %2139 = vmatpush1.bf16.msra.mxu0 %v2119
    %2140 = vmatprep.subr.bf16.mxu0 0
    %2141 = vmatpush2.bf16.msra.mxu0 0
    %2142 = vmatprep.subr.bf16.mxu0 0
    %2143 = vmatpush2.bf16.msra.mxu0 0
    %2144 = vmatprep.subr.bf16.mxu0 0
    %2145 = vmatpush2.bf16.msra.mxu0 0
    %2146 = vmatprep.subr.bf16.mxu0 0
    %2147 = vmatpush2.bf16.msra.mxu0 0
    %2148 = vmatprep.subr.bf16.mxu0 0
    %2149 = vmatpush2.bf16.msra.mxu0 0
    %2150 = vmatprep.subr.bf16.mxu0 0
    %2151 = vmatpush2.bf16.msra.mxu0 0
    %2152 = vmatprep.subr.bf16.mxu0 0
    %2153 = vmatpush2.bf16.msra.mxu0 0
    %2154 = vmatprep.subr.bf16.mxu0 0
    %2155 = vmatpush2.bf16.msra.mxu0 0
    %2156 = vmatprep.mubr.bf16.mxu0 0
    %2157 = vmatmul.mubr.bf16.gmra.mxu0 %v2122
    %v2158 = vpop.f32.mrf.mxu0
    %v2159 = vadd.f32 0.0, %v2158
    %v2160 = vpop.f32.mrf.mxu0
    %v2161 = vpop.f32.mrf.mxu0
    %v2162 = vpop.f32.mrf.mxu0
    %2163 = vdwg.mxu0
    %v2164 = vadd.f32 %v2111, %v2159
    %s2165 = scalar_lea.vmem [#allocation2], 24
    %2166 = vst.msk [vmem:[%s2165] sm:$0xff] %vm572, %v2164
    %v2167 = vsel %vm572, %v2164, 0.0
    %v2168 = vrot.slane %v2167, 4
    %v2169 = vadd.f32 %v2167, %v2168
    %v2170 = vrot.slane %v2169, 2
    %v2171 = vadd.f32 %v2169, %v2170
    %v2172 = vrot.slane %v2171, 1
    %v2173 = vadd.f32 %v2171, %v2172
    %v2174 = vadd.f32 %v1643, %v2173
    %v2175 = vmul.f32 %v2164, %v2164
    %v2176 = vsel %vm572, %v2175, 0.0
    %v2177 = vrot.slane %v2176, 4
    %v2178 = vadd.f32 %v2176, %v2177
    %v2179 = vrot.slane %v2178, 2
    %v2180 = vadd.f32 %v2178, %v2179
    %v2181 = vrot.slane %v2180, 1
    %v2182 = vadd.f32 %v2180, %v2181
    %v2183 = vadd.f32 %v1652, %v2182
    %v2184 = vld [vmem:[%s1462] sm:$0xf]
    %v2185 = vld [vmem:[%s1462 + $0x4] sm:$0x1]
    %v2186 = vld [vmem:[%s2] sm:$0xf]
    %v2187 = vld [vmem:[%s2 + $0x4] sm:$0xf]
    %v2188 = vld [vmem:[%s54] sm:$0xf]
    %v2189 = vld [vmem:[%s54 + $0x4] sm:$0xf]
    %v2192 = vunpack.c.l.b16 %v2184
    %v2193 = vunpack.c.l.b16 %v2185
    %v2194 = vpack.c.b16 %v2193, %v2192
    %v2196 = vshrl.u32 %v2194, 16
    %v2198 = vshll.u32 %v2194, 16
    %v2200 = vrot.slane %v2198, 1
    %v2201 = vor.u32 %v2196, %v2200
    %v2204 = vunpack.c.l.b16 %v2188
    %v2205 = vunpack.c.l.b16 %v2189
    %v2206 = vpack.c.b16 %v2205, %v2204
    %v2209 = vsel %vm75, %v2201, 0
    %2211 = vmatprep.subr.bf16.mxu0 0
    %2212 = vmatpush1.bf16.msra.mxu0 0
    %2213 = vmatprep.subr.bf16.mxu0 0
    %2214 = vmatpush1.bf16.msra.mxu0 0
    %2215 = vmatprep.subr.bf16.mxu0 0
    %2216 = vmatpush1.bf16.msra.mxu0 0
    %2217 = vmatprep.subr.bf16.mxu0 0
    %2218 = vmatpush1.bf16.msra.mxu0 0
    %2219 = vmatprep.subr.bf16.mxu0 0
    %2220 = vmatpush1.bf16.msra.mxu0 0
    %2221 = vmatprep.subr.bf16.mxu0 0
    %2222 = vmatpush1.bf16.msra.mxu0 0
    %2223 = vmatprep.subr.bf16.mxu0 0
    %2224 = vmatpush1.bf16.msra.mxu0 0
    %2225 = vmatprep.subr.bf16.mxu0 0
    %2226 = vmatpush1.bf16.msra.mxu0 %v2206
    %2227 = vmatprep.subr.bf16.mxu0 0
    %2228 = vmatpush2.bf16.msra.mxu0 0
    %2229 = vmatprep.subr.bf16.mxu0 0
    %2230 = vmatpush2.bf16.msra.mxu0 0
    %2231 = vmatprep.subr.bf16.mxu0 0
    %2232 = vmatpush2.bf16.msra.mxu0 0
    %2233 = vmatprep.subr.bf16.mxu0 0
    %2234 = vmatpush2.bf16.msra.mxu0 0
    %2235 = vmatprep.subr.bf16.mxu0 0
    %2236 = vmatpush2.bf16.msra.mxu0 0
    %2237 = vmatprep.subr.bf16.mxu0 0
    %2238 = vmatpush2.bf16.msra.mxu0 0
    %2239 = vmatprep.subr.bf16.mxu0 0
    %2240 = vmatpush2.bf16.msra.mxu0 0
    %2241 = vmatprep.subr.bf16.mxu0 0
    %2242 = vmatpush2.bf16.msra.mxu0 0
    %2243 = vmatprep.mubr.bf16.mxu0 0
    %2244 = vmatmul.mubr.bf16.gmra.mxu0 %v2209
    %v2245 = vpop.f32.mrf.mxu0
    %v2246 = vadd.f32 0.0, %v2245
    %v2247 = vpop.f32.mrf.mxu0
    %v2248 = vpop.f32.mrf.mxu0
    %v2249 = vpop.f32.mrf.mxu0
    %2250 = vdwg.mxu0
    %v2253 = vunpack.c.l.b16 %v2186
    %v2254 = vunpack.c.l.b16 %v2187
    %v2255 = vpack.c.b16 %v2254, %v2253
    %v2258 = vsel %vm75, %v2184, 0
    %2260 = vmatprep.subr.bf16.mxu0 0
    %2261 = vmatpush1.bf16.msra.mxu0 0
    %2262 = vmatprep.subr.bf16.mxu0 0
    %2263 = vmatpush1.bf16.msra.mxu0 0
    %2264 = vmatprep.subr.bf16.mxu0 0
    %2265 = vmatpush1.bf16.msra.mxu0 0
    %2266 = vmatprep.subr.bf16.mxu0 0
    %2267 = vmatpush1.bf16.msra.mxu0 0
    %2268 = vmatprep.subr.bf16.mxu0 0
    %2269 = vmatpush1.bf16.msra.mxu0 0
    %2270 = vmatprep.subr.bf16.mxu0 0
    %2271 = vmatpush1.bf16.msra.mxu0 0
    %2272 = vmatprep.subr.bf16.mxu0 0
    %2273 = vmatpush1.bf16.msra.mxu0 0
    %2274 = vmatprep.subr.bf16.mxu0 0
    %2275 = vmatpush1.bf16.msra.mxu0 %v2255
    %2276 = vmatprep.subr.bf16.mxu0 0
    %2277 = vmatpush2.bf16.msra.mxu0 0
    %2278 = vmatprep.subr.bf16.mxu0 0
    %2279 = vmatpush2.bf16.msra.mxu0 0
    %2280 = vmatprep.subr.bf16.mxu0 0
    %2281 = vmatpush2.bf16.msra.mxu0 0
    %2282 = vmatprep.subr.bf16.mxu0 0
    %2283 = vmatpush2.bf16.msra.mxu0 0
    %2284 = vmatprep.subr.bf16.mxu0 0
    %2285 = vmatpush2.bf16.msra.mxu0 0
    %2286 = vmatprep.subr.bf16.mxu0 0
    %2287 = vmatpush2.bf16.msra.mxu0 0
    %2288 = vmatprep.subr.bf16.mxu0 0
    %2289 = vmatpush2.bf16.msra.mxu0 0
    %2290 = vmatprep.subr.bf16.mxu0 0
    %2291 = vmatpush2.bf16.msra.mxu0 0
    %2292 = vmatprep.mubr.bf16.mxu0 0
    %2293 = vmatmul.mubr.bf16.gmra.mxu0 %v2258
    %v2294 = vpop.f32.mrf.mxu0
    %v2295 = vadd.f32 %v2246, %v2294
    %v2296 = vpop.f32.mrf.mxu0
    %v2297 = vpop.f32.mrf.mxu0
    %v2298 = vpop.f32.mrf.mxu0
    %2299 = vdwg.mxu0
    %v2300 = vld [vmem:[%s168] sm:$0xf]
    %v2301 = vld [vmem:[%s168 + $0x4] sm:$0xf]
    %v2302 = vrot.slane %v2194, 1
    %v2305 = vunpack.c.l.b16 %v2300
    %v2306 = vunpack.c.l.b16 %v2301
    %v2307 = vpack.c.b16 %v2306, %v2305
    %v2310 = vsel %vm75, %v2302, 0
    %2312 = vmatprep.subr.bf16.mxu0 0
    %2313 = vmatpush1.bf16.msra.mxu0 0
    %2314 = vmatprep.subr.bf16.mxu0 0
    %2315 = vmatpush1.bf16.msra.mxu0 0
    %2316 = vmatprep.subr.bf16.mxu0 0
    %2317 = vmatpush1.bf16.msra.mxu0 0
    %2318 = vmatprep.subr.bf16.mxu0 0
    %2319 = vmatpush1.bf16.msra.mxu0 0
    %2320 = vmatprep.subr.bf16.mxu0 0
    %2321 = vmatpush1.bf16.msra.mxu0 0
    %2322 = vmatprep.subr.bf16.mxu0 0
    %2323 = vmatpush1.bf16.msra.mxu0 0
    %2324 = vmatprep.subr.bf16.mxu0 0
    %2325 = vmatpush1.bf16.msra.mxu0 0
    %2326 = vmatprep.subr.bf16.mxu0 0
    %2327 = vmatpush1.bf16.msra.mxu0 %v2307
    %2328 = vmatprep.subr.bf16.mxu0 0
    %2329 = vmatpush2.bf16.msra.mxu0 0
    %2330 = vmatprep.subr.bf16.mxu0 0
    %2331 = vmatpush2.bf16.msra.mxu0 0
    %2332 = vmatprep.subr.bf16.mxu0 0
    %2333 = vmatpush2.bf16.msra.mxu0 0
    %2334 = vmatprep.subr.bf16.mxu0 0
    %2335 = vmatpush2.bf16.msra.mxu0 0
    %2336 = vmatprep.subr.bf16.mxu0 0
    %2337 = vmatpush2.bf16.msra.mxu0 0
    %2338 = vmatprep.subr.bf16.mxu0 0
    %2339 = vmatpush2.bf16.msra.mxu0 0
    %2340 = vmatprep.subr.bf16.mxu0 0
    %2341 = vmatpush2.bf16.msra.mxu0 0
    %2342 = vmatprep.subr.bf16.mxu0 0
    %2343 = vmatpush2.bf16.msra.mxu0 0
    %2344 = vmatprep.mubr.bf16.mxu0 0
    %2345 = vmatmul.mubr.bf16.gmra.mxu0 %v2310
    %v2346 = vpop.f32.mrf.mxu0
    %v2347 = vadd.f32 0.0, %v2346
    %v2348 = vpop.f32.mrf.mxu0
    %v2349 = vpop.f32.mrf.mxu0
    %v2350 = vpop.f32.mrf.mxu0
    %2351 = vdwg.mxu0
    %v2352 = vadd.f32 %v2295, %v2347
    %v2353 = vld [vmem:[%s1993] sm:$0xf]
    %v2354 = vld [vmem:[%s1993 + $0x4] sm:$0x1]
    %v2355 = vld [vmem:[%s225] sm:$0xf]
    %v2356 = vld [vmem:[%s225 + $0x4] sm:$0xf]
    %v2359 = vunpack.c.l.b16 %v2355
    %v2360 = vunpack.c.l.b16 %v2356
    %v2361 = vpack.c.b16 %v2360, %v2359
    %v2364 = vsel %vm75, %v2353, 0
    %2366 = vmatprep.subr.bf16.mxu0 0
    %2367 = vmatpush1.bf16.msra.mxu0 0
    %2368 = vmatprep.subr.bf16.mxu0 0
    %2369 = vmatpush1.bf16.msra.mxu0 0
    %2370 = vmatprep.subr.bf16.mxu0 0
    %2371 = vmatpush1.bf16.msra.mxu0 0
    %2372 = vmatprep.subr.bf16.mxu0 0
    %2373 = vmatpush1.bf16.msra.mxu0 0
    %2374 = vmatprep.subr.bf16.mxu0 0
    %2375 = vmatpush1.bf16.msra.mxu0 0
    %2376 = vmatprep.subr.bf16.mxu0 0
    %2377 = vmatpush1.bf16.msra.mxu0 0
    %2378 = vmatprep.subr.bf16.mxu0 0
    %2379 = vmatpush1.bf16.msra.mxu0 0
    %2380 = vmatprep.subr.bf16.mxu0 0
    %2381 = vmatpush1.bf16.msra.mxu0 %v2361
    %2382 = vmatprep.subr.bf16.mxu0 0
    %2383 = vmatpush2.bf16.msra.mxu0 0
    %2384 = vmatprep.subr.bf16.mxu0 0
    %2385 = vmatpush2.bf16.msra.mxu0 0
    %2386 = vmatprep.subr.bf16.mxu0 0
    %2387 = vmatpush2.bf16.msra.mxu0 0
    %2388 = vmatprep.subr.bf16.mxu0 0
    %2389 = vmatpush2.bf16.msra.mxu0 0
    %2390 = vmatprep.subr.bf16.mxu0 0
    %2391 = vmatpush2.bf16.msra.mxu0 0
    %2392 = vmatprep.subr.bf16.mxu0 0
    %2393 = vmatpush2.bf16.msra.mxu0 0
    %2394 = vmatprep.subr.bf16.mxu0 0
    %2395 = vmatpush2.bf16.msra.mxu0 0
    %2396 = vmatprep.subr.bf16.mxu0 0
    %2397 = vmatpush2.bf16.msra.mxu0 0
    %2398 = vmatprep.mubr.bf16.mxu0 0
    %2399 = vmatmul.mubr.bf16.gmra.mxu0 %v2364
    %v2400 = vpop.f32.mrf.mxu0
    %v2401 = vadd.f32 0.0, %v2400
    %v2402 = vpop.f32.mrf.mxu0
    %v2403 = vpop.f32.mrf.mxu0
    %v2404 = vpop.f32.mrf.mxu0
    %2405 = vdwg.mxu0
    %v2406 = vadd.f32 %v2352, %v2401
    %v2407 = vld [vmem:[%s278] sm:$0xf]
    %v2408 = vld [vmem:[%s278 + $0x4] sm:$0xf]
    %v2411 = vunpack.c.l.b16 %v2353
    %v2412 = vunpack.c.l.b16 %v2354
    %v2413 = vpack.c.b16 %v2412, %v2411
    %v2415 = vshrl.u32 %v2413, 16
    %v2417 = vshll.u32 %v2413, 16
    %v2419 = vrot.slane %v2417, 1
    %v2420 = vor.u32 %v2415, %v2419
    %v2423 = vunpack.c.l.b16 %v2407
    %v2424 = vunpack.c.l.b16 %v2408
    %v2425 = vpack.c.b16 %v2424, %v2423
    %v2428 = vsel %vm75, %v2420, 0
    %2430 = vmatprep.subr.bf16.mxu0 0
    %2431 = vmatpush1.bf16.msra.mxu0 0
    %2432 = vmatprep.subr.bf16.mxu0 0
    %2433 = vmatpush1.bf16.msra.mxu0 0
    %2434 = vmatprep.subr.bf16.mxu0 0
    %2435 = vmatpush1.bf16.msra.mxu0 0
    %2436 = vmatprep.subr.bf16.mxu0 0
    %2437 = vmatpush1.bf16.msra.mxu0 0
    %2438 = vmatprep.subr.bf16.mxu0 0
    %2439 = vmatpush1.bf16.msra.mxu0 0
    %2440 = vmatprep.subr.bf16.mxu0 0
    %2441 = vmatpush1.bf16.msra.mxu0 0
    %2442 = vmatprep.subr.bf16.mxu0 0
    %2443 = vmatpush1.bf16.msra.mxu0 0
    %2444 = vmatprep.subr.bf16.mxu0 0
    %2445 = vmatpush1.bf16.msra.mxu0 %v2425
    %2446 = vmatprep.subr.bf16.mxu0 0
    %2447 = vmatpush2.bf16.msra.mxu0 0
    %2448 = vmatprep.subr.bf16.mxu0 0
    %2449 = vmatpush2.bf16.msra.mxu0 0
    %2450 = vmatprep.subr.bf16.mxu0 0
    %2451 = vmatpush2.bf16.msra.mxu0 0
    %2452 = vmatprep.subr.bf16.mxu0 0
    %2453 = vmatpush2.bf16.msra.mxu0 0
    %2454 = vmatprep.subr.bf16.mxu0 0
    %2455 = vmatpush2.bf16.msra.mxu0 0
    %2456 = vmatprep.subr.bf16.mxu0 0
    %2457 = vmatpush2.bf16.msra.mxu0 0
    %2458 = vmatprep.subr.bf16.mxu0 0
    %2459 = vmatpush2.bf16.msra.mxu0 0
    %2460 = vmatprep.subr.bf16.mxu0 0
    %2461 = vmatpush2.bf16.msra.mxu0 0
    %2462 = vmatprep.mubr.bf16.mxu0 0
    %2463 = vmatmul.mubr.bf16.gmra.mxu0 %v2428
    %v2464 = vpop.f32.mrf.mxu0
    %v2465 = vadd.f32 0.0, %v2464
    %v2466 = vpop.f32.mrf.mxu0
    %v2467 = vpop.f32.mrf.mxu0
    %v2468 = vpop.f32.mrf.mxu0
    %2469 = vdwg.mxu0
    %v2470 = vadd.f32 %v2406, %v2465
    %v2471 = vld [vmem:[%s343] sm:$0xf]
    %v2472 = vld [vmem:[%s343 + $0x4] sm:$0xf]
    %v2473 = vrot.slane %v2413, 1
    %v2476 = vunpack.c.l.b16 %v2471
    %v2477 = vunpack.c.l.b16 %v2472
    %v2478 = vpack.c.b16 %v2477, %v2476
    %v2481 = vsel %vm75, %v2473, 0
    %2483 = vmatprep.subr.bf16.mxu0 0
    %2484 = vmatpush1.bf16.msra.mxu0 0
    %2485 = vmatprep.subr.bf16.mxu0 0
    %2486 = vmatpush1.bf16.msra.mxu0 0
    %2487 = vmatprep.subr.bf16.mxu0 0
    %2488 = vmatpush1.bf16.msra.mxu0 0
    %2489 = vmatprep.subr.bf16.mxu0 0
    %2490 = vmatpush1.bf16.msra.mxu0 0
    %2491 = vmatprep.subr.bf16.mxu0 0
    %2492 = vmatpush1.bf16.msra.mxu0 0
    %2493 = vmatprep.subr.bf16.mxu0 0
    %2494 = vmatpush1.bf16.msra.mxu0 0
    %2495 = vmatprep.subr.bf16.mxu0 0
    %2496 = vmatpush1.bf16.msra.mxu0 0
    %2497 = vmatprep.subr.bf16.mxu0 0
    %2498 = vmatpush1.bf16.msra.mxu0 %v2478
    %2499 = vmatprep.subr.bf16.mxu0 0
    %2500 = vmatpush2.bf16.msra.mxu0 0
    %2501 = vmatprep.subr.bf16.mxu0 0
    %2502 = vmatpush2.bf16.msra.mxu0 0
    %2503 = vmatprep.subr.bf16.mxu0 0
    %2504 = vmatpush2.bf16.msra.mxu0 0
    %2505 = vmatprep.subr.bf16.mxu0 0
    %2506 = vmatpush2.bf16.msra.mxu0 0
    %2507 = vmatprep.subr.bf16.mxu0 0
    %2508 = vmatpush2.bf16.msra.mxu0 0
    %2509 = vmatprep.subr.bf16.mxu0 0
    %2510 = vmatpush2.bf16.msra.mxu0 0
    %2511 = vmatprep.subr.bf16.mxu0 0
    %2512 = vmatpush2.bf16.msra.mxu0 0
    %2513 = vmatprep.subr.bf16.mxu0 0
    %2514 = vmatpush2.bf16.msra.mxu0 0
    %2515 = vmatprep.mubr.bf16.mxu0 0
    %2516 = vmatmul.mubr.bf16.gmra.mxu0 %v2481
    %v2517 = vpop.f32.mrf.mxu0
    %v2518 = vadd.f32 0.0, %v2517
    %v2519 = vpop.f32.mrf.mxu0
    %v2520 = vpop.f32.mrf.mxu0
    %v2521 = vpop.f32.mrf.mxu0
    %2522 = vdwg.mxu0
    %v2523 = vadd.f32 %v2470, %v2518
    %s2524 = scalar_lea.vmem %s0, 48
    %v2525 = vld [vmem:[%s2524] sm:$0xf]
    %v2526 = vld [vmem:[%s2524 + $0x4] sm:$0x1]
    %v2527 = vld [vmem:[%s400] sm:$0xf]
    %v2528 = vld [vmem:[%s400 + $0x4] sm:$0xf]
    %v2531 = vunpack.c.l.b16 %v2527
    %v2532 = vunpack.c.l.b16 %v2528
    %v2533 = vpack.c.b16 %v2532, %v2531
    %v2536 = vsel %vm75, %v2525, 0
    %2538 = vmatprep.subr.bf16.mxu0 0
    %2539 = vmatpush1.bf16.msra.mxu0 0
    %2540 = vmatprep.subr.bf16.mxu0 0
    %2541 = vmatpush1.bf16.msra.mxu0 0
    %2542 = vmatprep.subr.bf16.mxu0 0
    %2543 = vmatpush1.bf16.msra.mxu0 0
    %2544 = vmatprep.subr.bf16.mxu0 0
    %2545 = vmatpush1.bf16.msra.mxu0 0
    %2546 = vmatprep.subr.bf16.mxu0 0
    %2547 = vmatpush1.bf16.msra.mxu0 0
    %2548 = vmatprep.subr.bf16.mxu0 0
    %2549 = vmatpush1.bf16.msra.mxu0 0
    %2550 = vmatprep.subr.bf16.mxu0 0
    %2551 = vmatpush1.bf16.msra.mxu0 0
    %2552 = vmatprep.subr.bf16.mxu0 0
    %2553 = vmatpush1.bf16.msra.mxu0 %v2533
    %2554 = vmatprep.subr.bf16.mxu0 0
    %2555 = vmatpush2.bf16.msra.mxu0 0
    %2556 = vmatprep.subr.bf16.mxu0 0
    %2557 = vmatpush2.bf16.msra.mxu0 0
    %2558 = vmatprep.subr.bf16.mxu0 0
    %2559 = vmatpush2.bf16.msra.mxu0 0
    %2560 = vmatprep.subr.bf16.mxu0 0
    %2561 = vmatpush2.bf16.msra.mxu0 0
    %2562 = vmatprep.subr.bf16.mxu0 0
    %2563 = vmatpush2.bf16.msra.mxu0 0
    %2564 = vmatprep.subr.bf16.mxu0 0
    %2565 = vmatpush2.bf16.msra.mxu0 0
    %2566 = vmatprep.subr.bf16.mxu0 0
    %2567 = vmatpush2.bf16.msra.mxu0 0
    %2568 = vmatprep.subr.bf16.mxu0 0
    %2569 = vmatpush2.bf16.msra.mxu0 0
    %2570 = vmatprep.mubr.bf16.mxu0 0
    %2571 = vmatmul.mubr.bf16.gmra.mxu0 %v2536
    %v2572 = vpop.f32.mrf.mxu0
    %v2573 = vadd.f32 0.0, %v2572
    %v2574 = vpop.f32.mrf.mxu0
    %v2575 = vpop.f32.mrf.mxu0
    %v2576 = vpop.f32.mrf.mxu0
    %2577 = vdwg.mxu0
    %v2578 = vadd.f32 %v2523, %v2573
    %v2579 = vld [vmem:[%s453] sm:$0xf]
    %v2580 = vld [vmem:[%s453 + $0x4] sm:$0xf]
    %v2583 = vunpack.c.l.b16 %v2525
    %v2584 = vunpack.c.l.b16 %v2526
    %v2585 = vpack.c.b16 %v2584, %v2583
    %v2587 = vshrl.u32 %v2585, 16
    %v2589 = vshll.u32 %v2585, 16
    %v2591 = vrot.slane %v2589, 1
    %v2592 = vor.u32 %v2587, %v2591
    %v2595 = vunpack.c.l.b16 %v2579
    %v2596 = vunpack.c.l.b16 %v2580
    %v2597 = vpack.c.b16 %v2596, %v2595
    %v2600 = vsel %vm75, %v2592, 0
    %2602 = vmatprep.subr.bf16.mxu0 0
    %2603 = vmatpush1.bf16.msra.mxu0 0
    %2604 = vmatprep.subr.bf16.mxu0 0
    %2605 = vmatpush1.bf16.msra.mxu0 0
    %2606 = vmatprep.subr.bf16.mxu0 0
    %2607 = vmatpush1.bf16.msra.mxu0 0
    %2608 = vmatprep.subr.bf16.mxu0 0
    %2609 = vmatpush1.bf16.msra.mxu0 0
    %2610 = vmatprep.subr.bf16.mxu0 0
    %2611 = vmatpush1.bf16.msra.mxu0 0
    %2612 = vmatprep.subr.bf16.mxu0 0
    %2613 = vmatpush1.bf16.msra.mxu0 0
    %2614 = vmatprep.subr.bf16.mxu0 0
    %2615 = vmatpush1.bf16.msra.mxu0 0
    %2616 = vmatprep.subr.bf16.mxu0 0
    %2617 = vmatpush1.bf16.msra.mxu0 %v2597
    %2618 = vmatprep.subr.bf16.mxu0 0
    %2619 = vmatpush2.bf16.msra.mxu0 0
    %2620 = vmatprep.subr.bf16.mxu0 0
    %2621 = vmatpush2.bf16.msra.mxu0 0
    %2622 = vmatprep.subr.bf16.mxu0 0
    %2623 = vmatpush2.bf16.msra.mxu0 0
    %2624 = vmatprep.subr.bf16.mxu0 0
    %2625 = vmatpush2.bf16.msra.mxu0 0
    %2626 = vmatprep.subr.bf16.mxu0 0
    %2627 = vmatpush2.bf16.msra.mxu0 0
    %2628 = vmatprep.subr.bf16.mxu0 0
    %2629 = vmatpush2.bf16.msra.mxu0 0
    %2630 = vmatprep.subr.bf16.mxu0 0
    %2631 = vmatpush2.bf16.msra.mxu0 0
    %2632 = vmatprep.subr.bf16.mxu0 0
    %2633 = vmatpush2.bf16.msra.mxu0 0
    %2634 = vmatprep.mubr.bf16.mxu0 0
    %2635 = vmatmul.mubr.bf16.gmra.mxu0 %v2600
    %v2636 = vpop.f32.mrf.mxu0
    %v2637 = vadd.f32 0.0, %v2636
    %v2638 = vpop.f32.mrf.mxu0
    %v2639 = vpop.f32.mrf.mxu0
    %v2640 = vpop.f32.mrf.mxu0
    %2641 = vdwg.mxu0
    %v2642 = vadd.f32 %v2578, %v2637
    %v2643 = vld [vmem:[%s518] sm:$0xf]
    %v2644 = vld [vmem:[%s518 + $0x4] sm:$0xf]
    %v2645 = vrot.slane %v2585, 1
    %v2648 = vunpack.c.l.b16 %v2643
    %v2649 = vunpack.c.l.b16 %v2644
    %v2650 = vpack.c.b16 %v2649, %v2648
    %v2653 = vsel %vm75, %v2645, 0
    %2655 = vmatprep.subr.bf16.mxu0 0
    %2656 = vmatpush1.bf16.msra.mxu0 0
    %2657 = vmatprep.subr.bf16.mxu0 0
    %2658 = vmatpush1.bf16.msra.mxu0 0
    %2659 = vmatprep.subr.bf16.mxu0 0
    %2660 = vmatpush1.bf16.msra.mxu0 0
    %2661 = vmatprep.subr.bf16.mxu0 0
    %2662 = vmatpush1.bf16.msra.mxu0 0
    %2663 = vmatprep.subr.bf16.mxu0 0
    %2664 = vmatpush1.bf16.msra.mxu0 0
    %2665 = vmatprep.subr.bf16.mxu0 0
    %2666 = vmatpush1.bf16.msra.mxu0 0
    %2667 = vmatprep.subr.bf16.mxu0 0
    %2668 = vmatpush1.bf16.msra.mxu0 0
    %2669 = vmatprep.subr.bf16.mxu0 0
    %2670 = vmatpush1.bf16.msra.mxu0 %v2650
    %2671 = vmatprep.subr.bf16.mxu0 0
    %2672 = vmatpush2.bf16.msra.mxu0 0
    %2673 = vmatprep.subr.bf16.mxu0 0
    %2674 = vmatpush2.bf16.msra.mxu0 0
    %2675 = vmatprep.subr.bf16.mxu0 0
    %2676 = vmatpush2.bf16.msra.mxu0 0
    %2677 = vmatprep.subr.bf16.mxu0 0
    %2678 = vmatpush2.bf16.msra.mxu0 0
    %2679 = vmatprep.subr.bf16.mxu0 0
    %2680 = vmatpush2.bf16.msra.mxu0 0
    %2681 = vmatprep.subr.bf16.mxu0 0
    %2682 = vmatpush2.bf16.msra.mxu0 0
    %2683 = vmatprep.subr.bf16.mxu0 0
    %2684 = vmatpush2.bf16.msra.mxu0 0
    %2685 = vmatprep.subr.bf16.mxu0 0
    %2686 = vmatpush2.bf16.msra.mxu0 0
    %2687 = vmatprep.mubr.bf16.mxu0 0
    %2688 = vmatmul.mubr.bf16.gmra.mxu0 %v2653
    %v2689 = vpop.f32.mrf.mxu0
    %v2690 = vadd.f32 0.0, %v2689
    %v2691 = vpop.f32.mrf.mxu0
    %v2692 = vpop.f32.mrf.mxu0
    %v2693 = vpop.f32.mrf.mxu0
    %2694 = vdwg.mxu0
    %v2695 = vadd.f32 %v2642, %v2690
    %s2696 = scalar_lea.vmem [#allocation2], 32
    %2697 = vst.msk [vmem:[%s2696] sm:$0xff] %vm572, %v2695
    %v2698 = vsel %vm572, %v2695, 0.0
    %v2699 = vrot.slane %v2698, 4
    %v2700 = vadd.f32 %v2698, %v2699
    %v2701 = vrot.slane %v2700, 2
    %v2702 = vadd.f32 %v2700, %v2701
    %v2703 = vrot.slane %v2702, 1
    %v2704 = vadd.f32 %v2702, %v2703
    %v2705 = vadd.f32 %v2174, %v2704
    %v2706 = vmul.f32 %v2695, %v2695
    %v2707 = vsel %vm572, %v2706, 0.0
    %v2708 = vrot.slane %v2707, 4
    %v2709 = vadd.f32 %v2707, %v2708
    %v2710 = vrot.slane %v2709, 2
    %v2711 = vadd.f32 %v2709, %v2710
    %v2712 = vrot.slane %v2711, 1
    %v2713 = vadd.f32 %v2711, %v2712
    %v2714 = vadd.f32 %v2183, %v2713
    %v2715 = vld [vmem:[%s1993] sm:$0xf]
    %v2716 = vld [vmem:[%s1993 + $0x4] sm:$0x1]
    %v2717 = vld [vmem:[%s2] sm:$0xf]
    %v2718 = vld [vmem:[%s2 + $0x4] sm:$0xf]
    %v2719 = vld [vmem:[%s54] sm:$0xf]
    %v2720 = vld [vmem:[%s54 + $0x4] sm:$0xf]
    %v2723 = vunpack.c.l.b16 %v2715
    %v2724 = vunpack.c.l.b16 %v2716
    %v2725 = vpack.c.b16 %v2724, %v2723
    %v2727 = vshrl.u32 %v2725, 16
    %v2729 = vshll.u32 %v2725, 16
    %v2731 = vrot.slane %v2729, 1
    %v2732 = vor.u32 %v2727, %v2731
    %v2735 = vunpack.c.l.b16 %v2719
    %v2736 = vunpack.c.l.b16 %v2720
    %v2737 = vpack.c.b16 %v2736, %v2735
    %v2740 = vsel %vm75, %v2732, 0
    %2742 = vmatprep.subr.bf16.mxu0 0
    %2743 = vmatpush1.bf16.msra.mxu0 0
    %2744 = vmatprep.subr.bf16.mxu0 0
    %2745 = vmatpush1.bf16.msra.mxu0 0
    %2746 = vmatprep.subr.bf16.mxu0 0
    %2747 = vmatpush1.bf16.msra.mxu0 0
    %2748 = vmatprep.subr.bf16.mxu0 0
    %2749 = vmatpush1.bf16.msra.mxu0 0
    %2750 = vmatprep.subr.bf16.mxu0 0
    %2751 = vmatpush1.bf16.msra.mxu0 0
    %2752 = vmatprep.subr.bf16.mxu0 0
    %2753 = vmatpush1.bf16.msra.mxu0 0
    %2754 = vmatprep.subr.bf16.mxu0 0
    %2755 = vmatpush1.bf16.msra.mxu0 0
    %2756 = vmatprep.subr.bf16.mxu0 0
    %2757 = vmatpush1.bf16.msra.mxu0 %v2737
    %2758 = vmatprep.subr.bf16.mxu0 0
    %2759 = vmatpush2.bf16.msra.mxu0 0
    %2760 = vmatprep.subr.bf16.mxu0 0
    %2761 = vmatpush2.bf16.msra.mxu0 0
    %2762 = vmatprep.subr.bf16.mxu0 0
    %2763 = vmatpush2.bf16.msra.mxu0 0
    %2764 = vmatprep.subr.bf16.mxu0 0
    %2765 = vmatpush2.bf16.msra.mxu0 0
    %2766 = vmatprep.subr.bf16.mxu0 0
    %2767 = vmatpush2.bf16.msra.mxu0 0
    %2768 = vmatprep.subr.bf16.mxu0 0
    %2769 = vmatpush2.bf16.msra.mxu0 0
    %2770 = vmatprep.subr.bf16.mxu0 0
    %2771 = vmatpush2.bf16.msra.mxu0 0
    %2772 = vmatprep.subr.bf16.mxu0 0
    %2773 = vmatpush2.bf16.msra.mxu0 0
    %2774 = vmatprep.mubr.bf16.mxu0 0
    %2775 = vmatmul.mubr.bf16.gmra.mxu0 %v2740
    %v2776 = vpop.f32.mrf.mxu0
    %v2777 = vadd.f32 0.0, %v2776
    %v2778 = vpop.f32.mrf.mxu0
    %v2779 = vpop.f32.mrf.mxu0
    %v2780 = vpop.f32.mrf.mxu0
    %2781 = vdwg.mxu0
    %v2784 = vunpack.c.l.b16 %v2717
    %v2785 = vunpack.c.l.b16 %v2718
    %v2786 = vpack.c.b16 %v2785, %v2784
    %v2789 = vsel %vm75, %v2715, 0
    %2791 = vmatprep.subr.bf16.mxu0 0
    %2792 = vmatpush1.bf16.msra.mxu0 0
    %2793 = vmatprep.subr.bf16.mxu0 0
    %2794 = vmatpush1.bf16.msra.mxu0 0
    %2795 = vmatprep.subr.bf16.mxu0 0
    %2796 = vmatpush1.bf16.msra.mxu0 0
    %2797 = vmatprep.subr.bf16.mxu0 0
    %2798 = vmatpush1.bf16.msra.mxu0 0
    %2799 = vmatprep.subr.bf16.mxu0 0
    %2800 = vmatpush1.bf16.msra.mxu0 0
    %2801 = vmatprep.subr.bf16.mxu0 0
    %2802 = vmatpush1.bf16.msra.mxu0 0
    %2803 = vmatprep.subr.bf16.mxu0 0
    %2804 = vmatpush1.bf16.msra.mxu0 0
    %2805 = vmatprep.subr.bf16.mxu0 0
    %2806 = vmatpush1.bf16.msra.mxu0 %v2786
    %2807 = vmatprep.subr.bf16.mxu0 0
    %2808 = vmatpush2.bf16.msra.mxu0 0
    %2809 = vmatprep.subr.bf16.mxu0 0
    %2810 = vmatpush2.bf16.msra.mxu0 0
    %2811 = vmatprep.subr.bf16.mxu0 0
    %2812 = vmatpush2.bf16.msra.mxu0 0
    %2813 = vmatprep.subr.bf16.mxu0 0
    %2814 = vmatpush2.bf16.msra.mxu0 0
    %2815 = vmatprep.subr.bf16.mxu0 0
    %2816 = vmatpush2.bf16.msra.mxu0 0
    %2817 = vmatprep.subr.bf16.mxu0 0
    %2818 = vmatpush2.bf16.msra.mxu0 0
    %2819 = vmatprep.subr.bf16.mxu0 0
    %2820 = vmatpush2.bf16.msra.mxu0 0
    %2821 = vmatprep.subr.bf16.mxu0 0
    %2822 = vmatpush2.bf16.msra.mxu0 0
    %2823 = vmatprep.mubr.bf16.mxu0 0
    %2824 = vmatmul.mubr.bf16.gmra.mxu0 %v2789
    %v2825 = vpop.f32.mrf.mxu0
    %v2826 = vadd.f32 %v2777, %v2825
    %v2827 = vpop.f32.mrf.mxu0
    %v2828 = vpop.f32.mrf.mxu0
    %v2829 = vpop.f32.mrf.mxu0
    %2830 = vdwg.mxu0
    %v2831 = vld [vmem:[%s168] sm:$0xf]
    %v2832 = vld [vmem:[%s168 + $0x4] sm:$0xf]
    %v2833 = vrot.slane %v2725, 1
    %v2836 = vunpack.c.l.b16 %v2831
    %v2837 = vunpack.c.l.b16 %v2832
    %v2838 = vpack.c.b16 %v2837, %v2836
    %v2841 = vsel %vm75, %v2833, 0
    %2843 = vmatprep.subr.bf16.mxu0 0
    %2844 = vmatpush1.bf16.msra.mxu0 0
    %2845 = vmatprep.subr.bf16.mxu0 0
    %2846 = vmatpush1.bf16.msra.mxu0 0
    %2847 = vmatprep.subr.bf16.mxu0 0
    %2848 = vmatpush1.bf16.msra.mxu0 0
    %2849 = vmatprep.subr.bf16.mxu0 0
    %2850 = vmatpush1.bf16.msra.mxu0 0
    %2851 = vmatprep.subr.bf16.mxu0 0
    %2852 = vmatpush1.bf16.msra.mxu0 0
    %2853 = vmatprep.subr.bf16.mxu0 0
    %2854 = vmatpush1.bf16.msra.mxu0 0
    %2855 = vmatprep.subr.bf16.mxu0 0
    %2856 = vmatpush1.bf16.msra.mxu0 0
    %2857 = vmatprep.subr.bf16.mxu0 0
    %2858 = vmatpush1.bf16.msra.mxu0 %v2838
    %2859 = vmatprep.subr.bf16.mxu0 0
    %2860 = vmatpush2.bf16.msra.mxu0 0
    %2861 = vmatprep.subr.bf16.mxu0 0
    %2862 = vmatpush2.bf16.msra.mxu0 0
    %2863 = vmatprep.subr.bf16.mxu0 0
    %2864 = vmatpush2.bf16.msra.mxu0 0
    %2865 = vmatprep.subr.bf16.mxu0 0
    %2866 = vmatpush2.bf16.msra.mxu0 0
    %2867 = vmatprep.subr.bf16.mxu0 0
    %2868 = vmatpush2.bf16.msra.mxu0 0
    %2869 = vmatprep.subr.bf16.mxu0 0
    %2870 = vmatpush2.bf16.msra.mxu0 0
    %2871 = vmatprep.subr.bf16.mxu0 0
    %2872 = vmatpush2.bf16.msra.mxu0 0
    %2873 = vmatprep.subr.bf16.mxu0 0
    %2874 = vmatpush2.bf16.msra.mxu0 0
    %2875 = vmatprep.mubr.bf16.mxu0 0
    %2876 = vmatmul.mubr.bf16.gmra.mxu0 %v2841
    %v2877 = vpop.f32.mrf.mxu0
    %v2878 = vadd.f32 0.0, %v2877
    %v2879 = vpop.f32.mrf.mxu0
    %v2880 = vpop.f32.mrf.mxu0
    %v2881 = vpop.f32.mrf.mxu0
    %2882 = vdwg.mxu0
    %v2883 = vadd.f32 %v2826, %v2878
    %v2884 = vld [vmem:[%s2524] sm:$0xf]
    %v2885 = vld [vmem:[%s2524 + $0x4] sm:$0x1]
    %v2886 = vld [vmem:[%s225] sm:$0xf]
    %v2887 = vld [vmem:[%s225 + $0x4] sm:$0xf]
    %v2890 = vunpack.c.l.b16 %v2886
    %v2891 = vunpack.c.l.b16 %v2887
    %v2892 = vpack.c.b16 %v2891, %v2890
    %v2895 = vsel %vm75, %v2884, 0
    %2897 = vmatprep.subr.bf16.mxu0 0
    %2898 = vmatpush1.bf16.msra.mxu0 0
    %2899 = vmatprep.subr.bf16.mxu0 0
    %2900 = vmatpush1.bf16.msra.mxu0 0
    %2901 = vmatprep.subr.bf16.mxu0 0
    %2902 = vmatpush1.bf16.msra.mxu0 0
    %2903 = vmatprep.subr.bf16.mxu0 0
    %2904 = vmatpush1.bf16.msra.mxu0 0
    %2905 = vmatprep.subr.bf16.mxu0 0
    %2906 = vmatpush1.bf16.msra.mxu0 0
    %2907 = vmatprep.subr.bf16.mxu0 0
    %2908 = vmatpush1.bf16.msra.mxu0 0
    %2909 = vmatprep.subr.bf16.mxu0 0
    %2910 = vmatpush1.bf16.msra.mxu0 0
    %2911 = vmatprep.subr.bf16.mxu0 0
    %2912 = vmatpush1.bf16.msra.mxu0 %v2892
    %2913 = vmatprep.subr.bf16.mxu0 0
    %2914 = vmatpush2.bf16.msra.mxu0 0
    %2915 = vmatprep.subr.bf16.mxu0 0
    %2916 = vmatpush2.bf16.msra.mxu0 0
    %2917 = vmatprep.subr.bf16.mxu0 0
    %2918 = vmatpush2.bf16.msra.mxu0 0
    %2919 = vmatprep.subr.bf16.mxu0 0
    %2920 = vmatpush2.bf16.msra.mxu0 0
    %2921 = vmatprep.subr.bf16.mxu0 0
    %2922 = vmatpush2.bf16.msra.mxu0 0
    %2923 = vmatprep.subr.bf16.mxu0 0
    %2924 = vmatpush2.bf16.msra.mxu0 0
    %2925 = vmatprep.subr.bf16.mxu0 0
    %2926 = vmatpush2.bf16.msra.mxu0 0
    %2927 = vmatprep.subr.bf16.mxu0 0
    %2928 = vmatpush2.bf16.msra.mxu0 0
    %2929 = vmatprep.mubr.bf16.mxu0 0
    %2930 = vmatmul.mubr.bf16.gmra.mxu0 %v2895
    %v2931 = vpop.f32.mrf.mxu0
    %v2932 = vadd.f32 0.0, %v2931
    %v2933 = vpop.f32.mrf.mxu0
    %v2934 = vpop.f32.mrf.mxu0
    %v2935 = vpop.f32.mrf.mxu0
    %2936 = vdwg.mxu0
    %v2937 = vadd.f32 %v2883, %v2932
    %v2938 = vld [vmem:[%s278] sm:$0xf]
    %v2939 = vld [vmem:[%s278 + $0x4] sm:$0xf]
    %v2942 = vunpack.c.l.b16 %v2884
    %v2943 = vunpack.c.l.b16 %v2885
    %v2944 = vpack.c.b16 %v2943, %v2942
    %v2946 = vshrl.u32 %v2944, 16
    %v2948 = vshll.u32 %v2944, 16
    %v2950 = vrot.slane %v2948, 1
    %v2951 = vor.u32 %v2946, %v2950
    %v2954 = vunpack.c.l.b16 %v2938
    %v2955 = vunpack.c.l.b16 %v2939
    %v2956 = vpack.c.b16 %v2955, %v2954
    %v2959 = vsel %vm75, %v2951, 0
    %2961 = vmatprep.subr.bf16.mxu0 0
    %2962 = vmatpush1.bf16.msra.mxu0 0
    %2963 = vmatprep.subr.bf16.mxu0 0
    %2964 = vmatpush1.bf16.msra.mxu0 0
    %2965 = vmatprep.subr.bf16.mxu0 0
    %2966 = vmatpush1.bf16.msra.mxu0 0
    %2967 = vmatprep.subr.bf16.mxu0 0
    %2968 = vmatpush1.bf16.msra.mxu0 0
    %2969 = vmatprep.subr.bf16.mxu0 0
    %2970 = vmatpush1.bf16.msra.mxu0 0
    %2971 = vmatprep.subr.bf16.mxu0 0
    %2972 = vmatpush1.bf16.msra.mxu0 0
    %2973 = vmatprep.subr.bf16.mxu0 0
    %2974 = vmatpush1.bf16.msra.mxu0 0
    %2975 = vmatprep.subr.bf16.mxu0 0
    %2976 = vmatpush1.bf16.msra.mxu0 %v2956
    %2977 = vmatprep.subr.bf16.mxu0 0
    %2978 = vmatpush2.bf16.msra.mxu0 0
    %2979 = vmatprep.subr.bf16.mxu0 0
    %2980 = vmatpush2.bf16.msra.mxu0 0
    %2981 = vmatprep.subr.bf16.mxu0 0
    %2982 = vmatpush2.bf16.msra.mxu0 0
    %2983 = vmatprep.subr.bf16.mxu0 0
    %2984 = vmatpush2.bf16.msra.mxu0 0
    %2985 = vmatprep.subr.bf16.mxu0 0
    %2986 = vmatpush2.bf16.msra.mxu0 0
    %2987 = vmatprep.subr.bf16.mxu0 0
    %2988 = vmatpush2.bf16.msra.mxu0 0
    %2989 = vmatprep.subr.bf16.mxu0 0
    %2990 = vmatpush2.bf16.msra.mxu0 0
    %2991 = vmatprep.subr.bf16.mxu0 0
    %2992 = vmatpush2.bf16.msra.mxu0 0
    %2993 = vmatprep.mubr.bf16.mxu0 0
    %2994 = vmatmul.mubr.bf16.gmra.mxu0 %v2959
    %v2995 = vpop.f32.mrf.mxu0
    %v2996 = vadd.f32 0.0, %v2995
    %v2997 = vpop.f32.mrf.mxu0
    %v2998 = vpop.f32.mrf.mxu0
    %v2999 = vpop.f32.mrf.mxu0
    %3000 = vdwg.mxu0
    %v3001 = vadd.f32 %v2937, %v2996
    %v3002 = vld [vmem:[%s343] sm:$0xf]
    %v3003 = vld [vmem:[%s343 + $0x4] sm:$0xf]
    %v3004 = vrot.slane %v2944, 1
    %v3007 = vunpack.c.l.b16 %v3002
    %v3008 = vunpack.c.l.b16 %v3003
    %v3009 = vpack.c.b16 %v3008, %v3007
    %v3012 = vsel %vm75, %v3004, 0
    %3014 = vmatprep.subr.bf16.mxu0 0
    %3015 = vmatpush1.bf16.msra.mxu0 0
    %3016 = vmatprep.subr.bf16.mxu0 0
    %3017 = vmatpush1.bf16.msra.mxu0 0
    %3018 = vmatprep.subr.bf16.mxu0 0
    %3019 = vmatpush1.bf16.msra.mxu0 0
    %3020 = vmatprep.subr.bf16.mxu0 0
    %3021 = vmatpush1.bf16.msra.mxu0 0
    %3022 = vmatprep.subr.bf16.mxu0 0
    %3023 = vmatpush1.bf16.msra.mxu0 0
    %3024 = vmatprep.subr.bf16.mxu0 0
    %3025 = vmatpush1.bf16.msra.mxu0 0
    %3026 = vmatprep.subr.bf16.mxu0 0
    %3027 = vmatpush1.bf16.msra.mxu0 0
    %3028 = vmatprep.subr.bf16.mxu0 0
    %3029 = vmatpush1.bf16.msra.mxu0 %v3009
    %3030 = vmatprep.subr.bf16.mxu0 0
    %3031 = vmatpush2.bf16.msra.mxu0 0
    %3032 = vmatprep.subr.bf16.mxu0 0
    %3033 = vmatpush2.bf16.msra.mxu0 0
    %3034 = vmatprep.subr.bf16.mxu0 0
    %3035 = vmatpush2.bf16.msra.mxu0 0
    %3036 = vmatprep.subr.bf16.mxu0 0
    %3037 = vmatpush2.bf16.msra.mxu0 0
    %3038 = vmatprep.subr.bf16.mxu0 0
    %3039 = vmatpush2.bf16.msra.mxu0 0
    %3040 = vmatprep.subr.bf16.mxu0 0
    %3041 = vmatpush2.bf16.msra.mxu0 0
    %3042 = vmatprep.subr.bf16.mxu0 0
    %3043 = vmatpush2.bf16.msra.mxu0 0
    %3044 = vmatprep.subr.bf16.mxu0 0
    %3045 = vmatpush2.bf16.msra.mxu0 0
    %3046 = vmatprep.mubr.bf16.mxu0 0
    %3047 = vmatmul.mubr.bf16.gmra.mxu0 %v3012
    %v3048 = vpop.f32.mrf.mxu0
    %v3049 = vadd.f32 0.0, %v3048
    %v3050 = vpop.f32.mrf.mxu0
    %v3051 = vpop.f32.mrf.mxu0
    %v3052 = vpop.f32.mrf.mxu0
    %3053 = vdwg.mxu0
    %v3054 = vadd.f32 %v3001, %v3049
    %s3055 = scalar_lea.vmem %s0, 56
    %v3056 = vld [vmem:[%s3055] sm:$0xf]
    %v3057 = vld [vmem:[%s3055 + $0x4] sm:$0x1]
    %v3058 = vld [vmem:[%s400] sm:$0xf]
    %v3059 = vld [vmem:[%s400 + $0x4] sm:$0xf]
    %v3062 = vunpack.c.l.b16 %v3058
    %v3063 = vunpack.c.l.b16 %v3059
    %v3064 = vpack.c.b16 %v3063, %v3062
    %v3067 = vsel %vm75, %v3056, 0
    %3069 = vmatprep.subr.bf16.mxu0 0
    %3070 = vmatpush1.bf16.msra.mxu0 0
    %3071 = vmatprep.subr.bf16.mxu0 0
    %3072 = vmatpush1.bf16.msra.mxu0 0
    %3073 = vmatprep.subr.bf16.mxu0 0
    %3074 = vmatpush1.bf16.msra.mxu0 0
    %3075 = vmatprep.subr.bf16.mxu0 0
    %3076 = vmatpush1.bf16.msra.mxu0 0
    %3077 = vmatprep.subr.bf16.mxu0 0
    %3078 = vmatpush1.bf16.msra.mxu0 0
    %3079 = vmatprep.subr.bf16.mxu0 0
    %3080 = vmatpush1.bf16.msra.mxu0 0
    %3081 = vmatprep.subr.bf16.mxu0 0
    %3082 = vmatpush1.bf16.msra.mxu0 0
    %3083 = vmatprep.subr.bf16.mxu0 0
    %3084 = vmatpush1.bf16.msra.mxu0 %v3064
    %3085 = vmatprep.subr.bf16.mxu0 0
    %3086 = vmatpush2.bf16.msra.mxu0 0
    %3087 = vmatprep.subr.bf16.mxu0 0
    %3088 = vmatpush2.bf16.msra.mxu0 0
    %3089 = vmatprep.subr.bf16.mxu0 0
    %3090 = vmatpush2.bf16.msra.mxu0 0
    %3091 = vmatprep.subr.bf16.mxu0 0
    %3092 = vmatpush2.bf16.msra.mxu0 0
    %3093 = vmatprep.subr.bf16.mxu0 0
    %3094 = vmatpush2.bf16.msra.mxu0 0
    %3095 = vmatprep.subr.bf16.mxu0 0
    %3096 = vmatpush2.bf16.msra.mxu0 0
    %3097 = vmatprep.subr.bf16.mxu0 0
    %3098 = vmatpush2.bf16.msra.mxu0 0
    %3099 = vmatprep.subr.bf16.mxu0 0
    %3100 = vmatpush2.bf16.msra.mxu0 0
    %3101 = vmatprep.mubr.bf16.mxu0 0
    %3102 = vmatmul.mubr.bf16.gmra.mxu0 %v3067
    %v3103 = vpop.f32.mrf.mxu0
    %v3104 = vadd.f32 0.0, %v3103
    %v3105 = vpop.f32.mrf.mxu0
    %v3106 = vpop.f32.mrf.mxu0
    %v3107 = vpop.f32.mrf.mxu0
    %3108 = vdwg.mxu0
    %v3109 = vadd.f32 %v3054, %v3104
    %v3110 = vld [vmem:[%s453] sm:$0xf]
    %v3111 = vld [vmem:[%s453 + $0x4] sm:$0xf]
    %v3114 = vunpack.c.l.b16 %v3056
    %v3115 = vunpack.c.l.b16 %v3057
    %v3116 = vpack.c.b16 %v3115, %v3114
    %v3118 = vshrl.u32 %v3116, 16
    %v3120 = vshll.u32 %v3116, 16
    %v3122 = vrot.slane %v3120, 1
    %v3123 = vor.u32 %v3118, %v3122
    %v3126 = vunpack.c.l.b16 %v3110
    %v3127 = vunpack.c.l.b16 %v3111
    %v3128 = vpack.c.b16 %v3127, %v3126
    %v3131 = vsel %vm75, %v3123, 0
    %3133 = vmatprep.subr.bf16.mxu0 0
    %3134 = vmatpush1.bf16.msra.mxu0 0
    %3135 = vmatprep.subr.bf16.mxu0 0
    %3136 = vmatpush1.bf16.msra.mxu0 0
    %3137 = vmatprep.subr.bf16.mxu0 0
    %3138 = vmatpush1.bf16.msra.mxu0 0
    %3139 = vmatprep.subr.bf16.mxu0 0
    %3140 = vmatpush1.bf16.msra.mxu0 0
    %3141 = vmatprep.subr.bf16.mxu0 0
    %3142 = vmatpush1.bf16.msra.mxu0 0
    %3143 = vmatprep.subr.bf16.mxu0 0
    %3144 = vmatpush1.bf16.msra.mxu0 0
    %3145 = vmatprep.subr.bf16.mxu0 0
    %3146 = vmatpush1.bf16.msra.mxu0 0
    %3147 = vmatprep.subr.bf16.mxu0 0
    %3148 = vmatpush1.bf16.msra.mxu0 %v3128
    %3149 = vmatprep.subr.bf16.mxu0 0
    %3150 = vmatpush2.bf16.msra.mxu0 0
    %3151 = vmatprep.subr.bf16.mxu0 0
    %3152 = vmatpush2.bf16.msra.mxu0 0
    %3153 = vmatprep.subr.bf16.mxu0 0
    %3154 = vmatpush2.bf16.msra.mxu0 0
    %3155 = vmatprep.subr.bf16.mxu0 0
    %3156 = vmatpush2.bf16.msra.mxu0 0
    %3157 = vmatprep.subr.bf16.mxu0 0
    %3158 = vmatpush2.bf16.msra.mxu0 0
    %3159 = vmatprep.subr.bf16.mxu0 0
    %3160 = vmatpush2.bf16.msra.mxu0 0
    %3161 = vmatprep.subr.bf16.mxu0 0
    %3162 = vmatpush2.bf16.msra.mxu0 0
    %3163 = vmatprep.subr.bf16.mxu0 0
    %3164 = vmatpush2.bf16.msra.mxu0 0
    %3165 = vmatprep.mubr.bf16.mxu0 0
    %3166 = vmatmul.mubr.bf16.gmra.mxu0 %v3131
    %v3167 = vpop.f32.mrf.mxu0
    %v3168 = vadd.f32 0.0, %v3167
    %v3169 = vpop.f32.mrf.mxu0
    %v3170 = vpop.f32.mrf.mxu0
    %v3171 = vpop.f32.mrf.mxu0
    %3172 = vdwg.mxu0
    %v3173 = vadd.f32 %v3109, %v3168
    %v3174 = vld [vmem:[%s518] sm:$0xf]
    %v3175 = vld [vmem:[%s518 + $0x4] sm:$0xf]
    %v3176 = vrot.slane %v3116, 1
    %v3179 = vunpack.c.l.b16 %v3174
    %v3180 = vunpack.c.l.b16 %v3175
    %v3181 = vpack.c.b16 %v3180, %v3179
    %v3184 = vsel %vm75, %v3176, 0
    %3186 = vmatprep.subr.bf16.mxu0 0
    %3187 = vmatpush1.bf16.msra.mxu0 0
    %3188 = vmatprep.subr.bf16.mxu0 0
    %3189 = vmatpush1.bf16.msra.mxu0 0
    %3190 = vmatprep.subr.bf16.mxu0 0
    %3191 = vmatpush1.bf16.msra.mxu0 0
    %3192 = vmatprep.subr.bf16.mxu0 0
    %3193 = vmatpush1.bf16.msra.mxu0 0
    %3194 = vmatprep.subr.bf16.mxu0 0
    %3195 = vmatpush1.bf16.msra.mxu0 0
    %3196 = vmatprep.subr.bf16.mxu0 0
    %3197 = vmatpush1.bf16.msra.mxu0 0
    %3198 = vmatprep.subr.bf16.mxu0 0
    %3199 = vmatpush1.bf16.msra.mxu0 0
    %3200 = vmatprep.subr.bf16.mxu0 0
    %3201 = vmatpush1.bf16.msra.mxu0 %v3181
    %3202 = vmatprep.subr.bf16.mxu0 0
    %3203 = vmatpush2.bf16.msra.mxu0 0
    %3204 = vmatprep.subr.bf16.mxu0 0
    %3205 = vmatpush2.bf16.msra.mxu0 0
    %3206 = vmatprep.subr.bf16.mxu0 0
    %3207 = vmatpush2.bf16.msra.mxu0 0
    %3208 = vmatprep.subr.bf16.mxu0 0
    %3209 = vmatpush2.bf16.msra.mxu0 0
    %3210 = vmatprep.subr.bf16.mxu0 0
    %3211 = vmatpush2.bf16.msra.mxu0 0
    %3212 = vmatprep.subr.bf16.mxu0 0
    %3213 = vmatpush2.bf16.msra.mxu0 0
    %3214 = vmatprep.subr.bf16.mxu0 0
    %3215 = vmatpush2.bf16.msra.mxu0 0
    %3216 = vmatprep.subr.bf16.mxu0 0
    %3217 = vmatpush2.bf16.msra.mxu0 0
    %3218 = vmatprep.mubr.bf16.mxu0 0
    %3219 = vmatmul.mubr.bf16.gmra.mxu0 %v3184
    %v3220 = vpop.f32.mrf.mxu0
    %v3221 = vadd.f32 0.0, %v3220
    %v3222 = vpop.f32.mrf.mxu0
    %v3223 = vpop.f32.mrf.mxu0
    %v3224 = vpop.f32.mrf.mxu0
    %3225 = vdwg.mxu0
    %v3226 = vadd.f32 %v3173, %v3221
    %s3227 = scalar_lea.vmem [#allocation2], 40
    %3228 = vst.msk [vmem:[%s3227] sm:$0xff] %vm572, %v3226
    %v3229 = vsel %vm572, %v3226, 0.0
    %v3230 = vrot.slane %v3229, 4
    %v3231 = vadd.f32 %v3229, %v3230
    %v3232 = vrot.slane %v3231, 2
    %v3233 = vadd.f32 %v3231, %v3232
    %v3234 = vrot.slane %v3233, 1
    %v3235 = vadd.f32 %v3233, %v3234
    %v3236 = vadd.f32 %v2705, %v3235
    %v3237 = vmul.f32 %v3226, %v3226
    %v3238 = vsel %vm572, %v3237, 0.0
    %v3239 = vrot.slane %v3238, 4
    %v3240 = vadd.f32 %v3238, %v3239
    %v3241 = vrot.slane %v3240, 2
    %v3242 = vadd.f32 %v3240, %v3241
    %v3243 = vrot.slane %v3242, 1
    %v3244 = vadd.f32 %v3242, %v3243
    %v3245 = vadd.f32 %v2714, %v3244
    %v3246 = vld [vmem:[%s2524] sm:$0xf]
    %v3247 = vld [vmem:[%s2524 + $0x4] sm:$0x1]
    %v3248 = vld [vmem:[%s2] sm:$0xf]
    %v3249 = vld [vmem:[%s2 + $0x4] sm:$0xf]
    %v3250 = vld [vmem:[%s54] sm:$0xf]
    %v3251 = vld [vmem:[%s54 + $0x4] sm:$0xf]
    %v3254 = vunpack.c.l.b16 %v3246
    %v3255 = vunpack.c.l.b16 %v3247
    %v3256 = vpack.c.b16 %v3255, %v3254
    %v3258 = vshrl.u32 %v3256, 16
    %v3260 = vshll.u32 %v3256, 16
    %v3262 = vrot.slane %v3260, 1
    %v3263 = vor.u32 %v3258, %v3262
    %v3266 = vunpack.c.l.b16 %v3250
    %v3267 = vunpack.c.l.b16 %v3251
    %v3268 = vpack.c.b16 %v3267, %v3266
    %v3271 = vsel %vm75, %v3263, 0
    %3273 = vmatprep.subr.bf16.mxu0 0
    %3274 = vmatpush1.bf16.msra.mxu0 0
    %3275 = vmatprep.subr.bf16.mxu0 0
    %3276 = vmatpush1.bf16.msra.mxu0 0
    %3277 = vmatprep.subr.bf16.mxu0 0
    %3278 = vmatpush1.bf16.msra.mxu0 0
    %3279 = vmatprep.subr.bf16.mxu0 0
    %3280 = vmatpush1.bf16.msra.mxu0 0
    %3281 = vmatprep.subr.bf16.mxu0 0
    %3282 = vmatpush1.bf16.msra.mxu0 0
    %3283 = vmatprep.subr.bf16.mxu0 0
    %3284 = vmatpush1.bf16.msra.mxu0 0
    %3285 = vmatprep.subr.bf16.mxu0 0
    %3286 = vmatpush1.bf16.msra.mxu0 0
    %3287 = vmatprep.subr.bf16.mxu0 0
    %3288 = vmatpush1.bf16.msra.mxu0 %v3268
    %3289 = vmatprep.subr.bf16.mxu0 0
    %3290 = vmatpush2.bf16.msra.mxu0 0
    %3291 = vmatprep.subr.bf16.mxu0 0
    %3292 = vmatpush2.bf16.msra.mxu0 0
    %3293 = vmatprep.subr.bf16.mxu0 0
    %3294 = vmatpush2.bf16.msra.mxu0 0
    %3295 = vmatprep.subr.bf16.mxu0 0
    %3296 = vmatpush2.bf16.msra.mxu0 0
    %3297 = vmatprep.subr.bf16.mxu0 0
    %3298 = vmatpush2.bf16.msra.mxu0 0
    %3299 = vmatprep.subr.bf16.mxu0 0
    %3300 = vmatpush2.bf16.msra.mxu0 0
    %3301 = vmatprep.subr.bf16.mxu0 0
    %3302 = vmatpush2.bf16.msra.mxu0 0
    %3303 = vmatprep.subr.bf16.mxu0 0
    %3304 = vmatpush2.bf16.msra.mxu0 0
    %3305 = vmatprep.mubr.bf16.mxu0 0
    %3306 = vmatmul.mubr.bf16.gmra.mxu0 %v3271
    %v3307 = vpop.f32.mrf.mxu0
    %v3308 = vadd.f32 0.0, %v3307
    %v3309 = vpop.f32.mrf.mxu0
    %v3310 = vpop.f32.mrf.mxu0
    %v3311 = vpop.f32.mrf.mxu0
    %3312 = vdwg.mxu0
    %v3315 = vunpack.c.l.b16 %v3248
    %v3316 = vunpack.c.l.b16 %v3249
    %v3317 = vpack.c.b16 %v3316, %v3315
    %v3320 = vsel %vm75, %v3246, 0
    %3322 = vmatprep.subr.bf16.mxu0 0
    %3323 = vmatpush1.bf16.msra.mxu0 0
    %3324 = vmatprep.subr.bf16.mxu0 0
    %3325 = vmatpush1.bf16.msra.mxu0 0
    %3326 = vmatprep.subr.bf16.mxu0 0
    %3327 = vmatpush1.bf16.msra.mxu0 0
    %3328 = vmatprep.subr.bf16.mxu0 0
    %3329 = vmatpush1.bf16.msra.mxu0 0
    %3330 = vmatprep.subr.bf16.mxu0 0
    %3331 = vmatpush1.bf16.msra.mxu0 0
    %3332 = vmatprep.subr.bf16.mxu0 0
    %3333 = vmatpush1.bf16.msra.mxu0 0
    %3334 = vmatprep.subr.bf16.mxu0 0
    %3335 = vmatpush1.bf16.msra.mxu0 0
    %3336 = vmatprep.subr.bf16.mxu0 0
    %3337 = vmatpush1.bf16.msra.mxu0 %v3317
    %3338 = vmatprep.subr.bf16.mxu0 0
    %3339 = vmatpush2.bf16.msra.mxu0 0
    %3340 = vmatprep.subr.bf16.mxu0 0
    %3341 = vmatpush2.bf16.msra.mxu0 0
    %3342 = vmatprep.subr.bf16.mxu0 0
    %3343 = vmatpush2.bf16.msra.mxu0 0
    %3344 = vmatprep.subr.bf16.mxu0 0
    %3345 = vmatpush2.bf16.msra.mxu0 0
    %3346 = vmatprep.subr.bf16.mxu0 0
    %3347 = vmatpush2.bf16.msra.mxu0 0
    %3348 = vmatprep.subr.bf16.mxu0 0
    %3349 = vmatpush2.bf16.msra.mxu0 0
    %3350 = vmatprep.subr.bf16.mxu0 0
    %3351 = vmatpush2.bf16.msra.mxu0 0
    %3352 = vmatprep.subr.bf16.mxu0 0
    %3353 = vmatpush2.bf16.msra.mxu0 0
    %3354 = vmatprep.mubr.bf16.mxu0 0
    %3355 = vmatmul.mubr.bf16.gmra.mxu0 %v3320
    %v3356 = vpop.f32.mrf.mxu0
    %v3357 = vadd.f32 %v3308, %v3356
    %v3358 = vpop.f32.mrf.mxu0
    %v3359 = vpop.f32.mrf.mxu0
    %v3360 = vpop.f32.mrf.mxu0
    %3361 = vdwg.mxu0
    %v3362 = vld [vmem:[%s168] sm:$0xf]
    %v3363 = vld [vmem:[%s168 + $0x4] sm:$0xf]
    %v3364 = vrot.slane %v3256, 1
    %v3367 = vunpack.c.l.b16 %v3362
    %v3368 = vunpack.c.l.b16 %v3363
    %v3369 = vpack.c.b16 %v3368, %v3367
    %v3372 = vsel %vm75, %v3364, 0
    %3374 = vmatprep.subr.bf16.mxu0 0
    %3375 = vmatpush1.bf16.msra.mxu0 0
    %3376 = vmatprep.subr.bf16.mxu0 0
    %3377 = vmatpush1.bf16.msra.mxu0 0
    %3378 = vmatprep.subr.bf16.mxu0 0
    %3379 = vmatpush1.bf16.msra.mxu0 0
    %3380 = vmatprep.subr.bf16.mxu0 0
    %3381 = vmatpush1.bf16.msra.mxu0 0
    %3382 = vmatprep.subr.bf16.mxu0 0
    %3383 = vmatpush1.bf16.msra.mxu0 0
    %3384 = vmatprep.subr.bf16.mxu0 0
    %3385 = vmatpush1.bf16.msra.mxu0 0
    %3386 = vmatprep.subr.bf16.mxu0 0
    %3387 = vmatpush1.bf16.msra.mxu0 0
    %3388 = vmatprep.subr.bf16.mxu0 0
    %3389 = vmatpush1.bf16.msra.mxu0 %v3369
    %3390 = vmatprep.subr.bf16.mxu0 0
    %3391 = vmatpush2.bf16.msra.mxu0 0
    %3392 = vmatprep.subr.bf16.mxu0 0
    %3393 = vmatpush2.bf16.msra.mxu0 0
    %3394 = vmatprep.subr.bf16.mxu0 0
    %3395 = vmatpush2.bf16.msra.mxu0 0
    %3396 = vmatprep.subr.bf16.mxu0 0
    %3397 = vmatpush2.bf16.msra.mxu0 0
    %3398 = vmatprep.subr.bf16.mxu0 0
    %3399 = vmatpush2.bf16.msra.mxu0 0
    %3400 = vmatprep.subr.bf16.mxu0 0
    %3401 = vmatpush2.bf16.msra.mxu0 0
    %3402 = vmatprep.subr.bf16.mxu0 0
    %3403 = vmatpush2.bf16.msra.mxu0 0
    %3404 = vmatprep.subr.bf16.mxu0 0
    %3405 = vmatpush2.bf16.msra.mxu0 0
    %3406 = vmatprep.mubr.bf16.mxu0 0
    %3407 = vmatmul.mubr.bf16.gmra.mxu0 %v3372
    %v3408 = vpop.f32.mrf.mxu0
    %v3409 = vadd.f32 0.0, %v3408
    %v3410 = vpop.f32.mrf.mxu0
    %v3411 = vpop.f32.mrf.mxu0
    %v3412 = vpop.f32.mrf.mxu0
    %3413 = vdwg.mxu0
    %v3414 = vadd.f32 %v3357, %v3409
    %v3415 = vld [vmem:[%s3055] sm:$0xf]
    %v3416 = vld [vmem:[%s3055 + $0x4] sm:$0x1]
    %v3417 = vld [vmem:[%s225] sm:$0xf]
    %v3418 = vld [vmem:[%s225 + $0x4] sm:$0xf]
    %v3421 = vunpack.c.l.b16 %v3417
    %v3422 = vunpack.c.l.b16 %v3418
    %v3423 = vpack.c.b16 %v3422, %v3421
    %v3426 = vsel %vm75, %v3415, 0
    %3428 = vmatprep.subr.bf16.mxu0 0
    %3429 = vmatpush1.bf16.msra.mxu0 0
    %3430 = vmatprep.subr.bf16.mxu0 0
    %3431 = vmatpush1.bf16.msra.mxu0 0
    %3432 = vmatprep.subr.bf16.mxu0 0
    %3433 = vmatpush1.bf16.msra.mxu0 0
    %3434 = vmatprep.subr.bf16.mxu0 0
    %3435 = vmatpush1.bf16.msra.mxu0 0
    %3436 = vmatprep.subr.bf16.mxu0 0
    %3437 = vmatpush1.bf16.msra.mxu0 0
    %3438 = vmatprep.subr.bf16.mxu0 0
    %3439 = vmatpush1.bf16.msra.mxu0 0
    %3440 = vmatprep.subr.bf16.mxu0 0
    %3441 = vmatpush1.bf16.msra.mxu0 0
    %3442 = vmatprep.subr.bf16.mxu0 0
    %3443 = vmatpush1.bf16.msra.mxu0 %v3423
    %3444 = vmatprep.subr.bf16.mxu0 0
    %3445 = vmatpush2.bf16.msra.mxu0 0
    %3446 = vmatprep.subr.bf16.mxu0 0
    %3447 = vmatpush2.bf16.msra.mxu0 0
    %3448 = vmatprep.subr.bf16.mxu0 0
    %3449 = vmatpush2.bf16.msra.mxu0 0
    %3450 = vmatprep.subr.bf16.mxu0 0
    %3451 = vmatpush2.bf16.msra.mxu0 0
    %3452 = vmatprep.subr.bf16.mxu0 0
    %3453 = vmatpush2.bf16.msra.mxu0 0
    %3454 = vmatprep.subr.bf16.mxu0 0
    %3455 = vmatpush2.bf16.msra.mxu0 0
    %3456 = vmatprep.subr.bf16.mxu0 0
    %3457 = vmatpush2.bf16.msra.mxu0 0
    %3458 = vmatprep.subr.bf16.mxu0 0
    %3459 = vmatpush2.bf16.msra.mxu0 0
    %3460 = vmatprep.mubr.bf16.mxu0 0
    %3461 = vmatmul.mubr.bf16.gmra.mxu0 %v3426
    %v3462 = vpop.f32.mrf.mxu0
    %v3463 = vadd.f32 0.0, %v3462
    %v3464 = vpop.f32.mrf.mxu0
    %v3465 = vpop.f32.mrf.mxu0
    %v3466 = vpop.f32.mrf.mxu0
    %3467 = vdwg.mxu0
    %v3468 = vadd.f32 %v3414, %v3463
    %v3469 = vld [vmem:[%s278] sm:$0xf]
    %v3470 = vld [vmem:[%s278 + $0x4] sm:$0xf]
    %v3473 = vunpack.c.l.b16 %v3415
    %v3474 = vunpack.c.l.b16 %v3416
    %v3475 = vpack.c.b16 %v3474, %v3473
    %v3477 = vshrl.u32 %v3475, 16
    %v3479 = vshll.u32 %v3475, 16
    %v3481 = vrot.slane %v3479, 1
    %v3482 = vor.u32 %v3477, %v3481
    %v3485 = vunpack.c.l.b16 %v3469
    %v3486 = vunpack.c.l.b16 %v3470
    %v3487 = vpack.c.b16 %v3486, %v3485
    %v3490 = vsel %vm75, %v3482, 0
    %3492 = vmatprep.subr.bf16.mxu0 0
    %3493 = vmatpush1.bf16.msra.mxu0 0
    %3494 = vmatprep.subr.bf16.mxu0 0
    %3495 = vmatpush1.bf16.msra.mxu0 0
    %3496 = vmatprep.subr.bf16.mxu0 0
    %3497 = vmatpush1.bf16.msra.mxu0 0
    %3498 = vmatprep.subr.bf16.mxu0 0
    %3499 = vmatpush1.bf16.msra.mxu0 0
    %3500 = vmatprep.subr.bf16.mxu0 0
    %3501 = vmatpush1.bf16.msra.mxu0 0
    %3502 = vmatprep.subr.bf16.mxu0 0
    %3503 = vmatpush1.bf16.msra.mxu0 0
    %3504 = vmatprep.subr.bf16.mxu0 0
    %3505 = vmatpush1.bf16.msra.mxu0 0
    %3506 = vmatprep.subr.bf16.mxu0 0
    %3507 = vmatpush1.bf16.msra.mxu0 %v3487
    %3508 = vmatprep.subr.bf16.mxu0 0
    %3509 = vmatpush2.bf16.msra.mxu0 0
    %3510 = vmatprep.subr.bf16.mxu0 0
    %3511 = vmatpush2.bf16.msra.mxu0 0
    %3512 = vmatprep.subr.bf16.mxu0 0
    %3513 = vmatpush2.bf16.msra.mxu0 0
    %3514 = vmatprep.subr.bf16.mxu0 0
    %3515 = vmatpush2.bf16.msra.mxu0 0
    %3516 = vmatprep.subr.bf16.mxu0 0
    %3517 = vmatpush2.bf16.msra.mxu0 0
    %3518 = vmatprep.subr.bf16.mxu0 0
    %3519 = vmatpush2.bf16.msra.mxu0 0
    %3520 = vmatprep.subr.bf16.mxu0 0
    %3521 = vmatpush2.bf16.msra.mxu0 0
    %3522 = vmatprep.subr.bf16.mxu0 0
    %3523 = vmatpush2.bf16.msra.mxu0 0
    %3524 = vmatprep.mubr.bf16.mxu0 0
    %3525 = vmatmul.mubr.bf16.gmra.mxu0 %v3490
    %v3526 = vpop.f32.mrf.mxu0
    %v3527 = vadd.f32 0.0, %v3526
    %v3528 = vpop.f32.mrf.mxu0
    %v3529 = vpop.f32.mrf.mxu0
    %v3530 = vpop.f32.mrf.mxu0
    %3531 = vdwg.mxu0
    %v3532 = vadd.f32 %v3468, %v3527
    %v3533 = vld [vmem:[%s343] sm:$0xf]
    %v3534 = vld [vmem:[%s343 + $0x4] sm:$0xf]
    %v3535 = vrot.slane %v3475, 1
    %v3538 = vunpack.c.l.b16 %v3533
    %v3539 = vunpack.c.l.b16 %v3534
    %v3540 = vpack.c.b16 %v3539, %v3538
    %v3543 = vsel %vm75, %v3535, 0
    %3545 = vmatprep.subr.bf16.mxu0 0
    %3546 = vmatpush1.bf16.msra.mxu0 0
    %3547 = vmatprep.subr.bf16.mxu0 0
    %3548 = vmatpush1.bf16.msra.mxu0 0
    %3549 = vmatprep.subr.bf16.mxu0 0
    %3550 = vmatpush1.bf16.msra.mxu0 0
    %3551 = vmatprep.subr.bf16.mxu0 0
    %3552 = vmatpush1.bf16.msra.mxu0 0
    %3553 = vmatprep.subr.bf16.mxu0 0
    %3554 = vmatpush1.bf16.msra.mxu0 0
    %3555 = vmatprep.subr.bf16.mxu0 0
    %3556 = vmatpush1.bf16.msra.mxu0 0
    %3557 = vmatprep.subr.bf16.mxu0 0
    %3558 = vmatpush1.bf16.msra.mxu0 0
    %3559 = vmatprep.subr.bf16.mxu0 0
    %3560 = vmatpush1.bf16.msra.mxu0 %v3540
    %3561 = vmatprep.subr.bf16.mxu0 0
    %3562 = vmatpush2.bf16.msra.mxu0 0
    %3563 = vmatprep.subr.bf16.mxu0 0
    %3564 = vmatpush2.bf16.msra.mxu0 0
    %3565 = vmatprep.subr.bf16.mxu0 0
    %3566 = vmatpush2.bf16.msra.mxu0 0
    %3567 = vmatprep.subr.bf16.mxu0 0
    %3568 = vmatpush2.bf16.msra.mxu0 0
    %3569 = vmatprep.subr.bf16.mxu0 0
    %3570 = vmatpush2.bf16.msra.mxu0 0
    %3571 = vmatprep.subr.bf16.mxu0 0
    %3572 = vmatpush2.bf16.msra.mxu0 0
    %3573 = vmatprep.subr.bf16.mxu0 0
    %3574 = vmatpush2.bf16.msra.mxu0 0
    %3575 = vmatprep.subr.bf16.mxu0 0
    %3576 = vmatpush2.bf16.msra.mxu0 0
    %3577 = vmatprep.mubr.bf16.mxu0 0
    %3578 = vmatmul.mubr.bf16.gmra.mxu0 %v3543
    %v3579 = vpop.f32.mrf.mxu0
    %v3580 = vadd.f32 0.0, %v3579
    %v3581 = vpop.f32.mrf.mxu0
    %v3582 = vpop.f32.mrf.mxu0
    %v3583 = vpop.f32.mrf.mxu0
    %3584 = vdwg.mxu0
    %v3585 = vadd.f32 %v3532, %v3580
    %v3586 = vld [vmem:[%s44] sm:$0xf]
    %v3587 = vld [vmem:[%s44 + $0x4] sm:$0x1]
    %v3588 = vld [vmem:[%s400] sm:$0xf]
    %v3589 = vld [vmem:[%s400 + $0x4] sm:$0xf]
    %v3592 = vunpack.c.l.b16 %v3588
    %v3593 = vunpack.c.l.b16 %v3589
    %v3594 = vpack.c.b16 %v3593, %v3592
    %v3597 = vsel %vm75, %v3586, 0
    %3599 = vmatprep.subr.bf16.mxu0 0
    %3600 = vmatpush1.bf16.msra.mxu0 0
    %3601 = vmatprep.subr.bf16.mxu0 0
    %3602 = vmatpush1.bf16.msra.mxu0 0
    %3603 = vmatprep.subr.bf16.mxu0 0
    %3604 = vmatpush1.bf16.msra.mxu0 0
    %3605 = vmatprep.subr.bf16.mxu0 0
    %3606 = vmatpush1.bf16.msra.mxu0 0
    %3607 = vmatprep.subr.bf16.mxu0 0
    %3608 = vmatpush1.bf16.msra.mxu0 0
    %3609 = vmatprep.subr.bf16.mxu0 0
    %3610 = vmatpush1.bf16.msra.mxu0 0
    %3611 = vmatprep.subr.bf16.mxu0 0
    %3612 = vmatpush1.bf16.msra.mxu0 0
    %3613 = vmatprep.subr.bf16.mxu0 0
    %3614 = vmatpush1.bf16.msra.mxu0 %v3594
    %3615 = vmatprep.subr.bf16.mxu0 0
    %3616 = vmatpush2.bf16.msra.mxu0 0
    %3617 = vmatprep.subr.bf16.mxu0 0
    %3618 = vmatpush2.bf16.msra.mxu0 0
    %3619 = vmatprep.subr.bf16.mxu0 0
    %3620 = vmatpush2.bf16.msra.mxu0 0
    %3621 = vmatprep.subr.bf16.mxu0 0
    %3622 = vmatpush2.bf16.msra.mxu0 0
    %3623 = vmatprep.subr.bf16.mxu0 0
    %3624 = vmatpush2.bf16.msra.mxu0 0
    %3625 = vmatprep.subr.bf16.mxu0 0
    %3626 = vmatpush2.bf16.msra.mxu0 0
    %3627 = vmatprep.subr.bf16.mxu0 0
    %3628 = vmatpush2.bf16.msra.mxu0 0
    %3629 = vmatprep.subr.bf16.mxu0 0
    %3630 = vmatpush2.bf16.msra.mxu0 0
    %3631 = vmatprep.mubr.bf16.mxu0 0
    %3632 = vmatmul.mubr.bf16.gmra.mxu0 %v3597
    %v3633 = vpop.f32.mrf.mxu0
    %v3634 = vadd.f32 0.0, %v3633
    %v3635 = vpop.f32.mrf.mxu0
    %v3636 = vpop.f32.mrf.mxu0
    %v3637 = vpop.f32.mrf.mxu0
    %3638 = vdwg.mxu0
    %v3639 = vadd.f32 %v3585, %v3634
    %v3640 = vld [vmem:[%s453] sm:$0xf]
    %v3641 = vld [vmem:[%s453 + $0x4] sm:$0xf]
    %v3644 = vunpack.c.l.b16 %v3586
    %v3645 = vunpack.c.l.b16 %v3587
    %v3646 = vpack.c.b16 %v3645, %v3644
    %v3648 = vshrl.u32 %v3646, 16
    %v3650 = vshll.u32 %v3646, 16
    %v3652 = vrot.slane %v3650, 1
    %v3653 = vor.u32 %v3648, %v3652
    %v3656 = vunpack.c.l.b16 %v3640
    %v3657 = vunpack.c.l.b16 %v3641
    %v3658 = vpack.c.b16 %v3657, %v3656
    %v3661 = vsel %vm75, %v3653, 0
    %3663 = vmatprep.subr.bf16.mxu0 0
    %3664 = vmatpush1.bf16.msra.mxu0 0
    %3665 = vmatprep.subr.bf16.mxu0 0
    %3666 = vmatpush1.bf16.msra.mxu0 0
    %3667 = vmatprep.subr.bf16.mxu0 0
    %3668 = vmatpush1.bf16.msra.mxu0 0
    %3669 = vmatprep.subr.bf16.mxu0 0
    %3670 = vmatpush1.bf16.msra.mxu0 0
    %3671 = vmatprep.subr.bf16.mxu0 0
    %3672 = vmatpush1.bf16.msra.mxu0 0
    %3673 = vmatprep.subr.bf16.mxu0 0
    %3674 = vmatpush1.bf16.msra.mxu0 0
    %3675 = vmatprep.subr.bf16.mxu0 0
    %3676 = vmatpush1.bf16.msra.mxu0 0
    %3677 = vmatprep.subr.bf16.mxu0 0
    %3678 = vmatpush1.bf16.msra.mxu0 %v3658
    %3679 = vmatprep.subr.bf16.mxu0 0
    %3680 = vmatpush2.bf16.msra.mxu0 0
    %3681 = vmatprep.subr.bf16.mxu0 0
    %3682 = vmatpush2.bf16.msra.mxu0 0
    %3683 = vmatprep.subr.bf16.mxu0 0
    %3684 = vmatpush2.bf16.msra.mxu0 0
    %3685 = vmatprep.subr.bf16.mxu0 0
    %3686 = vmatpush2.bf16.msra.mxu0 0
    %3687 = vmatprep.subr.bf16.mxu0 0
    %3688 = vmatpush2.bf16.msra.mxu0 0
    %3689 = vmatprep.subr.bf16.mxu0 0
    %3690 = vmatpush2.bf16.msra.mxu0 0
    %3691 = vmatprep.subr.bf16.mxu0 0
    %3692 = vmatpush2.bf16.msra.mxu0 0
    %3693 = vmatprep.subr.bf16.mxu0 0
    %3694 = vmatpush2.bf16.msra.mxu0 0
    %3695 = vmatprep.mubr.bf16.mxu0 0
    %3696 = vmatmul.mubr.bf16.gmra.mxu0 %v3661
    %v3697 = vpop.f32.mrf.mxu0
    %v3698 = vadd.f32 0.0, %v3697
    %v3699 = vpop.f32.mrf.mxu0
    %v3700 = vpop.f32.mrf.mxu0
    %v3701 = vpop.f32.mrf.mxu0
    %3702 = vdwg.mxu0
    %v3703 = vadd.f32 %v3639, %v3698
    %v3704 = vld [vmem:[%s518] sm:$0xf]
    %v3705 = vld [vmem:[%s518 + $0x4] sm:$0xf]
    %v3706 = vrot.slane %v3646, 1
    %v3709 = vunpack.c.l.b16 %v3704
    %v3710 = vunpack.c.l.b16 %v3705
    %v3711 = vpack.c.b16 %v3710, %v3709
    %v3714 = vsel %vm75, %v3706, 0
    %3716 = vmatprep.subr.bf16.mxu0 0
    %3717 = vmatpush1.bf16.msra.mxu0 0
    %3718 = vmatprep.subr.bf16.mxu0 0
    %3719 = vmatpush1.bf16.msra.mxu0 0
    %3720 = vmatprep.subr.bf16.mxu0 0
    %3721 = vmatpush1.bf16.msra.mxu0 0
    %3722 = vmatprep.subr.bf16.mxu0 0
    %3723 = vmatpush1.bf16.msra.mxu0 0
    %3724 = vmatprep.subr.bf16.mxu0 0
    %3725 = vmatpush1.bf16.msra.mxu0 0
    %3726 = vmatprep.subr.bf16.mxu0 0
    %3727 = vmatpush1.bf16.msra.mxu0 0
    %3728 = vmatprep.subr.bf16.mxu0 0
    %3729 = vmatpush1.bf16.msra.mxu0 0
    %3730 = vmatprep.subr.bf16.mxu0 0
    %3731 = vmatpush1.bf16.msra.mxu0 %v3711
    %3732 = vmatprep.subr.bf16.mxu0 0
    %3733 = vmatpush2.bf16.msra.mxu0 0
    %3734 = vmatprep.subr.bf16.mxu0 0
    %3735 = vmatpush2.bf16.msra.mxu0 0
    %3736 = vmatprep.subr.bf16.mxu0 0
    %3737 = vmatpush2.bf16.msra.mxu0 0
    %3738 = vmatprep.subr.bf16.mxu0 0
    %3739 = vmatpush2.bf16.msra.mxu0 0
    %3740 = vmatprep.subr.bf16.mxu0 0
    %3741 = vmatpush2.bf16.msra.mxu0 0
    %3742 = vmatprep.subr.bf16.mxu0 0
    %3743 = vmatpush2.bf16.msra.mxu0 0
    %3744 = vmatprep.subr.bf16.mxu0 0
    %3745 = vmatpush2.bf16.msra.mxu0 0
    %3746 = vmatprep.subr.bf16.mxu0 0
    %3747 = vmatpush2.bf16.msra.mxu0 0
    %3748 = vmatprep.mubr.bf16.mxu0 0
    %3749 = vmatmul.mubr.bf16.gmra.mxu0 %v3714
    %v3750 = vpop.f32.mrf.mxu0
    %v3751 = vadd.f32 0.0, %v3750
    %v3752 = vpop.f32.mrf.mxu0
    %v3753 = vpop.f32.mrf.mxu0
    %v3754 = vpop.f32.mrf.mxu0
    %3755 = vdwg.mxu0
    %v3756 = vadd.f32 %v3703, %v3751
    %s3757 = scalar_lea.vmem [#allocation2], 48
    %3758 = vst.msk [vmem:[%s3757] sm:$0xff] %vm572, %v3756
    %v3759 = vsel %vm572, %v3756, 0.0
    %v3760 = vrot.slane %v3759, 4
    %v3761 = vadd.f32 %v3759, %v3760
    %v3762 = vrot.slane %v3761, 2
    %v3763 = vadd.f32 %v3761, %v3762
    %v3764 = vrot.slane %v3763, 1
    %v3765 = vadd.f32 %v3763, %v3764
    %v3766 = vadd.f32 %v3236, %v3765
    %v3767 = vmul.f32 %v3756, %v3756
    %v3768 = vsel %vm572, %v3767, 0.0
    %v3769 = vrot.slane %v3768, 4
    %v3770 = vadd.f32 %v3768, %v3769
    %v3771 = vrot.slane %v3770, 2
    %v3772 = vadd.f32 %v3770, %v3771
    %v3773 = vrot.slane %v3772, 1
    %v3774 = vadd.f32 %v3772, %v3773
    %v3775 = vadd.f32 %v3245, %v3774
    %v3776 = vld [vmem:[%s3055] sm:$0xf]
    %v3777 = vld [vmem:[%s3055 + $0x4] sm:$0x1]
    %v3778 = vld [vmem:[%s2] sm:$0xf]
    %v3779 = vld [vmem:[%s2 + $0x4] sm:$0xf]
    %v3780 = vld [vmem:[%s54] sm:$0xf]
    %v3781 = vld [vmem:[%s54 + $0x4] sm:$0xf]
    %v3784 = vunpack.c.l.b16 %v3776
    %v3785 = vunpack.c.l.b16 %v3777
    %v3786 = vpack.c.b16 %v3785, %v3784
    %v3788 = vshrl.u32 %v3786, 16
    %v3790 = vshll.u32 %v3786, 16
    %v3792 = vrot.slane %v3790, 1
    %v3793 = vor.u32 %v3788, %v3792
    %v3796 = vunpack.c.l.b16 %v3780
    %v3797 = vunpack.c.l.b16 %v3781
    %v3798 = vpack.c.b16 %v3797, %v3796
    %v3801 = vsel %vm75, %v3793, 0
    %3803 = vmatprep.subr.bf16.mxu0 0
    %3804 = vmatpush1.bf16.msra.mxu0 0
    %3805 = vmatprep.subr.bf16.mxu0 0
    %3806 = vmatpush1.bf16.msra.mxu0 0
    %3807 = vmatprep.subr.bf16.mxu0 0
    %3808 = vmatpush1.bf16.msra.mxu0 0
    %3809 = vmatprep.subr.bf16.mxu0 0
    %3810 = vmatpush1.bf16.msra.mxu0 0
    %3811 = vmatprep.subr.bf16.mxu0 0
    %3812 = vmatpush1.bf16.msra.mxu0 0
    %3813 = vmatprep.subr.bf16.mxu0 0
    %3814 = vmatpush1.bf16.msra.mxu0 0
    %3815 = vmatprep.subr.bf16.mxu0 0
    %3816 = vmatpush1.bf16.msra.mxu0 0
    %3817 = vmatprep.subr.bf16.mxu0 0
    %3818 = vmatpush1.bf16.msra.mxu0 %v3798
    %3819 = vmatprep.subr.bf16.mxu0 0
    %3820 = vmatpush2.bf16.msra.mxu0 0
    %3821 = vmatprep.subr.bf16.mxu0 0
    %3822 = vmatpush2.bf16.msra.mxu0 0
    %3823 = vmatprep.subr.bf16.mxu0 0
    %3824 = vmatpush2.bf16.msra.mxu0 0
    %3825 = vmatprep.subr.bf16.mxu0 0
    %3826 = vmatpush2.bf16.msra.mxu0 0
    %3827 = vmatprep.subr.bf16.mxu0 0
    %3828 = vmatpush2.bf16.msra.mxu0 0
    %3829 = vmatprep.subr.bf16.mxu0 0
    %3830 = vmatpush2.bf16.msra.mxu0 0
    %3831 = vmatprep.subr.bf16.mxu0 0
    %3832 = vmatpush2.bf16.msra.mxu0 0
    %3833 = vmatprep.subr.bf16.mxu0 0
    %3834 = vmatpush2.bf16.msra.mxu0 0
    %3835 = vmatprep.mubr.bf16.mxu0 0
    %3836 = vmatmul.mubr.bf16.gmra.mxu0 %v3801
    %v3837 = vpop.f32.mrf.mxu0
    %v3838 = vadd.f32 0.0, %v3837
    %v3839 = vpop.f32.mrf.mxu0
    %v3840 = vpop.f32.mrf.mxu0
    %v3841 = vpop.f32.mrf.mxu0
    %3842 = vdwg.mxu0
    %v3845 = vunpack.c.l.b16 %v3778
    %v3846 = vunpack.c.l.b16 %v3779
    %v3847 = vpack.c.b16 %v3846, %v3845
    %v3850 = vsel %vm75, %v3776, 0
    %3852 = vmatprep.subr.bf16.mxu0 0
    %3853 = vmatpush1.bf16.msra.mxu0 0
    %3854 = vmatprep.subr.bf16.mxu0 0
    %3855 = vmatpush1.bf16.msra.mxu0 0
    %3856 = vmatprep.subr.bf16.mxu0 0
    %3857 = vmatpush1.bf16.msra.mxu0 0
    %3858 = vmatprep.subr.bf16.mxu0 0
    %3859 = vmatpush1.bf16.msra.mxu0 0
    %3860 = vmatprep.subr.bf16.mxu0 0
    %3861 = vmatpush1.bf16.msra.mxu0 0
    %3862 = vmatprep.subr.bf16.mxu0 0
    %3863 = vmatpush1.bf16.msra.mxu0 0
    %3864 = vmatprep.subr.bf16.mxu0 0
    %3865 = vmatpush1.bf16.msra.mxu0 0
    %3866 = vmatprep.subr.bf16.mxu0 0
    %3867 = vmatpush1.bf16.msra.mxu0 %v3847
    %3868 = vmatprep.subr.bf16.mxu0 0
    %3869 = vmatpush2.bf16.msra.mxu0 0
    %3870 = vmatprep.subr.bf16.mxu0 0
    %3871 = vmatpush2.bf16.msra.mxu0 0
    %3872 = vmatprep.subr.bf16.mxu0 0
    %3873 = vmatpush2.bf16.msra.mxu0 0
    %3874 = vmatprep.subr.bf16.mxu0 0
    %3875 = vmatpush2.bf16.msra.mxu0 0
    %3876 = vmatprep.subr.bf16.mxu0 0
    %3877 = vmatpush2.bf16.msra.mxu0 0
    %3878 = vmatprep.subr.bf16.mxu0 0
    %3879 = vmatpush2.bf16.msra.mxu0 0
    %3880 = vmatprep.subr.bf16.mxu0 0
    %3881 = vmatpush2.bf16.msra.mxu0 0
    %3882 = vmatprep.subr.bf16.mxu0 0
    %3883 = vmatpush2.bf16.msra.mxu0 0
    %3884 = vmatprep.mubr.bf16.mxu0 0
    %3885 = vmatmul.mubr.bf16.gmra.mxu0 %v3850
    %v3886 = vpop.f32.mrf.mxu0
    %v3887 = vadd.f32 %v3838, %v3886
    %v3888 = vpop.f32.mrf.mxu0
    %v3889 = vpop.f32.mrf.mxu0
    %v3890 = vpop.f32.mrf.mxu0
    %3891 = vdwg.mxu0
    %v3892 = vld [vmem:[%s168] sm:$0xf]
    %v3893 = vld [vmem:[%s168 + $0x4] sm:$0xf]
    %v3894 = vrot.slane %v3786, 1
    %v3897 = vunpack.c.l.b16 %v3892
    %v3898 = vunpack.c.l.b16 %v3893
    %v3899 = vpack.c.b16 %v3898, %v3897
    %v3902 = vsel %vm75, %v3894, 0
    %3904 = vmatprep.subr.bf16.mxu0 0
    %3905 = vmatpush1.bf16.msra.mxu0 0
    %3906 = vmatprep.subr.bf16.mxu0 0
    %3907 = vmatpush1.bf16.msra.mxu0 0
    %3908 = vmatprep.subr.bf16.mxu0 0
    %3909 = vmatpush1.bf16.msra.mxu0 0
    %3910 = vmatprep.subr.bf16.mxu0 0
    %3911 = vmatpush1.bf16.msra.mxu0 0
    %3912 = vmatprep.subr.bf16.mxu0 0
    %3913 = vmatpush1.bf16.msra.mxu0 0
    %3914 = vmatprep.subr.bf16.mxu0 0
    %3915 = vmatpush1.bf16.msra.mxu0 0
    %3916 = vmatprep.subr.bf16.mxu0 0
    %3917 = vmatpush1.bf16.msra.mxu0 0
    %3918 = vmatprep.subr.bf16.mxu0 0
    %3919 = vmatpush1.bf16.msra.mxu0 %v3899
    %3920 = vmatprep.subr.bf16.mxu0 0
    %3921 = vmatpush2.bf16.msra.mxu0 0
    %3922 = vmatprep.subr.bf16.mxu0 0
    %3923 = vmatpush2.bf16.msra.mxu0 0
    %3924 = vmatprep.subr.bf16.mxu0 0
    %3925 = vmatpush2.bf16.msra.mxu0 0
    %3926 = vmatprep.subr.bf16.mxu0 0
    %3927 = vmatpush2.bf16.msra.mxu0 0
    %3928 = vmatprep.subr.bf16.mxu0 0
    %3929 = vmatpush2.bf16.msra.mxu0 0
    %3930 = vmatprep.subr.bf16.mxu0 0
    %3931 = vmatpush2.bf16.msra.mxu0 0
    %3932 = vmatprep.subr.bf16.mxu0 0
    %3933 = vmatpush2.bf16.msra.mxu0 0
    %3934 = vmatprep.subr.bf16.mxu0 0
    %3935 = vmatpush2.bf16.msra.mxu0 0
    %3936 = vmatprep.mubr.bf16.mxu0 0
    %3937 = vmatmul.mubr.bf16.gmra.mxu0 %v3902
    %v3938 = vpop.f32.mrf.mxu0
    %v3939 = vadd.f32 0.0, %v3938
    %v3940 = vpop.f32.mrf.mxu0
    %v3941 = vpop.f32.mrf.mxu0
    %v3942 = vpop.f32.mrf.mxu0
    %3943 = vdwg.mxu0
    %v3944 = vadd.f32 %v3887, %v3939
    %v3945 = vld [vmem:[%s44] sm:$0xf]
    %v3946 = vld [vmem:[%s44 + $0x4] sm:$0x1]
    %v3947 = vld [vmem:[%s225] sm:$0xf]
    %v3948 = vld [vmem:[%s225 + $0x4] sm:$0xf]
    %v3951 = vunpack.c.l.b16 %v3947
    %v3952 = vunpack.c.l.b16 %v3948
    %v3953 = vpack.c.b16 %v3952, %v3951
    %v3956 = vsel %vm75, %v3945, 0
    %3958 = vmatprep.subr.bf16.mxu0 0
    %3959 = vmatpush1.bf16.msra.mxu0 0
    %3960 = vmatprep.subr.bf16.mxu0 0
    %3961 = vmatpush1.bf16.msra.mxu0 0
    %3962 = vmatprep.subr.bf16.mxu0 0
    %3963 = vmatpush1.bf16.msra.mxu0 0
    %3964 = vmatprep.subr.bf16.mxu0 0
    %3965 = vmatpush1.bf16.msra.mxu0 0
    %3966 = vmatprep.subr.bf16.mxu0 0
    %3967 = vmatpush1.bf16.msra.mxu0 0
    %3968 = vmatprep.subr.bf16.mxu0 0
    %3969 = vmatpush1.bf16.msra.mxu0 0
    %3970 = vmatprep.subr.bf16.mxu0 0
    %3971 = vmatpush1.bf16.msra.mxu0 0
    %3972 = vmatprep.subr.bf16.mxu0 0
    %3973 = vmatpush1.bf16.msra.mxu0 %v3953
    %3974 = vmatprep.subr.bf16.mxu0 0
    %3975 = vmatpush2.bf16.msra.mxu0 0
    %3976 = vmatprep.subr.bf16.mxu0 0
    %3977 = vmatpush2.bf16.msra.mxu0 0
    %3978 = vmatprep.subr.bf16.mxu0 0
    %3979 = vmatpush2.bf16.msra.mxu0 0
    %3980 = vmatprep.subr.bf16.mxu0 0
    %3981 = vmatpush2.bf16.msra.mxu0 0
    %3982 = vmatprep.subr.bf16.mxu0 0
    %3983 = vmatpush2.bf16.msra.mxu0 0
    %3984 = vmatprep.subr.bf16.mxu0 0
    %3985 = vmatpush2.bf16.msra.mxu0 0
    %3986 = vmatprep.subr.bf16.mxu0 0
    %3987 = vmatpush2.bf16.msra.mxu0 0
    %3988 = vmatprep.subr.bf16.mxu0 0
    %3989 = vmatpush2.bf16.msra.mxu0 0
    %3990 = vmatprep.mubr.bf16.mxu0 0
    %3991 = vmatmul.mubr.bf16.gmra.mxu0 %v3956
    %v3992 = vpop.f32.mrf.mxu0
    %v3993 = vadd.f32 0.0, %v3992
    %v3994 = vpop.f32.mrf.mxu0
    %v3995 = vpop.f32.mrf.mxu0
    %v3996 = vpop.f32.mrf.mxu0
    %3997 = vdwg.mxu0
    %v3998 = vadd.f32 %v3944, %v3993
    %v3999 = vld [vmem:[%s278] sm:$0xf]
    %v4000 = vld [vmem:[%s278 + $0x4] sm:$0xf]
    %v4003 = vunpack.c.l.b16 %v3945
    %v4004 = vunpack.c.l.b16 %v3946
    %v4005 = vpack.c.b16 %v4004, %v4003
    %v4007 = vshrl.u32 %v4005, 16
    %v4009 = vshll.u32 %v4005, 16
    %v4011 = vrot.slane %v4009, 1
    %v4012 = vor.u32 %v4007, %v4011
    %v4015 = vunpack.c.l.b16 %v3999
    %v4016 = vunpack.c.l.b16 %v4000
    %v4017 = vpack.c.b16 %v4016, %v4015
    %v4020 = vsel %vm75, %v4012, 0
    %4022 = vmatprep.subr.bf16.mxu0 0
    %4023 = vmatpush1.bf16.msra.mxu0 0
    %4024 = vmatprep.subr.bf16.mxu0 0
    %4025 = vmatpush1.bf16.msra.mxu0 0
    %4026 = vmatprep.subr.bf16.mxu0 0
    %4027 = vmatpush1.bf16.msra.mxu0 0
    %4028 = vmatprep.subr.bf16.mxu0 0
    %4029 = vmatpush1.bf16.msra.mxu0 0
    %4030 = vmatprep.subr.bf16.mxu0 0
    %4031 = vmatpush1.bf16.msra.mxu0 0
    %4032 = vmatprep.subr.bf16.mxu0 0
    %4033 = vmatpush1.bf16.msra.mxu0 0
    %4034 = vmatprep.subr.bf16.mxu0 0
    %4035 = vmatpush1.bf16.msra.mxu0 0
    %4036 = vmatprep.subr.bf16.mxu0 0
    %4037 = vmatpush1.bf16.msra.mxu0 %v4017
    %4038 = vmatprep.subr.bf16.mxu0 0
    %4039 = vmatpush2.bf16.msra.mxu0 0
    %4040 = vmatprep.subr.bf16.mxu0 0
    %4041 = vmatpush2.bf16.msra.mxu0 0
    %4042 = vmatprep.subr.bf16.mxu0 0
    %4043 = vmatpush2.bf16.msra.mxu0 0
    %4044 = vmatprep.subr.bf16.mxu0 0
    %4045 = vmatpush2.bf16.msra.mxu0 0
    %4046 = vmatprep.subr.bf16.mxu0 0
    %4047 = vmatpush2.bf16.msra.mxu0 0
    %4048 = vmatprep.subr.bf16.mxu0 0
    %4049 = vmatpush2.bf16.msra.mxu0 0
    %4050 = vmatprep.subr.bf16.mxu0 0
    %4051 = vmatpush2.bf16.msra.mxu0 0
    %4052 = vmatprep.subr.bf16.mxu0 0
    %4053 = vmatpush2.bf16.msra.mxu0 0
    %4054 = vmatprep.mubr.bf16.mxu0 0
    %4055 = vmatmul.mubr.bf16.gmra.mxu0 %v4020
    %v4056 = vpop.f32.mrf.mxu0
    %v4057 = vadd.f32 0.0, %v4056
    %v4058 = vpop.f32.mrf.mxu0
    %v4059 = vpop.f32.mrf.mxu0
    %v4060 = vpop.f32.mrf.mxu0
    %4061 = vdwg.mxu0
    %v4062 = vadd.f32 %v3998, %v4057
    %v4063 = vld [vmem:[%s343] sm:$0xf]
    %v4064 = vld [vmem:[%s343 + $0x4] sm:$0xf]
    %v4065 = vrot.slane %v4005, 1
    %v4068 = vunpack.c.l.b16 %v4063
    %v4069 = vunpack.c.l.b16 %v4064
    %v4070 = vpack.c.b16 %v4069, %v4068
    %v4073 = vsel %vm75, %v4065, 0
    %4075 = vmatprep.subr.bf16.mxu0 0
    %4076 = vmatpush1.bf16.msra.mxu0 0
    %4077 = vmatprep.subr.bf16.mxu0 0
    %4078 = vmatpush1.bf16.msra.mxu0 0
    %4079 = vmatprep.subr.bf16.mxu0 0
    %4080 = vmatpush1.bf16.msra.mxu0 0
    %4081 = vmatprep.subr.bf16.mxu0 0
    %4082 = vmatpush1.bf16.msra.mxu0 0
    %4083 = vmatprep.subr.bf16.mxu0 0
    %4084 = vmatpush1.bf16.msra.mxu0 0
    %4085 = vmatprep.subr.bf16.mxu0 0
    %4086 = vmatpush1.bf16.msra.mxu0 0
    %4087 = vmatprep.subr.bf16.mxu0 0
    %4088 = vmatpush1.bf16.msra.mxu0 0
    %4089 = vmatprep.subr.bf16.mxu0 0
    %4090 = vmatpush1.bf16.msra.mxu0 %v4070
    %4091 = vmatprep.subr.bf16.mxu0 0
    %4092 = vmatpush2.bf16.msra.mxu0 0
    %4093 = vmatprep.subr.bf16.mxu0 0
    %4094 = vmatpush2.bf16.msra.mxu0 0
    %4095 = vmatprep.subr.bf16.mxu0 0
    %4096 = vmatpush2.bf16.msra.mxu0 0
    %4097 = vmatprep.subr.bf16.mxu0 0
    %4098 = vmatpush2.bf16.msra.mxu0 0
    %4099 = vmatprep.subr.bf16.mxu0 0
    %4100 = vmatpush2.bf16.msra.mxu0 0
    %4101 = vmatprep.subr.bf16.mxu0 0
    %4102 = vmatpush2.bf16.msra.mxu0 0
    %4103 = vmatprep.subr.bf16.mxu0 0
    %4104 = vmatpush2.bf16.msra.mxu0 0
    %4105 = vmatprep.subr.bf16.mxu0 0
    %4106 = vmatpush2.bf16.msra.mxu0 0
    %4107 = vmatprep.mubr.bf16.mxu0 0
    %4108 = vmatmul.mubr.bf16.gmra.mxu0 %v4073
    %v4109 = vpop.f32.mrf.mxu0
    %v4110 = vadd.f32 0.0, %v4109
    %v4111 = vpop.f32.mrf.mxu0
    %v4112 = vpop.f32.mrf.mxu0
    %v4113 = vpop.f32.mrf.mxu0
    %4114 = vdwg.mxu0
    %v4115 = vadd.f32 %v4062, %v4110
    %s4116 = scalar_lea.vmem %s44, 8
    %v4117 = vld [vmem:[%s4116] sm:$0xf]
    %v4118 = vld [vmem:[%s4116 + $0x4] sm:$0x1]
    %v4119 = vld [vmem:[%s400] sm:$0xf]
    %v4120 = vld [vmem:[%s400 + $0x4] sm:$0xf]
    %v4123 = vunpack.c.l.b16 %v4119
    %v4124 = vunpack.c.l.b16 %v4120
    %v4125 = vpack.c.b16 %v4124, %v4123
    %v4128 = vsel %vm75, %v4117, 0
    %4130 = vmatprep.subr.bf16.mxu0 0
    %4131 = vmatpush1.bf16.msra.mxu0 0
    %4132 = vmatprep.subr.bf16.mxu0 0
    %4133 = vmatpush1.bf16.msra.mxu0 0
    %4134 = vmatprep.subr.bf16.mxu0 0
    %4135 = vmatpush1.bf16.msra.mxu0 0
    %4136 = vmatprep.subr.bf16.mxu0 0
    %4137 = vmatpush1.bf16.msra.mxu0 0
    %4138 = vmatprep.subr.bf16.mxu0 0
    %4139 = vmatpush1.bf16.msra.mxu0 0
    %4140 = vmatprep.subr.bf16.mxu0 0
    %4141 = vmatpush1.bf16.msra.mxu0 0
    %4142 = vmatprep.subr.bf16.mxu0 0
    %4143 = vmatpush1.bf16.msra.mxu0 0
    %4144 = vmatprep.subr.bf16.mxu0 0
    %4145 = vmatpush1.bf16.msra.mxu0 %v4125
    %4146 = vmatprep.subr.bf16.mxu0 0
    %4147 = vmatpush2.bf16.msra.mxu0 0
    %4148 = vmatprep.subr.bf16.mxu0 0
    %4149 = vmatpush2.bf16.msra.mxu0 0
    %4150 = vmatprep.subr.bf16.mxu0 0
    %4151 = vmatpush2.bf16.msra.mxu0 0
    %4152 = vmatprep.subr.bf16.mxu0 0
    %4153 = vmatpush2.bf16.msra.mxu0 0
    %4154 = vmatprep.subr.bf16.mxu0 0
    %4155 = vmatpush2.bf16.msra.mxu0 0
    %4156 = vmatprep.subr.bf16.mxu0 0
    %4157 = vmatpush2.bf16.msra.mxu0 0
    %4158 = vmatprep.subr.bf16.mxu0 0
    %4159 = vmatpush2.bf16.msra.mxu0 0
    %4160 = vmatprep.subr.bf16.mxu0 0
    %4161 = vmatpush2.bf16.msra.mxu0 0
    %4162 = vmatprep.mubr.bf16.mxu0 0
    %4163 = vmatmul.mubr.bf16.gmra.mxu0 %v4128
    %v4164 = vpop.f32.mrf.mxu0
    %v4165 = vadd.f32 0.0, %v4164
    %v4166 = vpop.f32.mrf.mxu0
    %v4167 = vpop.f32.mrf.mxu0
    %v4168 = vpop.f32.mrf.mxu0
    %4169 = vdwg.mxu0
    %v4170 = vadd.f32 %v4115, %v4165
    %v4171 = vld [vmem:[%s453] sm:$0xf]
    %v4172 = vld [vmem:[%s453 + $0x4] sm:$0xf]
    %v4175 = vunpack.c.l.b16 %v4117
    %v4176 = vunpack.c.l.b16 %v4118
    %v4177 = vpack.c.b16 %v4176, %v4175
    %v4179 = vshrl.u32 %v4177, 16
    %v4181 = vshll.u32 %v4177, 16
    %v4183 = vrot.slane %v4181, 1
    %v4184 = vor.u32 %v4179, %v4183
    %v4187 = vunpack.c.l.b16 %v4171
    %v4188 = vunpack.c.l.b16 %v4172
    %v4189 = vpack.c.b16 %v4188, %v4187
    %v4192 = vsel %vm75, %v4184, 0
    %4194 = vmatprep.subr.bf16.mxu0 0
    %4195 = vmatpush1.bf16.msra.mxu0 0
    %4196 = vmatprep.subr.bf16.mxu0 0
    %4197 = vmatpush1.bf16.msra.mxu0 0
    %4198 = vmatprep.subr.bf16.mxu0 0
    %4199 = vmatpush1.bf16.msra.mxu0 0
    %4200 = vmatprep.subr.bf16.mxu0 0
    %4201 = vmatpush1.bf16.msra.mxu0 0
    %4202 = vmatprep.subr.bf16.mxu0 0
    %4203 = vmatpush1.bf16.msra.mxu0 0
    %4204 = vmatprep.subr.bf16.mxu0 0
    %4205 = vmatpush1.bf16.msra.mxu0 0
    %4206 = vmatprep.subr.bf16.mxu0 0
    %4207 = vmatpush1.bf16.msra.mxu0 0
    %4208 = vmatprep.subr.bf16.mxu0 0
    %4209 = vmatpush1.bf16.msra.mxu0 %v4189
    %4210 = vmatprep.subr.bf16.mxu0 0
    %4211 = vmatpush2.bf16.msra.mxu0 0
    %4212 = vmatprep.subr.bf16.mxu0 0
    %4213 = vmatpush2.bf16.msra.mxu0 0
    %4214 = vmatprep.subr.bf16.mxu0 0
    %4215 = vmatpush2.bf16.msra.mxu0 0
    %4216 = vmatprep.subr.bf16.mxu0 0
    %4217 = vmatpush2.bf16.msra.mxu0 0
    %4218 = vmatprep.subr.bf16.mxu0 0
    %4219 = vmatpush2.bf16.msra.mxu0 0
    %4220 = vmatprep.subr.bf16.mxu0 0
    %4221 = vmatpush2.bf16.msra.mxu0 0
    %4222 = vmatprep.subr.bf16.mxu0 0
    %4223 = vmatpush2.bf16.msra.mxu0 0
    %4224 = vmatprep.subr.bf16.mxu0 0
    %4225 = vmatpush2.bf16.msra.mxu0 0
    %4226 = vmatprep.mubr.bf16.mxu0 0
    %4227 = vmatmul.mubr.bf16.gmra.mxu0 %v4192
    %v4228 = vpop.f32.mrf.mxu0
    %v4229 = vadd.f32 0.0, %v4228
    %v4230 = vpop.f32.mrf.mxu0
    %v4231 = vpop.f32.mrf.mxu0
    %v4232 = vpop.f32.mrf.mxu0
    %4233 = vdwg.mxu0
    %v4234 = vadd.f32 %v4170, %v4229
    %v4235 = vld [vmem:[%s518] sm:$0xf]
    %v4236 = vld [vmem:[%s518 + $0x4] sm:$0xf]
    %v4237 = vrot.slane %v4177, 1
    %v4240 = vunpack.c.l.b16 %v4235
    %v4241 = vunpack.c.l.b16 %v4236
    %v4242 = vpack.c.b16 %v4241, %v4240
    %v4245 = vsel %vm75, %v4237, 0
    %4247 = vmatprep.subr.bf16.mxu0 0
    %4248 = vmatpush1.bf16.msra.mxu0 0
    %4249 = vmatprep.subr.bf16.mxu0 0
    %4250 = vmatpush1.bf16.msra.mxu0 0
    %4251 = vmatprep.subr.bf16.mxu0 0
    %4252 = vmatpush1.bf16.msra.mxu0 0
    %4253 = vmatprep.subr.bf16.mxu0 0
    %4254 = vmatpush1.bf16.msra.mxu0 0
    %4255 = vmatprep.subr.bf16.mxu0 0
    %4256 = vmatpush1.bf16.msra.mxu0 0
    %4257 = vmatprep.subr.bf16.mxu0 0
    %4258 = vmatpush1.bf16.msra.mxu0 0
    %4259 = vmatprep.subr.bf16.mxu0 0
    %4260 = vmatpush1.bf16.msra.mxu0 0
    %4261 = vmatprep.subr.bf16.mxu0 0
    %4262 = vmatpush1.bf16.msra.mxu0 %v4242
    %4263 = vmatprep.subr.bf16.mxu0 0
    %4264 = vmatpush2.bf16.msra.mxu0 0
    %4265 = vmatprep.subr.bf16.mxu0 0
    %4266 = vmatpush2.bf16.msra.mxu0 0
    %4267 = vmatprep.subr.bf16.mxu0 0
    %4268 = vmatpush2.bf16.msra.mxu0 0
    %4269 = vmatprep.subr.bf16.mxu0 0
    %4270 = vmatpush2.bf16.msra.mxu0 0
    %4271 = vmatprep.subr.bf16.mxu0 0
    %4272 = vmatpush2.bf16.msra.mxu0 0
    %4273 = vmatprep.subr.bf16.mxu0 0
    %4274 = vmatpush2.bf16.msra.mxu0 0
    %4275 = vmatprep.subr.bf16.mxu0 0
    %4276 = vmatpush2.bf16.msra.mxu0 0
    %4277 = vmatprep.subr.bf16.mxu0 0
    %4278 = vmatpush2.bf16.msra.mxu0 0
    %4279 = vmatprep.mubr.bf16.mxu0 0
    %4280 = vmatmul.mubr.bf16.gmra.mxu0 %v4245
    %v4281 = vpop.f32.mrf.mxu0
    %v4282 = vadd.f32 0.0, %v4281
    %v4283 = vpop.f32.mrf.mxu0
    %v4284 = vpop.f32.mrf.mxu0
    %v4285 = vpop.f32.mrf.mxu0
    %4286 = vdwg.mxu0
    %v4287 = vadd.f32 %v4234, %v4282
    %s4288 = scalar_lea.vmem [#allocation2], 56
    %4289 = vst.msk [vmem:[%s4288] sm:$0xff] %vm572, %v4287
    %v4290 = vsel %vm572, %v4287, 0.0
    %v4291 = vrot.slane %v4290, 4
    %v4292 = vadd.f32 %v4290, %v4291
    %v4293 = vrot.slane %v4292, 2
    %v4294 = vadd.f32 %v4292, %v4293
    %v4295 = vrot.slane %v4294, 1
    %v4296 = vadd.f32 %v4294, %v4295
    %v4297 = vadd.f32 %v3766, %v4296
    %v4298 = vmul.f32 %v4287, %v4287
    %v4299 = vsel %vm572, %v4298, 0.0
    %v4300 = vrot.slane %v4299, 4
    %v4301 = vadd.f32 %v4299, %v4300
    %v4302 = vrot.slane %v4301, 2
    %v4303 = vadd.f32 %v4301, %v4302
    %v4304 = vrot.slane %v4303, 1
    %v4305 = vadd.f32 %v4303, %v4304
    %v4306 = vadd.f32 %v3775, %v4305
    %vm4307 = vcmask 253952
    %4308 = vst.msk [vmem:[#allocation4] sm:$0x1] %vm4307, %v4297
    %4309 = vst.msk [vmem:[#allocation4 + $0x1] sm:$0x1] %vm4307, %v4306
    // Predicated region
    $region14: #{_conv3x3_stats.1} parent=1 // pred_check
      _
    $region15: #{_conv3x3_stats.1} parent=1 // pred_check_branch
      %4311 = sbr.rel (0) target = $region17
    $region16: #{_conv3x3_stats.1} parent=1 // pred_region
      %s4313 = ssub.s32 1024, 1024
      %4314 = vsyncadd [#allocation3], %s4313
      %s4315 = sshll.u32 [#allocation2], 4
      %s4316 = int_to_ptr.vmem [resolvable:$true] %s4315
      %4321 = dma.vmem_to_hbm [thread:$0]  %s4316, 1024, %s3, [#allocation3], 128, 128, 8
    $region17: #{_conv3x3_stats.1} parent=1 // pred_fallthru
      _
    // Predicated region
    $region18: #{_conv3x3_stats.1} parent=1 // pred_check
      _
    $region19: #{_conv3x3_stats.1} parent=1 // pred_check_branch
      %4323 = sbr.rel (0) target = $region21
    $region20: #{_conv3x3_stats.1} parent=1 // pred_region
      %s4324 = sadd.s32 0, 0
      %s4326 = ssub.s32 32, 32
      %4327 = vsyncadd [#allocation5], %s4326
      %s4328 = smul.addr %s4324, 32
      %s4329 = scalar_lea.hbm %s4, %s4328
      %s4331 = sshll.u32 [#allocation4], 4
      %s4332 = int_to_ptr.vmem [resolvable:$true] %s4331
      %4334 = dma.vmem_to_hbm [thread:$0]  %s4332, 32, %s4329, [#allocation5]
    $region21: #{_conv3x3_stats.1} parent=1 // pred_fallthru
      _
    // Predicated region
    $region22: #{_conv3x3_stats.1} parent=1 // pred_check
      _
    $region23: #{_conv3x3_stats.1} parent=1 // pred_check_branch
      %4336 = sbr.rel (0) target = $region25
    $region24: #{_conv3x3_stats.1} parent=1 // pred_region
      %4337 = dma.done [#allocation3], 1024
    $region25: #{_conv3x3_stats.1} parent=1 // pred_fallthru
      _
    // Predicated region
    $region26: #{_conv3x3_stats.1} parent=1 // pred_check
      _
    $region27: #{_conv3x3_stats.1} parent=1 // pred_check_branch
      %4339 = sbr.rel (0) target = $region29
    $region28: #{_conv3x3_stats.1} parent=1 // pred_region
      %4340 = dma.done [#allocation5], 32
    $region29: #{_conv3x3_stats.1} parent=1 // pred_fallthru
      _
    %4341 = vsyncpa [#allocation3], 1
    %4342 = vsyncpa [#allocation5], 1

</llo_original>
